<compile_context>
chip_gen: v6e
topology: v6e:2x2x1
jax: 0.10.0
libtpu: 0.0.40
codegen_flags: <defaults>
</compile_context>

<pallas_src>
import functools

import jax
import jax.numpy as jnp
from jax.experimental import pallas as pl
from jax.experimental.pallas import tpu as pltpu


# ----------------------------------------------------------------------------
# small helpers
# ----------------------------------------------------------------------------
def _leaky(v, slope=0.2):
    # MSN and its encoder use nn.LeakyReLU(negative_slope=0.2)
    return jnp.where(v > 0.0, v, slope * v)


def _row_tile(n_rows, target=512):
    """Largest row tile <= target that divides n_rows.

    Tiles are multiples of 8 (f32 sublane) unless the whole axis is taken
    (the 'block equals full array dim' exception of the (8, 128) rule).
    """
    if n_rows <= target:
        return n_rows
    tm = (target // 8) * 8
    while tm >= 8:
        if n_rows % tm == 0:
            return tm
        tm -= 8
    return n_rows


def _nbytes(*shapes, dtype_bytes=4):
    tot = 0
    for s in shapes:
        n = 1
        for d in s:
            n *= int(d)
        tot += n
    return tot * dtype_bytes


def _mosaic_params(sem, working_bytes):
    # double-buffered pipeline blocks + headroom, clamped so a tile sized for
    # v5e/v6e (128 MiB VMEM) cannot over-ask on v7x (64 MiB physical VMEM).
    vmem = min(max(2 * int(working_bytes) + (4 << 20), 16 << 20), 48 << 20)
    return pltpu.CompilerParams(dimension_semantics=sem, vmem_limit_bytes=vmem)


def _cost(flops, transcendentals, bytes_accessed):
    return pl.CostEstimate(flops=int(flops), transcendentals=int(transcendentals),
                           bytes_accessed=int(bytes_accessed))


# ----------------------------------------------------------------------------
# Pallas kernels
# ----------------------------------------------------------------------------
def _decoder_kernel(grid_ref, h1b_ref, w1g_ref, w2_ref, b2_ref,
                    w3_ref, b3_ref, w4_ref, b4_ref, o_ref):
    """Fused PointGenCon (conv1..conv4 + folded BN, ReLU/Tanh) on one row tile.

    conv1 is split: the rand_grid half is the in-kernel matmul, the latent half
    (plus the folded bias) arrives precomputed as h1b_ref, so the
    (2 + bottleneck)-wide concat is never materialized.
    """
    h = jnp.dot(grid_ref[...], w1g_ref[...], preferred_element_type=jnp.float32)
    h = jnp.maximum(h + h1b_ref[...], 0.0)                                 # conv1+bn1+relu
    h = jnp.maximum(
        jnp.dot(h, w2_ref[...], preferred_element_type=jnp.float32) + b2_ref[...], 0.0)
    h = jnp.maximum(
        jnp.dot(h, w3_ref[...], preferred_element_type=jnp.float32) + b3_ref[...], 0.0)
    # NOTE: the xyz head is 3-wide; after full-chain fusion this is the only HBM
    # write of the decoder, so its lane-sparse store is negligible vs the matmuls.
    o_ref[...] = jnp.tanh(
        jnp.dot(h, w4_ref[...], preferred_element_type=jnp.float32) + b4_ref[...])


def _conv_max_kernel(x_ref, w_ref, b_ref, o_ref, acc_ref):
    """Pointwise conv (+folded BN) + ReLU fused with a running global max over
    the point axis (the (N, Cout) activation never reaches HBM)."""
    r = pl.program_id(1)
    h = jnp.maximum(
        jnp.dot(x_ref[...], w_ref[...], preferred_element_type=jnp.float32)
        + b_ref[...], 0.0)

    @pl.when(r == 0)
    def _():
        acc_ref[...] = jnp.full_like(acc_ref, -jnp.inf)

    acc_ref[...] = jnp.maximum(acc_ref[...], jnp.max(h, axis=0, keepdims=True))

    @pl.when(r == pl.num_programs(1) - 1)
    def _():
        o_ref[...] = acc_ref[...]


def _res_part1_kernel(x_ref, w1_ref, b1_ref, w2_ref, b2_ref, w3_ref, b3_ref,
                      pf_ref, g_ref, acc_ref):
    """PointNetRes conv1..conv3 (+folded BN) fused with the global max-pool.

    Emits the 64-ch pointfeat tile and max-accumulates the (1, 1024) global
    feature in a VMEM scratch; the (N, 128)/(N, 1024) activations stay in VMEM.
    """
    r = pl.program_id(1)
    h1 = jnp.maximum(
        jnp.dot(x_ref[...], w1_ref[...], preferred_element_type=jnp.float32)
        + b1_ref[...], 0.0)
    pf_ref[...] = h1
    h2 = jnp.maximum(
        jnp.dot(h1, w2_ref[...], preferred_element_type=jnp.float32)
        + b2_ref[...], 0.0)
    h3 = jnp.dot(h2, w3_ref[...], preferred_element_type=jnp.float32) + b3_ref[...]

    @pl.when(r == 0)
    def _():
        acc_ref[...] = jnp.full_like(acc_ref, -jnp.inf)

    acc_ref[...] = jnp.maximum(acc_ref[...], jnp.max(h3, axis=0, keepdims=True))

    @pl.when(r == pl.num_programs(1) - 1)
    def _():
        g_ref[...] = acc_ref[...]


def _res_part2_kernel(pf_ref, g4_ref, w4p_ref, w5_ref, b5_ref, w6_ref, b6_ref,
                      w7_ref, b7_ref, o_ref):
    """PointNetRes conv4..conv7.  The 1088-wide [global, pointfeat] concat is
    replaced by a split matmul: global @ W4_global (+bias) is precomputed per
    batch as g4 and broadcast-added to pointfeat @ W4_point."""
    h = jnp.maximum(
        jnp.dot(pf_ref[...], w4p_ref[...], preferred_element_type=jnp.float32)
        + g4_ref[...], 0.0)
    h = jnp.maximum(
        jnp.dot(h, w5_ref[...], preferred_element_type=jnp.float32) + b5_ref[...], 0.0)
    h = jnp.maximum(
        jnp.dot(h, w6_ref[...], preferred_element_type=jnp.float32) + b6_ref[...], 0.0)
    o_ref[...] = jnp.tanh(
        jnp.dot(h, w7_ref[...], preferred_element_type=jnp.float32) + b7_ref[...])


# ----------------------------------------------------------------------------
# pallas_call wrappers
# ----------------------------------------------------------------------------
def decoder_forward_stacked(dec, rand_grid, h1_base):
    """All n_primitives PointGenCon decoders in one fused, row-tiled kernel.

    rand_grid: (P, B, npts, 2)  uniform surface samples
    h1_base:   (P, B, 1, bs)    latent contribution to conv1 pre-activation
    returns:   (P, B, npts, 3)
    """
    P, B, npts, _ = rand_grid.shape
    bs = dec["w1g"].shape[2]
    bs2 = dec["w2"].shape[2]
    bs4 = dec["w3"].shape[2]
    TM = _row_tile(npts)
    RT = npts // TM

    working = _nbytes((TM, 2), (1, bs), (2, bs), (bs, bs2), (1, bs2),
                      (bs2, bs4), (1, bs4), (bs4, 3), (1, 3),
                      (TM, bs), (TM, bs2), (TM, bs4), (TM, 3))
    flops = 2 * P * B * npts * (2 * bs + bs * bs2 + bs2 * bs4 + bs4 * 3)
    hbm = _nbytes(rand_grid.shape, h1_base.shape, dec["w1g"].shape,
                  dec["w2"].shape, dec["w3"].shape, dec["w4"].shape,
                  (P, B, npts, 3))

    return pl.pallas_call(
        _decoder_kernel,
        out_shape=jax.ShapeDtypeStruct((P, B, npts, 3), jnp.float32),
        grid=(P, B, RT),
        in_specs=[
            pl.BlockSpec((None, None, TM, 2), lambda p, b, r: (p, b, r, 0)),
            pl.BlockSpec((None, None, 1, bs), lambda p, b, r: (p, b, 0, 0)),
            pl.BlockSpec((None, 2, bs), lambda p, b, r: (p, 0, 0)),
            pl.BlockSpec((None, bs, bs2), lambda p, b, r: (p, 0, 0)),
            pl.BlockSpec((None, 1, bs2), lambda p, b, r: (p, 0, 0)),
            pl.BlockSpec((None, bs2, bs4), lambda p, b, r: (p, 0, 0)),
            pl.BlockSpec((None, 1, bs4), lambda p, b, r: (p, 0, 0)),
            pl.BlockSpec((None, bs4, 3), lambda p, b, r: (p, 0, 0)),
            pl.BlockSpec((None, 1, 3), lambda p, b, r: (p, 0, 0)),
        ],
        out_specs=pl.BlockSpec((None, None, TM, 3), lambda p, b, r: (p, b, r, 0)),
        compiler_params=_mosaic_params(("parallel", "parallel", "parallel"), working),
        cost_estimate=_cost(flops, P * B * npts * 3, hbm),
    )(rand_grid, h1_base, dec["w1g"], dec["w2"], dec["b2"],
      dec["w3"], dec["b3"], dec["w4"], dec["b4"])


def conv_relu_maxpool(x_bnc, w, bias):
    """Fused pointwise conv (+folded BN) + ReLU + global max: (B, N, Cin) -> (B, Cout)."""
    B, N, Cin = x_bnc.shape
    Cout = w.shape[1]
    TM = _row_tile(N)
    RT = N // TM
    working = _nbytes((TM, Cin), (Cin, Cout), (1, Cout), (TM, Cout), (1, Cout))
    out = pl.pallas_call(
        _conv_max_kernel,
        out_shape=jax.ShapeDtypeStruct((B, 1, Cout), jnp.float32),
        grid=(B, RT),
        in_specs=[
            pl.BlockSpec((None, TM, Cin), lambda b, r: (b, r, 0)),
            pl.BlockSpec((Cin, Cout), lambda b, r: (0, 0)),
            pl.BlockSpec((1, Cout), lambda b, r: (0, 0)),
        ],
        out_specs=pl.BlockSpec((None, 1, Cout), lambda b, r: (b, 0, 0)),
        scratch_shapes=[pltpu.VMEM((1, Cout), jnp.float32)],
        compiler_params=_mosaic_params(("parallel", "arbitrary"), working),
        cost_estimate=_cost(2 * B * N * Cin * Cout, 0,
                            _nbytes(x_bnc.shape, w.shape, (B, 1, Cout))),
    )(x_bnc, w, bias)
    return out[:, 0, :]


def pointnetres_part1(res, xx):
    """PointNetRes conv1..conv3 + global max-pool.  xx: (B, Np, 4)."""
    B, Np, cin = xx.shape
    w1, b1 = res["l1"]
    w2, b2 = res["l2"]
    w3, b3 = res["l3"]
    c1, c2, c3 = w1.shape[1], w2.shape[1], w3.shape[1]
    TM = _row_tile(Np)
    RT = Np // TM
    working = _nbytes((TM, cin), (cin, c1), (1, c1), (c1, c2), (1, c2),
                      (c2, c3), (1, c3), (TM, c1), (TM, c2), (TM, c3), (1, c3))
    flops = 2 * B * Np * (cin * c1 + c1 * c2 + c2 * c3)
    hbm = _nbytes(xx.shape, w1.shape, w2.shape, w3.shape, (B, Np, c1), (B, 1, c3))
    pf, g = pl.pallas_call(
        _res_part1_kernel,
        out_shape=(jax.ShapeDtypeStruct((B, Np, c1), jnp.float32),
                   jax.ShapeDtypeStruct((B, 1, c3), jnp.float32)),
        grid=(B, RT),
        in_specs=[
            pl.BlockSpec((None, TM, cin), lambda b, r: (b, r, 0)),
            pl.BlockSpec((cin, c1), lambda b, r: (0, 0)),
            pl.BlockSpec((1, c1), lambda b, r: (0, 0)),
            pl.BlockSpec((c1, c2), lambda b, r: (0, 0)),
            pl.BlockSpec((1, c2), lambda b, r: (0, 0)),
            pl.BlockSpec((c2, c3), lambda b, r: (0, 0)),
            pl.BlockSpec((1, c3), lambda b, r: (0, 0)),
        ],
        out_specs=(pl.BlockSpec((None, TM, c1), lambda b, r: (b, r, 0)),
                   pl.BlockSpec((None, 1, c3), lambda b, r: (b, 0, 0))),
        scratch_shapes=[pltpu.VMEM((1, c3), jnp.float32)],
        compiler_params=_mosaic_params(("parallel", "arbitrary"), working),
        cost_estimate=_cost(flops, 0, hbm),
    )(xx, w1, b1, w2, b2, w3, b3)
    return pf, g[:, 0, :]


def pointnetres_part2(res, pointfeat, g4):
    """PointNetRes conv4..conv7.  pointfeat: (B, Np, 64), g4: (B, 1, 512)."""
    B, Np, c1 = pointfeat.shape
    w4p = res["w4p"]
    w5, b5 = res["l5"]
    w6, b6 = res["l6"]
    w7, b7 = res["l7"]
    c4, c5, c6 = w4p.shape[1], w5.shape[1], w6.shape[1]
    TM = _row_tile(Np)
    RT = Np // TM
    working = _nbytes((TM, c1), (1, c4), (c1, c4), (c4, c5), (1, c5),
                      (c5, c6), (1, c6), (c6, 3), (1, 3),
                      (TM, c4), (TM, c5), (TM, c6), (TM, 3))
    flops = 2 * B * Np * (c1 * c4 + c4 * c5 + c5 * c6 + c6 * 3)
    hbm = _nbytes(pointfeat.shape, g4.shape, w4p.shape, w5.shape, w6.shape,
                  w7.shape, (B, Np, 3))
    return pl.pallas_call(
        _res_part2_kernel,
        out_shape=jax.ShapeDtypeStruct((B, Np, 3), jnp.float32),
        grid=(B, RT),
        in_specs=[
            pl.BlockSpec((None, TM, c1), lambda b, r: (b, r, 0)),
            pl.BlockSpec((None, 1, c4), lambda b, r: (b, 0, 0)),
            pl.BlockSpec((c1, c4), lambda b, r: (0, 0)),
            pl.BlockSpec((c4, c5), lambda b, r: (0, 0)),
            pl.BlockSpec((1, c5), lambda b, r: (0, 0)),
            pl.BlockSpec((c5, c6), lambda b, r: (0, 0)),
            pl.BlockSpec((1, c6), lambda b, r: (0, 0)),
            pl.BlockSpec((c6, 3), lambda b, r: (0, 0)),
            pl.BlockSpec((1, 3), lambda b, r: (0, 0)),
        ],
        out_specs=pl.BlockSpec((None, TM, 3), lambda b, r: (b, r, 0)),
        compiler_params=_mosaic_params(("parallel", "parallel"), working),
        cost_estimate=_cost(flops, B * Np * 3, hbm),
    )(pointfeat, g4, w4p, w5, b5, w6, b6, w7, b7)


# ----------------------------------------------------------------------------
# Deterministic parameter construction (BN folded into the conv affine)
# ----------------------------------------------------------------------------
def make_folded_layer(key, cin, cout, with_bn=True):
    """Conv1d(k=1) weight/bias with eval-mode BatchNorm folded into (w_eff, b_eff)."""
    k1, k2, k3 = jax.random.split(key, 3)
    w = jax.random.normal(k1, (cin, cout), jnp.float32) / jnp.sqrt(float(cin))
    b = 0.01 * jax.random.normal(k2, (cout,), jnp.float32)
    if with_bn:
        # TODO(synk): BatchNorm folded with eval-mode running stats (mean=0,
        # var=1); train-mode batch statistics are not recomputed in-kernel.
        gamma = 1.0 + 0.1 * jax.random.normal(k3, (cout,), jnp.float32)
        scale = gamma / jnp.sqrt(1.0 + 1e-5)
        shift = jnp.zeros((cout,), jnp.float32)
    else:
        scale = jnp.ones((cout,), jnp.float32)
        shift = jnp.zeros((cout,), jnp.float32)
    w_eff = w * scale[None, :]
    b_eff = (b * scale + shift).reshape(1, cout)
    return w_eff, b_eff


def make_decoder_stack(key, bottleneck, n_primitives):
    """Stacked, BN-folded PointGenCon weights; conv1 split into grid/latent parts."""
    bs = 2 + bottleneck
    cols = {k: [] for k in ("w1g", "w1x", "b1", "w2", "b2", "w3", "b3", "w4", "b4")}
    for i in range(n_primitives):
        k1, k2, k3, k4 = jax.random.split(jax.random.fold_in(key, i), 4)
        w1, b1 = make_folded_layer(k1, bs, bs)
        w2, b2 = make_folded_layer(k2, bs, bs // 2)
        w3, b3 = make_folded_layer(k3, bs // 2, bs // 4)
        w4, b4 = make_folded_layer(k4, bs // 4, 3, with_bn=False)   # conv4 + tanh
        cols["w1g"].append(w1[:2])      # rand_grid rows of conv1
        cols["w1x"].append(w1[2:])      # latent rows of conv1
        cols["b1"].append(b1)
        cols["w2"].append(w2); cols["b2"].append(b2)
        cols["w3"].append(w3); cols["b3"].append(b3)
        cols["w4"].append(w4); cols["b4"].append(b4)
    return {k: jnp.stack(v, axis=0) for k, v in cols.items()}


def make_pointnetres(key):
    ks = jax.random.split(key, 7)
    # conv4 acts on cat([global(1024), pointfeat(64)]) -> split weight accordingly
    w4, b4 = make_folded_layer(ks[3], 1024 + 64, 512)
    return {
        "l1": make_folded_layer(ks[0], 4, 64),
        "l2": make_folded_layer(ks[1], 64, 128),
        "l3": make_folded_layer(ks[2], 128, 1024),
        "w4g": w4[:1024], "w4p": w4[1024:], "b4": b4,
        "l5": make_folded_layer(ks[4], 512, 256),
        "l6": make_folded_layer(ks[5], 256, 128),
        "l7": make_folded_layer(ks[6], 128, 3, with_bn=False),  # conv7 + tanh (bn7 unused)
    }


def make_msn_params(key, cfg):
    bott = cfg["bottleneck"]
    k_conv, k_enc1, k_enc2, k_conv_, k_dec, k_res = jax.random.split(key, 6)
    return {
        # scaled from Conv1d(1152, 1024): in = 3 * n_sample, out = bottleneck
        "conv": make_folded_layer(k_conv, 3 * cfg["n_sample"], bott),
        # TODO(synk): PseudoSPNet is not defined in the source; stand-in encoder
        # = pointwise conv (3->bott) + global max-pool + Linear + BN + LeakyReLU.
        "enc_pre": make_folded_layer(k_enc1, 3, bott),
        "enc_lin": make_folded_layer(k_enc2, bott, bott),
        # scaled from Conv1d(2048, 1024): in = 2 * bottleneck
        "conv_": make_folded_layer(k_conv_, 2 * bott, bott),
        "decoder": make_decoder_stack(k_dec, bott, cfg["n_primitives"]),
        "res": make_pointnetres(k_res),
    }


# ----------------------------------------------------------------------------
# MSN forward
# ----------------------------------------------------------------------------
def msn_forward(params, x_bcn, key, cfg):
    """x_bcn: (B, 3, N_in) in PyTorch NCW convention."""
    B, _, n_in = x_bcn.shape
    x_bnc = jnp.transpose(x_bcn, (0, 2, 1))                    # (B, N_in, 3)
    partial_bnc = x_bnc

    # TODO(synk): STN3d is not defined in the source; identity transform used,
    # so torch.bmm(x^T, trans) reduces to x^T.
    R = x_bnc

    k_perm, k_grid = jax.random.split(key)
    indices = jax.random.permutation(k_perm, n_in)[: cfg["n_sample"]]
    R = R[:, indices, :]                                       # (B, n_sample, 3)
    R = jnp.transpose(R, (0, 2, 1)).reshape(B, -1)             # (B, 3*n_sample)

    # Length-1-sequence convs are M=1 matmuls -> leave to XLA (no pallas overhead).
    w_conv, b_conv = params["conv"]
    Rf = _leaky(R @ w_conv + b_conv)                           # conv + bn + leakyrelu

    # encoder branch (stand-in, see TODO above): fused conv+relu+max in Pallas,
    # then tiny Linear + BN + LeakyReLU in XLA.  Dropout(0.1) omitted (eval).
    e = conv_relu_maxpool(x_bnc, *params["enc_pre"])           # (B, bottleneck)
    w_lin, b_lin = params["enc_lin"]
    e = _leaky(e @ w_lin + b_lin)

    w_c, b_c = params["conv_"]
    x = _leaky(jnp.concatenate([Rf, e], axis=1) @ w_c + b_c)   # (B, bottleneck)

    # decoder: every primitive in one stacked Pallas kernel.
    P = cfg["n_primitives"]
    npts = cfg["num_points"] // P
    dec = params["decoder"]
    rand_grid = jax.random.uniform(k_grid, (P, B, npts, 2), jnp.float32)
    # per-(primitive, batch) latent contribution to conv1 pre-activation
    h1_base = jnp.einsum("bc,pcd->pbd", x, dec["w1x"]) + dec["b1"]   # (P, B, bs)
    h1_base = h1_base[:, :, None, :]                                  # (P, B, 1, bs)
    outs = decoder_forward_stacked(dec, rand_grid, h1_base)           # (P, B, npts, 3)
    out1 = jnp.transpose(outs, (1, 0, 2, 3)).reshape(B, P * npts, 3)  # == torch out1

    # TODO(synk): expansionPenaltyModule is a custom CUDA op; loss_mst stubbed.
    loss_mst = jnp.float32(0.0)

    outs_f = jnp.concatenate(
        [out1, jnp.zeros((B, out1.shape[1], 1), jnp.float32)], axis=-1)      # id0
    partial_f = jnp.concatenate(
        [partial_bnc, jnp.ones((B, n_in, 1), jnp.float32)], axis=-1)         # id1
    xx = jnp.concatenate([outs_f, partial_f], axis=1)          # (B, NP + N_in, 4)

    # TODO(synk): MDS_module.minimum_density_sample / gather_operation are
    # custom CUDA ops; deterministically keep the first num_points points.
    xx = xx[:, : out1.shape[1], :]                             # (B, num_points, 4)

    res = params["res"]
    pointfeat, g = pointnetres_part1(res, xx)                  # (B, Np, 64), (B, 1024)
    g4 = (g @ res["w4g"] + res["b4"])[:, None, :]              # (B, 1, 512)
    delta = pointnetres_part2(res, pointfeat, g4)              # (B, Np, 3)
    out2 = xx[:, :, :3] + delta
    return out1, out2, loss_mst


# ----------------------------------------------------------------------------
if __name__ == "__main__":
    cfg = dict(
        batch=2,
        n_in=16,          # points in the partial input cloud
        num_points=32,    # total generated points (scaled from 8192)
        n_primitives=4,   # scaled from 16
        bottleneck=32,    # scaled from 1024
        n_sample=8,       # scaled from 384 (gives 3*8 = 24 conv in-channels)
    )
    key = jax.random.PRNGKey(0)
    kx, kp, kf = jax.random.split(key, 3)

    x = jax.random.normal(kx, (cfg["batch"], 3, cfg["n_in"]), jnp.float32)
    params = make_msn_params(kp, cfg)

    forward = jax.jit(functools.partial(msn_forward, cfg=cfg))
    out1, out2, loss_mst = forward(params, x, kf)
    jax.block_until_ready((out1, out2, loss_mst))

    assert out1.shape == (cfg["batch"], cfg["num_points"], 3)
    assert out2.shape == (cfg["batch"], cfg["num_points"], 3)
    print("KERNEL_OK")
</pallas_src>

<mosaic_0001>
module attributes {stable_mosaic.version = 11 : i64} {
  func.func @_conv_max_kernel(%arg0: i32, %arg1: i32, %arg2: memref<1x16x3xf32, #tpu.memory_space<vmem>>, %arg3: memref<3x32xf32, #tpu.memory_space<vmem>>, %arg4: memref<1x32xf32, #tpu.memory_space<vmem>>, %arg5: memref<1x1x32xf32, #tpu.memory_space<vmem>>, %arg6: memref<1x32xf32, #tpu.memory_space<vmem>>) attributes {dimension_semantics = [#tpu.dimension_semantics<parallel>, #tpu.dimension_semantics<arbitrary>], iteration_bounds = array<i64: 2, 1>, scalar_prefetch = 0 : i64, scratch_operands = 1 : i64, tpu.core_type = #tpu.core_type<tc>, window_params = [{transform_indices = @transform_0, window_bounds = array<i64: 1, 16, 3>}, {pipeline_mode = #tpu.pipeline_mode<synchronous>, transform_indices = @transform_1, window_bounds = array<i64: 3, 32>}, {pipeline_mode = #tpu.pipeline_mode<synchronous>, transform_indices = @transform_2, window_bounds = array<i64: 1, 32>}, {transform_indices = @transform_3, window_bounds = array<i64: 1, 1, 32>}]} {
    %c0 = arith.constant 0 : index
    %c0_0 = arith.constant 0 : index
    %c0_1 = arith.constant 0 : index
    %0 = vector.load %arg2[%c0, %c0_0, %c0_1] : memref<1x16x3xf32, #tpu.memory_space<vmem>>, vector<1x16x3xf32>
    %1 = vector.shape_cast %0 : vector<1x16x3xf32> to vector<16x3xf32>
    %c0_2 = arith.constant 0 : index
    %c0_3 = arith.constant 0 : index
    %2 = vector.load %arg3[%c0_2, %c0_3] : memref<3x32xf32, #tpu.memory_space<vmem>>, vector<3x32xf32>
    %cst = arith.constant dense<0.000000e+00> : vector<16x32xf32>
    %3 = tpu.matmul %1, %2, %cst {dimension_numbers = #tpu.dot_dimension_numbers<[1], [0], [0], [1], [0, 0, 1, 1], [], []>} : vector<16x3xf32>, vector<3x32xf32>, vector<16x32xf32> -> vector<16x32xf32>
    %c0_4 = arith.constant 0 : index
    %c0_5 = arith.constant 0 : index
    %4 = vector.load %arg4[%c0_4, %c0_5] : memref<1x32xf32, #tpu.memory_space<vmem>>, vector<1x32xf32>
    %5 = vector.broadcast %4 : vector<1x32xf32> to vector<16x32xf32>
    %6 = arith.addf %3, %5 : vector<16x32xf32>
    %cst_6 = arith.constant 0.000000e+00 : f32
    %7 = vector.broadcast %cst_6 : f32 to vector<16x32xf32>
    %8 = arith.maximumf %6, %7 : vector<16x32xf32>
    %c0_i32 = arith.constant 0 : i32
    %9 = arith.cmpi eq, %arg1, %c0_i32 : i32
    %10 = arith.extui %9 : i1 to i32
    %c0_i32_7 = arith.constant 0 : i32
    %11 = arith.cmpi ne, %10, %c0_i32_7 : i32
    scf.if %11 {
      %cst_15 = arith.constant 0xFF800000 : f32
      %20 = vector.broadcast %cst_15 : f32 to vector<1x32xf32>
      %c0_16 = arith.constant 0 : index
      %c0_17 = arith.constant 0 : index
      %21 = vector.load %arg6[%c0_16, %c0_17] : memref<1x32xf32, #tpu.memory_space<vmem>>, vector<1x32xf32>
      tpu.vector_store %arg6[%c0_16, %c0_17], %20 {strides = array<i32>} : memref<1x32xf32, #tpu.memory_space<vmem>>, vector<1x32xf32>,
    } else {
    }
    %c0_8 = arith.constant 0 : index
    %c0_9 = arith.constant 0 : index
    %12 = vector.load %arg6[%c0_8, %c0_9] : memref<1x32xf32, #tpu.memory_space<vmem>>, vector<1x32xf32>
    %cst_10 = arith.constant dense<0xFF800000> : vector<32xf32>
    %13 = vector.multi_reduction <maximumf>, %8, %cst_10 [0] : vector<16x32xf32> to vector<32xf32>
    %14 = vector.shape_cast %13 : vector<32xf32> to vector<1x32xf32>
    %15 = arith.maximumf %12, %14 : vector<1x32xf32>
    %c0_11 = arith.constant 0 : index
    %c0_12 = arith.constant 0 : index
    %16 = vector.load %arg6[%c0_11, %c0_12] : memref<1x32xf32, #tpu.memory_space<vmem>>, vector<1x32xf32>
    tpu.vector_store %arg6[%c0_11, %c0_12], %15 {strides = array<i32>} : memref<1x32xf32, #tpu.memory_space<vmem>>, vector<1x32xf32>,
    %c0_i32_13 = arith.constant 0 : i32
    %17 = arith.cmpi eq, %arg1, %c0_i32_13 : i32
    %18 = arith.extui %17 : i1 to i32
    %c0_i32_14 = arith.constant 0 : i32
    %19 = arith.cmpi ne, %18, %c0_i32_14 : i32
    scf.if %19 {
      %c0_15 = arith.constant 0 : index
      %c0_16 = arith.constant 0 : index
      %20 = vector.load %arg6[%c0_15, %c0_16] : memref<1x32xf32, #tpu.memory_space<vmem>>, vector<1x32xf32>
      %c0_17 = arith.constant 0 : index
      %c0_18 = arith.constant 0 : index
      %c0_19 = arith.constant 0 : index
      %21 = vector.load %arg5[%c0_17, %c0_18, %c0_19] : memref<1x1x32xf32, #tpu.memory_space<vmem>>, vector<1x1x32xf32>
      %22 = vector.shape_cast %21 : vector<1x1x32xf32> to vector<1x32xf32>
      %23 = vector.shape_cast %20 : vector<1x32xf32> to vector<1x1x32xf32>
      tpu.vector_store %arg5[%c0_17, %c0_18, %c0_19], %23 {strides = array<i32>} : memref<1x1x32xf32, #tpu.memory_space<vmem>>, vector<1x1x32xf32>,
    } else {
    }
    return
  }
  func.func @transform_0(%arg0: i32, %arg1: i32) -> (i32, i32, i32) {
    %c0_i32 = arith.constant 0 : i32
    %c0_i32_0 = arith.constant 0 : i32
    return %arg0, %arg1, %c0_i32 : i32, i32, i32
  }
  func.func @transform_1(%arg0: i32, %arg1: i32) -> (i32, i32) {
    %c0_i32 = arith.constant 0 : i32
    %c0_i32_0 = arith.constant 0 : i32
    %c0_i32_1 = arith.constant 0 : i32
    return %c0_i32, %c0_i32_0 : i32, i32
  }
  func.func @transform_2(%arg0: i32, %arg1: i32) -> (i32, i32) {
    %c0_i32 = arith.constant 0 : i32
    %c0_i32_0 = arith.constant 0 : i32
    %c0_i32_1 = arith.constant 0 : i32
    return %c0_i32, %c0_i32_0 : i32, i32
  }
  func.func @transform_3(%arg0: i32, %arg1: i32) -> (i32, i32, i32) {
    %c0_i32 = arith.constant 0 : i32
    %c0_i32_0 = arith.constant 0 : i32
    %c0_i32_1 = arith.constant 0 : i32
    return %arg0, %c0_i32, %c0_i32_0 : i32, i32, i32
  }
}

module attributes {stable_mosaic.version = 11 : i64} {
  func.func @_decoder_kernel(%arg0: i32, %arg1: i32, %arg2: i32, %arg3: memref<1x1x8x2xf32, #tpu.memory_space<vmem>>, %arg4: memref<1x1x1x34xf32, #tpu.memory_space<vmem>>, %arg5: memref<1x2x34xf32, #tpu.memory_space<vmem>>, %arg6: memref<1x34x17xf32, #tpu.memory_space<vmem>>, %arg7: memref<1x1x17xf32, #tpu.memory_space<vmem>>, %arg8: memref<1x17x8xf32, #tpu.memory_space<vmem>>, %arg9: memref<1x1x8xf32, #tpu.memory_space<vmem>>, %arg10: memref<1x8x3xf32, #tpu.memory_space<vmem>>, %arg11: memref<1x1x3xf32, #tpu.memory_space<vmem>>, %arg12: memref<1x1x8x3xf32, #tpu.memory_space<vmem>>) attributes {dimension_semantics = [#tpu.dimension_semantics<parallel>, #tpu.dimension_semantics<parallel>, #tpu.dimension_semantics<parallel>], iteration_bounds = array<i64: 4, 2, 1>, scalar_prefetch = 0 : i64, scratch_operands = 0 : i64, tpu.core_type = #tpu.core_type<tc>, window_params = [{transform_indices = @transform_0, window_bounds = array<i64: 1, 1, 8, 2>}, {transform_indices = @transform_1, window_bounds = array<i64: 1, 1, 1, 34>}, {transform_indices = @transform_2, window_bounds = array<i64: 1, 2, 34>}, {transform_indices = @transform_3, window_bounds = array<i64: 1, 34, 17>}, {transform_indices = @transform_4, window_bounds = array<i64: 1, 1, 17>}, {transform_indices = @transform_5, window_bounds = array<i64: 1, 17, 8>}, {transform_indices = @transform_6, window_bounds = array<i64: 1, 1, 8>}, {transform_indices = @transform_7, window_bounds = array<i64: 1, 8, 3>}, {transform_indices = @transform_8, window_bounds = array<i64: 1, 1, 3>}, {transform_indices = @transform_9, window_bounds = array<i64: 1, 1, 8, 3>}]} {
    %c0 = arith.constant 0 : index
    %c0_0 = arith.constant 0 : index
    %c0_1 = arith.constant 0 : index
    %c0_2 = arith.constant 0 : index
    %0 = vector.load %arg3[%c0, %c0_0, %c0_1, %c0_2] : memref<1x1x8x2xf32, #tpu.memory_space<vmem>>, vector<1x1x8x2xf32>
    %1 = vector.shape_cast %0 : vector<1x1x8x2xf32> to vector<8x2xf32>
    %c0_3 = arith.constant 0 : index
    %c0_4 = arith.constant 0 : index
    %c0_5 = arith.constant 0 : index
    %2 = vector.load %arg5[%c0_3, %c0_4, %c0_5] : memref<1x2x34xf32, #tpu.memory_space<vmem>>, vector<1x2x34xf32>
    %3 = vector.shape_cast %2 : vector<1x2x34xf32> to vector<2x34xf32>
    %cst = arith.constant dense<0.000000e+00> : vector<8x34xf32>
    %4 = tpu.matmul %1, %3, %cst {dimension_numbers = #tpu.dot_dimension_numbers<[1], [0], [0], [1], [0, 0, 1, 1], [], []>} : vector<8x2xf32>, vector<2x34xf32>, vector<8x34xf32> -> vector<8x34xf32>
    %c0_6 = arith.constant 0 : index
    %c0_7 = arith.constant 0 : index
    %c0_8 = arith.constant 0 : index
    %c0_9 = arith.constant 0 : index
    %5 = vector.load %arg4[%c0_6, %c0_7, %c0_8, %c0_9] : memref<1x1x1x34xf32, #tpu.memory_space<vmem>>, vector<1x1x1x34xf32>
    %6 = vector.shape_cast %5 : vector<1x1x1x34xf32> to vector<1x34xf32>
    %7 = vector.broadcast %6 : vector<1x34xf32> to vector<8x34xf32>
    %8 = arith.addf %4, %7 : vector<8x34xf32>
    %cst_10 = arith.constant 0.000000e+00 : f32
    %9 = vector.broadcast %cst_10 : f32 to vector<8x34xf32>
    %10 = arith.maximumf %8, %9 : vector<8x34xf32>
    %c0_11 = arith.constant 0 : index
    %c0_12 = arith.constant 0 : index
    %c0_13 = arith.constant 0 : index
    %11 = vector.load %arg6[%c0_11, %c0_12, %c0_13] : memref<1x34x17xf32, #tpu.memory_space<vmem>>, vector<1x34x17xf32>
    %12 = vector.shape_cast %11 : vector<1x34x17xf32> to vector<34x17xf32>
    %cst_14 = arith.constant dense<0.000000e+00> : vector<8x17xf32>
    %13 = tpu.matmul %10, %12, %cst_14 {dimension_numbers = #tpu.dot_dimension_numbers<[1], [0], [0], [1], [0, 0, 1, 1], [], []>} : vector<8x34xf32>, vector<34x17xf32>, vector<8x17xf32> -> vector<8x17xf32>
    %c0_15 = arith.constant 0 : index
    %c0_16 = arith.constant 0 : index
    %c0_17 = arith.constant 0 : index
    %14 = vector.load %arg7[%c0_15, %c0_16, %c0_17] : memref<1x1x17xf32, #tpu.memory_space<vmem>>, vector<1x1x17xf32>
    %15 = vector.shape_cast %14 : vector<1x1x17xf32> to vector<1x17xf32>
    %16 = vector.broadcast %15 : vector<1x17xf32> to vector<8x17xf32>
    %17 = arith.addf %13, %16 : vector<8x17xf32>
    %cst_18 = arith.constant 0.000000e+00 : f32
    %18 = vector.broadcast %cst_18 : f32 to vector<8x17xf32>
    %19 = arith.maximumf %17, %18 : vector<8x17xf32>
    %c0_19 = arith.constant 0 : index
    %c0_20 = arith.constant 0 : index
    %c0_21 = arith.constant 0 : index
    %20 = vector.load %arg8[%c0_19, %c0_20, %c0_21] : memref<1x17x8xf32, #tpu.memory_space<vmem>>, vector<1x17x8xf32>
    %21 = vector.shape_cast %20 : vector<1x17x8xf32> to vector<17x8xf32>
    %cst_22 = arith.constant dense<0.000000e+00> : vector<8x8xf32>
    %22 = tpu.matmul %19, %21, %cst_22 {dimension_numbers = #tpu.dot_dimension_numbers<[1], [0], [0], [1], [0, 0, 1, 1], [], []>} : vector<8x17xf32>, vector<17x8xf32>, vector<8x8xf32> -> vector<8x8xf32>
    %c0_23 = arith.constant 0 : index
    %c0_24 = arith.constant 0 : index
    %c0_25 = arith.constant 0 : index
    %23 = vector.load %arg9[%c0_23, %c0_24, %c0_25] : memref<1x1x8xf32, #tpu.memory_space<vmem>>, vector<1x1x8xf32>
    %24 = vector.shape_cast %23 : vector<1x1x8xf32> to vector<1x8xf32>
    %25 = vector.broadcast %24 : vector<1x8xf32> to vector<8x8xf32>
    %26 = arith.addf %22, %25 : vector<8x8xf32>
    %cst_26 = arith.constant 0.000000e+00 : f32
    %27 = vector.broadcast %cst_26 : f32 to vector<8x8xf32>
    %28 = arith.maximumf %26, %27 : vector<8x8xf32>
    %c0_27 = arith.constant 0 : index
    %c0_28 = arith.constant 0 : index
    %c0_29 = arith.constant 0 : index
    %29 = vector.load %arg10[%c0_27, %c0_28, %c0_29] : memref<1x8x3xf32, #tpu.memory_space<vmem>>, vector<1x8x3xf32>
    %30 = vector.shape_cast %29 : vector<1x8x3xf32> to vector<8x3xf32>
    %cst_30 = arith.constant dense<0.000000e+00> : vector<8x3xf32>
    %31 = tpu.matmul %28, %30, %cst_30 {dimension_numbers = #tpu.dot_dimension_numbers<[1], [0], [0], [1], [0, 0, 1, 1], [], []>} : vector<8x8xf32>, vector<8x3xf32>, vector<8x3xf32> -> vector<8x3xf32>
    %c0_31 = arith.constant 0 : index
    %c0_32 = arith.constant 0 : index
    %c0_33 = arith.constant 0 : index
    %32 = vector.load %arg11[%c0_31, %c0_32, %c0_33] : memref<1x1x3xf32, #tpu.memory_space<vmem>>, vector<1x1x3xf32>
    %33 = vector.shape_cast %32 : vector<1x1x3xf32> to vector<1x3xf32>
    %34 = vector.broadcast %33 : vector<1x3xf32> to vector<8x3xf32>
    %35 = arith.addf %31, %34 : vector<8x3xf32>
    %36 = math.tanh %35 : vector<8x3xf32>
    %c0_34 = arith.constant 0 : index
    %c0_35 = arith.constant 0 : index
    %c0_36 = arith.constant 0 : index
    %c0_37 = arith.constant 0 : index
    %37 = vector.load %arg12[%c0_34, %c0_35, %c0_36, %c0_37] : memref<1x1x8x3xf32, #tpu.memory_space<vmem>>, vector<1x1x8x3xf32>
    %38 = vector.shape_cast %37 : vector<1x1x8x3xf32> to vector<8x3xf32>
    %39 = vector.shape_cast %36 : vector<8x3xf32> to vector<1x1x8x3xf32>
    tpu.vector_store %arg12[%c0_34, %c0_35, %c0_36, %c0_37], %39 {strides = array<i32>} : memref<1x1x8x3xf32, #tpu.memory_space<vmem>>, vector<1x1x8x3xf32>,
    return
  }
  func.func @transform_0(%arg0: i32, %arg1: i32, %arg2: i32) -> (i32, i32, i32, i32) {
    %c0_i32 = arith.constant 0 : i32
    %c0_i32_0 = arith.constant 0 : i32
    return %arg0, %arg1, %arg2, %c0_i32 : i32, i32, i32, i32
  }
  func.func @transform_1(%arg0: i32, %arg1: i32, %arg2: i32) -> (i32, i32, i32, i32) {
    %c0_i32 = arith.constant 0 : i32
    %c0_i32_0 = arith.constant 0 : i32
    %c0_i32_1 = arith.constant 0 : i32
    return %arg0, %arg1, %c0_i32, %c0_i32_0 : i32, i32, i32, i32
  }
  func.func @transform_2(%arg0: i32, %arg1: i32, %arg2: i32) -> (i32, i32, i32) {
    %c0_i32 = arith.constant 0 : i32
    %c0_i32_0 = arith.constant 0 : i32
    %c0_i32_1 = arith.constant 0 : i32
    return %arg0, %c0_i32, %c0_i32_0 : i32, i32, i32
  }
  func.func @transform_3(%arg0: i32, %arg1: i32, %arg2: i32) -> (i32, i32, i32) {
    %c0_i32 = arith.constant 0 : i32
    %c0_i32_0 = arith.constant 0 : i32
    %c0_i32_1 = arith.constant 0 : i32
    return %arg0, %c0_i32, %c0_i32_0 : i32, i32, i32
  }
  func.func @transform_4(%arg0: i32, %arg1: i32, %arg2: i32) -> (i32, i32, i32) {
    %c0_i32 = arith.constant 0 : i32
    %c0_i32_0 = arith.constant 0 : i32
    %c0_i32_1 = arith.constant 0 : i32
    return %arg0, %c0_i32, %c0_i32_0 : i32, i32, i32
  }
  func.func @transform_5(%arg0: i32, %arg1: i32, %arg2: i32) -> (i32, i32, i32) {
    %c0_i32 = arith.constant 0 : i32
    %c0_i32_0 = arith.constant 0 : i32
    %c0_i32_1 = arith.constant 0 : i32
    return %arg0, %c0_i32, %c0_i32_0 : i32, i32, i32
  }
  func.func @transform_6(%arg0: i32, %arg1: i32, %arg2: i32) -> (i32, i32, i32) {
    %c0_i32 = arith.constant 0 : i32
    %c0_i32_0 = arith.constant 0 : i32
    %c0_i32_1 = arith.constant 0 : i32
    return %arg0, %c0_i32, %c0_i32_0 : i32, i32, i32
  }
  func.func @transform_7(%arg0: i32, %arg1: i32, %arg2: i32) -> (i32, i32, i32) {
    %c0_i32 = arith.constant 0 : i32
    %c0_i32_0 = arith.constant 0 : i32
    %c0_i32_1 = arith.constant 0 : i32
    return %arg0, %c0_i32, %c0_i32_0 : i32, i32, i32
  }
  func.func @transform_8(%arg0: i32, %arg1: i32, %arg2: i32) -> (i32, i32, i32) {
    %c0_i32 = arith.constant 0 : i32
    %c0_i32_0 = arith.constant 0 : i32
    %c0_i32_1 = arith.constant 0 : i32
    return %arg0, %c0_i32, %c0_i32_0 : i32, i32, i32
  }
  func.func @transform_9(%arg0: i32, %arg1: i32, %arg2: i32) -> (i32, i32, i32, i32) {
    %c0_i32 = arith.constant 0 : i32
    %c0_i32_0 = arith.constant 0 : i32
    return %arg0, %arg1, %arg2, %c0_i32 : i32, i32, i32, i32
  }
}

module attributes {stable_mosaic.version = 11 : i64} {
  func.func @_res_part1_kernel(%arg0: i32, %arg1: i32, %arg2: memref<1x32x4xf32, #tpu.memory_space<vmem>>, %arg3: memref<4x64xf32, #tpu.memory_space<vmem>>, %arg4: memref<1x64xf32, #tpu.memory_space<vmem>>, %arg5: memref<64x128xf32, #tpu.memory_space<vmem>>, %arg6: memref<1x128xf32, #tpu.memory_space<vmem>>, %arg7: memref<128x1024xf32, #tpu.memory_space<vmem>>, %arg8: memref<1x1024xf32, #tpu.memory_space<vmem>>, %arg9: memref<1x32x64xf32, #tpu.memory_space<vmem>>, %arg10: memref<1x1x1024xf32, #tpu.memory_space<vmem>>, %arg11: memref<1x1024xf32, #tpu.memory_space<vmem>>) attributes {dimension_semantics = [#tpu.dimension_semantics<parallel>, #tpu.dimension_semantics<arbitrary>], iteration_bounds = array<i64: 2, 1>, scalar_prefetch = 0 : i64, scratch_operands = 1 : i64, tpu.core_type = #tpu.core_type<tc>, window_params = [{transform_indices = @transform_0, window_bounds = array<i64: 1, 32, 4>}, {pipeline_mode = #tpu.pipeline_mode<synchronous>, transform_indices = @transform_1, window_bounds = array<i64: 4, 64>}, {pipeline_mode = #tpu.pipeline_mode<synchronous>, transform_indices = @transform_2, window_bounds = array<i64: 1, 64>}, {pipeline_mode = #tpu.pipeline_mode<synchronous>, transform_indices = @transform_3, window_bounds = array<i64: 64, 128>}, {pipeline_mode = #tpu.pipeline_mode<synchronous>, transform_indices = @transform_4, window_bounds = array<i64: 1, 128>}, {pipeline_mode = #tpu.pipeline_mode<synchronous>, transform_indices = @transform_5, window_bounds = array<i64: 128, 1024>}, {pipeline_mode = #tpu.pipeline_mode<synchronous>, transform_indices = @transform_6, window_bounds = array<i64: 1, 1024>}, {transform_indices = @transform_7, window_bounds = array<i64: 1, 32, 64>}, {transform_indices = @transform_8, window_bounds = array<i64: 1, 1, 1024>}]} {
    %c0 = arith.constant 0 : index
    %c0_0 = arith.constant 0 : index
    %c0_1 = arith.constant 0 : index
    %0 = vector.load %arg2[%c0, %c0_0, %c0_1] : memref<1x32x4xf32, #tpu.memory_space<vmem>>, vector<1x32x4xf32>
    %1 = vector.shape_cast %0 : vector<1x32x4xf32> to vector<32x4xf32>
    %c0_2 = arith.constant 0 : index
    %c0_3 = arith.constant 0 : index
    %2 = vector.load %arg3[%c0_2, %c0_3] : memref<4x64xf32, #tpu.memory_space<vmem>>, vector<4x64xf32>
    %cst = arith.constant dense<0.000000e+00> : vector<32x64xf32>
    %3 = tpu.matmul %1, %2, %cst {dimension_numbers = #tpu.dot_dimension_numbers<[1], [0], [0], [1], [0, 0, 1, 1], [], []>} : vector<32x4xf32>, vector<4x64xf32>, vector<32x64xf32> -> vector<32x64xf32>
    %c0_4 = arith.constant 0 : index
    %c0_5 = arith.constant 0 : index
    %4 = vector.load %arg4[%c0_4, %c0_5] : memref<1x64xf32, #tpu.memory_space<vmem>>, vector<1x64xf32>
    %5 = vector.broadcast %4 : vector<1x64xf32> to vector<32x64xf32>
    %6 = arith.addf %3, %5 : vector<32x64xf32>
    %cst_6 = arith.constant 0.000000e+00 : f32
    %7 = vector.broadcast %cst_6 : f32 to vector<32x64xf32>
    %8 = arith.maximumf %6, %7 : vector<32x64xf32>
    %c0_7 = arith.constant 0 : index
    %c0_8 = arith.constant 0 : index
    %c0_9 = arith.constant 0 : index
    %9 = vector.load %arg9[%c0_7, %c0_8, %c0_9] : memref<1x32x64xf32, #tpu.memory_space<vmem>>, vector<1x32x64xf32>
    %10 = vector.shape_cast %9 : vector<1x32x64xf32> to vector<32x64xf32>
    %11 = vector.shape_cast %8 : vector<32x64xf32> to vector<1x32x64xf32>
    tpu.vector_store %arg9[%c0_7, %c0_8, %c0_9], %11 {strides = array<i32>} : memref<1x32x64xf32, #tpu.memory_space<vmem>>, vector<1x32x64xf32>,
    %c0_10 = arith.constant 0 : index
    %c0_11 = arith.constant 0 : index
    %12 = vector.load %arg5[%c0_10, %c0_11] : memref<64x128xf32, #tpu.memory_space<vmem>>, vector<64x128xf32>
    %cst_12 = arith.constant dense<0.000000e+00> : vector<32x128xf32>
    %13 = tpu.matmul %8, %12, %cst_12 {dimension_numbers = #tpu.dot_dimension_numbers<[1], [0], [0], [1], [0, 0, 1, 1], [], []>} : vector<32x64xf32>, vector<64x128xf32>, vector<32x128xf32> -> vector<32x128xf32>
    %c0_13 = arith.constant 0 : index
    %c0_14 = arith.constant 0 : index
    %14 = vector.load %arg6[%c0_13, %c0_14] : memref<1x128xf32, #tpu.memory_space<vmem>>, vector<1x128xf32>
    %15 = vector.broadcast %14 : vector<1x128xf32> to vector<32x128xf32>
    %16 = arith.addf %13, %15 : vector<32x128xf32>
    %cst_15 = arith.constant 0.000000e+00 : f32
    %17 = vector.broadcast %cst_15 : f32 to vector<32x128xf32>
    %18 = arith.maximumf %16, %17 : vector<32x128xf32>
    %c0_16 = arith.constant 0 : index
    %c0_17 = arith.constant 0 : index
    %19 = vector.load %arg7[%c0_16, %c0_17] : memref<128x1024xf32, #tpu.memory_space<vmem>>, vector<128x1024xf32>
    %cst_18 = arith.constant dense<0.000000e+00> : vector<32x1024xf32>
    %20 = tpu.matmul %18, %19, %cst_18 {dimension_numbers = #tpu.dot_dimension_numbers<[1], [0], [0], [1], [0, 0, 1, 1], [], []>} : vector<32x128xf32>, vector<128x1024xf32>, vector<32x1024xf32> -> vector<32x1024xf32>
    %c0_19 = arith.constant 0 : index
    %c0_20 = arith.constant 0 : index
    %21 = vector.load %arg8[%c0_19, %c0_20] : memref<1x1024xf32, #tpu.memory_space<vmem>>, vector<1x1024xf32>
    %22 = vector.broadcast %21 : vector<1x1024xf32> to vector<32x1024xf32>
    %23 = arith.addf %20, %22 : vector<32x1024xf32>
    %c0_i32 = arith.constant 0 : i32
    %24 = arith.cmpi eq, %arg1, %c0_i32 : i32
    %25 = arith.extui %24 : i1 to i32
    %c0_i32_21 = arith.constant 0 : i32
    %26 = arith.cmpi ne, %25, %c0_i32_21 : i32
    scf.if %26 {
      %cst_29 = arith.constant 0xFF800000 : f32
      %35 = vector.broadcast %cst_29 : f32 to vector<1x1024xf32>
      %c0_30 = arith.constant 0 : index
      %c0_31 = arith.constant 0 : index
      %36 = vector.load %arg11[%c0_30, %c0_31] : memref<1x1024xf32, #tpu.memory_space<vmem>>, vector<1x1024xf32>
      tpu.vector_store %arg11[%c0_30, %c0_31], %35 {strides = array<i32>} : memref<1x1024xf32, #tpu.memory_space<vmem>>, vector<1x1024xf32>,
    } else {
    }
    %c0_22 = arith.constant 0 : index
    %c0_23 = arith.constant 0 : index
    %27 = vector.load %arg11[%c0_22, %c0_23] : memref<1x1024xf32, #tpu.memory_space<vmem>>, vector<1x1024xf32>
    %cst_24 = arith.constant dense<0xFF800000> : vector<1024xf32>
    %28 = vector.multi_reduction <maximumf>, %23, %cst_24 [0] : vector<32x1024xf32> to vector<1024xf32>
    %29 = vector.shape_cast %28 : vector<1024xf32> to vector<1x1024xf32>
    %30 = arith.maximumf %27, %29 : vector<1x1024xf32>
    %c0_25 = arith.constant 0 : index
    %c0_26 = arith.constant 0 : index
    %31 = vector.load %arg11[%c0_25, %c0_26] : memref<1x1024xf32, #tpu.memory_space<vmem>>, vector<1x1024xf32>
    tpu.vector_store %arg11[%c0_25, %c0_26], %30 {strides = array<i32>} : memref<1x1024xf32, #tpu.memory_space<vmem>>, vector<1x1024xf32>,
    %c0_i32_27 = arith.constant 0 : i32
    %32 = arith.cmpi eq, %arg1, %c0_i32_27 : i32
    %33 = arith.extui %32 : i1 to i32
    %c0_i32_28 = arith.constant 0 : i32
    %34 = arith.cmpi ne, %33, %c0_i32_28 : i32
    scf.if %34 {
      %c0_29 = arith.constant 0 : index
      %c0_30 = arith.constant 0 : index
      %35 = vector.load %arg11[%c0_29, %c0_30] : memref<1x1024xf32, #tpu.memory_space<vmem>>, vector<1x1024xf32>
      %c0_31 = arith.constant 0 : index
      %c0_32 = arith.constant 0 : index
      %c0_33 = arith.constant 0 : index
      %36 = vector.load %arg10[%c0_31, %c0_32, %c0_33] : memref<1x1x1024xf32, #tpu.memory_space<vmem>>, vector<1x1x1024xf32>
      %37 = vector.shape_cast %36 : vector<1x1x1024xf32> to vector<1x1024xf32>
      %38 = vector.shape_cast %35 : vector<1x1024xf32> to vector<1x1x1024xf32>
      tpu.vector_store %arg10[%c0_31, %c0_32, %c0_33], %38 {strides = array<i32>} : memref<1x1x1024xf32, #tpu.memory_space<vmem>>, vector<1x1x1024xf32>,
    } else {
    }
    return
  }
  func.func @transform_0(%arg0: i32, %arg1: i32) -> (i32, i32, i32) {
    %c0_i32 = arith.constant 0 : i32
    %c0_i32_0 = arith.constant 0 : i32
    return %arg0, %arg1, %c0_i32 : i32, i32, i32
  }
  func.func @transform_1(%arg0: i32, %arg1: i32) -> (i32, i32) {
    %c0_i32 = arith.constant 0 : i32
    %c0_i32_0 = arith.constant 0 : i32
    %c0_i32_1 = arith.constant 0 : i32
    return %c0_i32, %c0_i32_0 : i32, i32
  }
  func.func @transform_2(%arg0: i32, %arg1: i32) -> (i32, i32) {
    %c0_i32 = arith.constant 0 : i32
    %c0_i32_0 = arith.constant 0 : i32
    %c0_i32_1 = arith.constant 0 : i32
    return %c0_i32, %c0_i32_0 : i32, i32
  }
  func.func @transform_3(%arg0: i32, %arg1: i32) -> (i32, i32) {
    %c0_i32 = arith.constant 0 : i32
    %c0_i32_0 = arith.constant 0 : i32
    %c0_i32_1 = arith.constant 0 : i32
    return %c0_i32, %c0_i32_0 : i32, i32
  }
  func.func @transform_4(%arg0: i32, %arg1: i32) -> (i32, i32) {
    %c0_i32 = arith.constant 0 : i32
    %c0_i32_0 = arith.constant 0 : i32
    %c0_i32_1 = arith.constant 0 : i32
    return %c0_i32, %c0_i32_0 : i32, i32
  }
  func.func @transform_5(%arg0: i32, %arg1: i32) -> (i32, i32) {
    %c0_i32 = arith.constant 0 : i32
    %c0_i32_0 = arith.constant 0 : i32
    %c0_i32_1 = arith.constant 0 : i32
    return %c0_i32, %c0_i32_0 : i32, i32
  }
  func.func @transform_6(%arg0: i32, %arg1: i32) -> (i32, i32) {
    %c0_i32 = arith.constant 0 : i32
    %c0_i32_0 = arith.constant 0 : i32
    %c0_i32_1 = arith.constant 0 : i32
    return %c0_i32, %c0_i32_0 : i32, i32
  }
  func.func @transform_7(%arg0: i32, %arg1: i32) -> (i32, i32, i32) {
    %c0_i32 = arith.constant 0 : i32
    %c0_i32_0 = arith.constant 0 : i32
    return %arg0, %arg1, %c0_i32 : i32, i32, i32
  }
  func.func @transform_8(%arg0: i32, %arg1: i32) -> (i32, i32, i32) {
    %c0_i32 = arith.constant 0 : i32
    %c0_i32_0 = arith.constant 0 : i32
    %c0_i32_1 = arith.constant 0 : i32
    return %arg0, %c0_i32, %c0_i32_0 : i32, i32, i32
  }
}

module attributes {stable_mosaic.version = 11 : i64} {
  func.func @_res_part2_kernel(%arg0: i32, %arg1: i32, %arg2: memref<1x32x64xf32, #tpu.memory_space<vmem>>, %arg3: memref<1x1x512xf32, #tpu.memory_space<vmem>>, %arg4: memref<64x512xf32, #tpu.memory_space<vmem>>, %arg5: memref<512x256xf32, #tpu.memory_space<vmem>>, %arg6: memref<1x256xf32, #tpu.memory_space<vmem>>, %arg7: memref<256x128xf32, #tpu.memory_space<vmem>>, %arg8: memref<1x128xf32, #tpu.memory_space<vmem>>, %arg9: memref<128x3xf32, #tpu.memory_space<vmem>>, %arg10: memref<1x3xf32, #tpu.memory_space<vmem>>, %arg11: memref<1x32x3xf32, #tpu.memory_space<vmem>>) attributes {dimension_semantics = [#tpu.dimension_semantics<parallel>, #tpu.dimension_semantics<parallel>], iteration_bounds = array<i64: 2, 1>, scalar_prefetch = 0 : i64, scratch_operands = 0 : i64, tpu.core_type = #tpu.core_type<tc>, window_params = [{transform_indices = @transform_0, window_bounds = array<i64: 1, 32, 64>}, {transform_indices = @transform_1, window_bounds = array<i64: 1, 1, 512>}, {pipeline_mode = #tpu.pipeline_mode<synchronous>, transform_indices = @transform_2, window_bounds = array<i64: 64, 512>}, {pipeline_mode = #tpu.pipeline_mode<synchronous>, transform_indices = @transform_3, window_bounds = array<i64: 512, 256>}, {pipeline_mode = #tpu.pipeline_mode<synchronous>, transform_indices = @transform_4, window_bounds = array<i64: 1, 256>}, {pipeline_mode = #tpu.pipeline_mode<synchronous>, transform_indices = @transform_5, window_bounds = array<i64: 256, 128>}, {pipeline_mode = #tpu.pipeline_mode<synchronous>, transform_indices = @transform_6, window_bounds = array<i64: 1, 128>}, {pipeline_mode = #tpu.pipeline_mode<synchronous>, transform_indices = @transform_7, window_bounds = array<i64: 128, 3>}, {pipeline_mode = #tpu.pipeline_mode<synchronous>, transform_indices = @transform_8, window_bounds = array<i64: 1, 3>}, {transform_indices = @transform_9, window_bounds = array<i64: 1, 32, 3>}]} {
    %c0 = arith.constant 0 : index
    %c0_0 = arith.constant 0 : index
    %c0_1 = arith.constant 0 : index
    %0 = vector.load %arg2[%c0, %c0_0, %c0_1] : memref<1x32x64xf32, #tpu.memory_space<vmem>>, vector<1x32x64xf32>
    %1 = vector.shape_cast %0 : vector<1x32x64xf32> to vector<32x64xf32>
    %c0_2 = arith.constant 0 : index
    %c0_3 = arith.constant 0 : index
    %2 = vector.load %arg4[%c0_2, %c0_3] : memref<64x512xf32, #tpu.memory_space<vmem>>, vector<64x512xf32>
    %cst = arith.constant dense<0.000000e+00> : vector<32x512xf32>
    %3 = tpu.matmul %1, %2, %cst {dimension_numbers = #tpu.dot_dimension_numbers<[1], [0], [0], [1], [0, 0, 1, 1], [], []>} : vector<32x64xf32>, vector<64x512xf32>, vector<32x512xf32> -> vector<32x512xf32>
    %c0_4 = arith.constant 0 : index
    %c0_5 = arith.constant 0 : index
    %c0_6 = arith.constant 0 : index
    %4 = vector.load %arg3[%c0_4, %c0_5, %c0_6] : memref<1x1x512xf32, #tpu.memory_space<vmem>>, vector<1x1x512xf32>
    %5 = vector.shape_cast %4 : vector<1x1x512xf32> to vector<1x512xf32>
    %6 = vector.broadcast %5 : vector<1x512xf32> to vector<32x512xf32>
    %7 = arith.addf %3, %6 : vector<32x512xf32>
    %cst_7 = arith.constant 0.000000e+00 : f32
    %8 = vector.broadcast %cst_7 : f32 to vector<32x512xf32>
    %9 = arith.maximumf %7, %8 : vector<32x512xf32>
    %c0_8 = arith.constant 0 : index
    %c0_9 = arith.constant 0 : index
    %10 = vector.load %arg5[%c0_8, %c0_9] : memref<512x256xf32, #tpu.memory_space<vmem>>, vector<512x256xf32>
    %cst_10 = arith.constant dense<0.000000e+00> : vector<32x256xf32>
    %11 = tpu.matmul %9, %10, %cst_10 {dimension_numbers = #tpu.dot_dimension_numbers<[1], [0], [0], [1], [0, 0, 1, 1], [], []>} : vector<32x512xf32>, vector<512x256xf32>, vector<32x256xf32> -> vector<32x256xf32>
    %c0_11 = arith.constant 0 : index
    %c0_12 = arith.constant 0 : index
    %12 = vector.load %arg6[%c0_11, %c0_12] : memref<1x256xf32, #tpu.memory_space<vmem>>, vector<1x256xf32>
    %13 = vector.broadcast %12 : vector<1x256xf32> to vector<32x256xf32>
    %14 = arith.addf %11, %13 : vector<32x256xf32>
    %cst_13 = arith.constant 0.000000e+00 : f32
    %15 = vector.broadcast %cst_13 : f32 to vector<32x256xf32>
    %16 = arith.maximumf %14, %15 : vector<32x256xf32>
    %c0_14 = arith.constant 0 : index
    %c0_15 = arith.constant 0 : index
    %17 = vector.load %arg7[%c0_14, %c0_15] : memref<256x128xf32, #tpu.memory_space<vmem>>, vector<256x128xf32>
    %cst_16 = arith.constant dense<0.000000e+00> : vector<32x128xf32>
    %18 = tpu.matmul %16, %17, %cst_16 {dimension_numbers = #tpu.dot_dimension_numbers<[1], [0], [0], [1], [0, 0, 1, 1], [], []>} : vector<32x256xf32>, vector<256x128xf32>, vector<32x128xf32> -> vector<32x128xf32>
    %c0_17 = arith.constant 0 : index
    %c0_18 = arith.constant 0 : index
    %19 = vector.load %arg8[%c0_17, %c0_18] : memref<1x128xf32, #tpu.memory_space<vmem>>, vector<1x128xf32>
    %20 = vector.broadcast %19 : vector<1x128xf32> to vector<32x128xf32>
    %21 = arith.addf %18, %20 : vector<32x128xf32>
    %cst_19 = arith.constant 0.000000e+00 : f32
    %22 = vector.broadcast %cst_19 : f32 to vector<32x128xf32>
    %23 = arith.maximumf %21, %22 : vector<32x128xf32>
    %c0_20 = arith.constant 0 : index
    %c0_21 = arith.constant 0 : index
    %24 = vector.load %arg9[%c0_20, %c0_21] : memref<128x3xf32, #tpu.memory_space<vmem>>, vector<128x3xf32>
    %cst_22 = arith.constant dense<0.000000e+00> : vector<32x3xf32>
    %25 = tpu.matmul %23, %24, %cst_22 {dimension_numbers = #tpu.dot_dimension_numbers<[1], [0], [0], [1], [0, 0, 1, 1], [], []>} : vector<32x128xf32>, vector<128x3xf32>, vector<32x3xf32> -> vector<32x3xf32>
    %c0_23 = arith.constant 0 : index
    %c0_24 = arith.constant 0 : index
    %26 = vector.load %arg10[%c0_23, %c0_24] : memref<1x3xf32, #tpu.memory_space<vmem>>, vector<1x3xf32>
    %27 = vector.broadcast %26 : vector<1x3xf32> to vector<32x3xf32>
    %28 = arith.addf %25, %27 : vector<32x3xf32>
    %29 = math.tanh %28 : vector<32x3xf32>
    %c0_25 = arith.constant 0 : index
    %c0_26 = arith.constant 0 : index
    %c0_27 = arith.constant 0 : index
    %30 = vector.load %arg11[%c0_25, %c0_26, %c0_27] : memref<1x32x3xf32, #tpu.memory_space<vmem>>, vector<1x32x3xf32>
    %31 = vector.shape_cast %30 : vector<1x32x3xf32> to vector<32x3xf32>
    %32 = vector.shape_cast %29 : vector<32x3xf32> to vector<1x32x3xf32>
    tpu.vector_store %arg11[%c0_25, %c0_26, %c0_27], %32 {strides = array<i32>} : memref<1x32x3xf32, #tpu.memory_space<vmem>>, vector<1x32x3xf32>,
    return
  }
  func.func @transform_0(%arg0: i32, %arg1: i32) -> (i32, i32, i32) {
    %c0_i32 = arith.constant 0 : i32
    %c0_i32_0 = arith.constant 0 : i32
    return %arg0, %arg1, %c0_i32 : i32, i32, i32
  }
  func.func @transform_1(%arg0: i32, %arg1: i32) -> (i32, i32, i32) {
    %c0_i32 = arith.constant 0 : i32
    %c0_i32_0 = arith.constant 0 : i32
    %c0_i32_1 = arith.constant 0 : i32
    return %arg0, %c0_i32, %c0_i32_0 : i32, i32, i32
  }
  func.func @transform_2(%arg0: i32, %arg1: i32) -> (i32, i32) {
    %c0_i32 = arith.constant 0 : i32
    %c0_i32_0 = arith.constant 0 : i32
    %c0_i32_1 = arith.constant 0 : i32
    return %c0_i32, %c0_i32_0 : i32, i32
  }
  func.func @transform_3(%arg0: i32, %arg1: i32) -> (i32, i32) {
    %c0_i32 = arith.constant 0 : i32
    %c0_i32_0 = arith.constant 0 : i32
    %c0_i32_1 = arith.constant 0 : i32
    return %c0_i32, %c0_i32_0 : i32, i32
  }
  func.func @transform_4(%arg0: i32, %arg1: i32) -> (i32, i32) {
    %c0_i32 = arith.constant 0 : i32
    %c0_i32_0 = arith.constant 0 : i32
    %c0_i32_1 = arith.constant 0 : i32
    return %c0_i32, %c0_i32_0 : i32, i32
  }
  func.func @transform_5(%arg0: i32, %arg1: i32) -> (i32, i32) {
    %c0_i32 = arith.constant 0 : i32
    %c0_i32_0 = arith.constant 0 : i32
    %c0_i32_1 = arith.constant 0 : i32
    return %c0_i32, %c0_i32_0 : i32, i32
  }
  func.func @transform_6(%arg0: i32, %arg1: i32) -> (i32, i32) {
    %c0_i32 = arith.constant 0 : i32
    %c0_i32_0 = arith.constant 0 : i32
    %c0_i32_1 = arith.constant 0 : i32
    return %c0_i32, %c0_i32_0 : i32, i32
  }
  func.func @transform_7(%arg0: i32, %arg1: i32) -> (i32, i32) {
    %c0_i32 = arith.constant 0 : i32
    %c0_i32_0 = arith.constant 0 : i32
    %c0_i32_1 = arith.constant 0 : i32
    return %c0_i32, %c0_i32_0 : i32, i32
  }
  func.func @transform_8(%arg0: i32, %arg1: i32) -> (i32, i32) {
    %c0_i32 = arith.constant 0 : i32
    %c0_i32_0 = arith.constant 0 : i32
    %c0_i32_1 = arith.constant 0 : i32
    return %c0_i32, %c0_i32_0 : i32, i32
  }
  func.func @transform_9(%arg0: i32, %arg1: i32) -> (i32, i32, i32) {
    %c0_i32 = arith.constant 0 : i32
    %c0_i32_0 = arith.constant 0 : i32
    return %arg0, %arg1, %c0_i32 : i32, i32, i32
  }
}

</mosaic_0001>

<llo_original>
// kernel: msn_forward.4
$region0: #{msn_forward.4}
  #allocation0 [shape = 'u32[]', space=smem, size = 0x4, offset = 0x4, fixed_abs, tag = 'smem constant byte address 0x4 - core index']
  #allocation1 [shape = 'u32[144,128]{1,0:T(1,128)}', space=vmem, size = 0x12000, scoped, tag = 'internal scratch']
  #allocation2 [shape = 'f32[1,32]{1,0:T(1,128)}', space=vmem, size = 0x200, scoped, tag = 'scratch operand']
  %s0 = inlined_call_operand.vmem [shape: f32[2,16,3], index: 0, kind: input, shape index: {}]
  %s1 = inlined_call_operand.hbm [shape: f32[3,32], index: 1, kind: input, shape index: {}]
  %s2 = inlined_call_operand.hbm [shape: f32[1,32], index: 2, kind: input, shape index: {}]
  %s3 = inlined_call_operand.vmem [shape: f32[2,1,32], index: 3, kind: output, shape index: {}]
  %s4 = sld [smem:[#allocation0]]
  $region61: #{msn_forward.4} parent=0
    _
  %s6 = ssub.s32 1, %s4
  %s7 = scalar_select 0, %s6, %s4
  $region1: #{msn_forward.4} parent=0
    #allocation3 [shape = 'u8[2048]{0}', space=vmem, size = 0x800, scoped, tag = 'input window, operand 1, single buffered']
    #allocation4 [shape = 's32[2]{0}', space=sflag, size = 0x8, scoped, tag = 'scoped memory for msn_forward.4']
    #allocation5 [shape = 'u8[512]{0}', space=vmem, size = 0x400, scoped, tag = 'input window, operand 2, single buffered']
    #allocation6 [shape = 's32[1]{0}', space=sflag, size = 0x4, scoped, tag = 'scoped memory for msn_forward.4']
    %8 = vsyncpa [#allocation4], 0
    %9 = vsyncpa [#allocation6], 0
    loop: start=0, step=1, limit=4
    $region2: #{msn_forward.4} parent=1 // loop_pre_header
      _
    $region3: #{msn_forward.4} parent=1 // loop_header
      %s11 = sphi 0, %s15
      %p12 = scmp.ge.s32.totalorder %s11, 4
      %s18 = sphi 0, %s30
      %s19 = sphi 0, %s26
      %s20 = sphi 0, %s18
      %s21 = sphi 0, %s19
      %s22 = sphi 0, %s20
      %s23 = sphi 0, %s21
      %s35 = sphi 0, %s37
      %s38 = sphi 0, %s35
      %s39 = sphi 0, %s38
      %s55 = sphi 0, %s39
      %s59 = sphi 0, %s59
      %s61 = sphi 0, %s59
      %s62 = sphi 0, %s61
      %s76 = sphi 0, %s62
      %s80 = sphi 0, %s80
      %s82 = sphi 0, %s80
      %s83 = sphi 0, %s82
      %s97 = sphi 0, %s83
      %s103 = sphi 0, %s105
      %s106 = sphi 0, %s103
      %s107 = sphi 0, %s106
      %s123 = sphi 0, %s107
    $region4: #{msn_forward.4} parent=1 // loop_header_branch
      %14 = sbr.rel (%p12) target = $region8
    $region5: #{msn_forward.4} parent=1 // loop_body
      %s16 = ssub.s32 %s11, 1
      %s17 = ssub.s32 %s11, 2
      %s24 = sadd.s32 1, %s19
      %p25 = scmp.ge.s32.totalorder %s24, 1
      %s26 = scalar_select %p25, 0, %s24
      %s27 = sadd.s32 1, %s18
      %s28 = scalar_select %p25, %s27, %s18
      %p29 = scmp.ge.s32.totalorder %s28, 2
      %s30 = scalar_select %p29, 0, %s28
      %s31 = ssub.s32 %s18, %s30
      %s32 = ssub.s32 %s19, %s26
      %s33 = sor.u32 %s31, %s32
      %p34 = scmp.eq.s32.totalorder %s33, 0
      %s36 = sadd.s32 %s35, 1
      %s37 = scalar_select %p34, %s35, %s36
      %p40 = pneg %p34
      %p41 = scmp.eq.s32.totalorder %s11, 1
      %p42 = por %p40, %p41
      %p43 = scmp.ne.s32.totalorder %s35, %s38
      %p44 = scmp.eq.s32.totalorder %s11, 0
      %p45 = por %p43, %p44
      %p46 = scmp.ne.s32.totalorder %s35, %s38
      %p47 = scmp.eq.s32.totalorder %s16, 1
      %p48 = por %p46, %p47
      %p49 = scmp.ne.s32.totalorder %s38, %s39
      %p50 = scmp.eq.s32.totalorder %s16, 0
      %p51 = por %p49, %p50
      %p52 = scmp.ne.s32.totalorder %s38, %s39
      %p53 = scmp.eq.s32.totalorder %s17, 1
      %p54 = por %p52, %p53
      %p56 = scmp.ne.s32.totalorder %s39, %s55
      %p57 = scmp.eq.s32.totalorder %s17, 0
      %p58 = por %p56, %p57
      %s60 = sadd.s32 %s59, 1
      %p63 = scmp.eq.s32.totalorder %s11, 1
      %p64 = scmp.ne.s32.totalorder %s59, %s61
      %p65 = scmp.eq.s32.totalorder %s11, 0
      %p66 = por %p64, %p65
      %p67 = scmp.ne.s32.totalorder %s59, %s61
      %p68 = scmp.eq.s32.totalorder %s16, 1
      %p69 = por %p67, %p68
      %p70 = scmp.ne.s32.totalorder %s61, %s62
      %p71 = scmp.eq.s32.totalorder %s16, 0
      %p72 = por %p70, %p71
      %p73 = scmp.ne.s32.totalorder %s61, %s62
      %p74 = scmp.eq.s32.totalorder %s17, 1
      %p75 = por %p73, %p74
      %p77 = scmp.ne.s32.totalorder %s62, %s76
      %p78 = scmp.eq.s32.totalorder %s17, 0
      %p79 = por %p77, %p78
      %s81 = sadd.s32 %s80, 1
      %p84 = scmp.eq.s32.totalorder %s11, 1
      %p85 = scmp.ne.s32.totalorder %s80, %s82
      %p86 = scmp.eq.s32.totalorder %s11, 0
      %p87 = por %p85, %p86
      %p88 = scmp.ne.s32.totalorder %s80, %s82
      %p89 = scmp.eq.s32.totalorder %s16, 1
      %p90 = por %p88, %p89
      %p91 = scmp.ne.s32.totalorder %s82, %s83
      %p92 = scmp.eq.s32.totalorder %s16, 0
      %p93 = por %p91, %p92
      %p94 = scmp.ne.s32.totalorder %s82, %s83
      %p95 = scmp.eq.s32.totalorder %s17, 1
      %p96 = por %p94, %p95
      %p98 = scmp.ne.s32.totalorder %s83, %s97
      %p99 = scmp.eq.s32.totalorder %s17, 0
      %p100 = por %p98, %p99
      %s101 = ssub.s32 %s18, %s30
      %p102 = scmp.eq.s32.totalorder %s101, 0
      %s104 = sadd.s32 %s103, 1
      %s105 = scalar_select %p102, %s103, %s104
      %p108 = pneg %p102
      %p109 = scmp.eq.s32.totalorder %s11, 1
      %p110 = por %p108, %p109
      %p111 = scmp.ne.s32.totalorder %s103, %s106
      %p112 = scmp.eq.s32.totalorder %s11, 0
      %p113 = por %p111, %p112
      %p114 = scmp.ne.s32.totalorder %s103, %s106
      %p115 = scmp.eq.s32.totalorder %s16, 1
      %p116 = por %p114, %p115
      %p117 = scmp.ne.s32.totalorder %s106, %s107
      %p118 = scmp.eq.s32.totalorder %s16, 0
      %p119 = por %p117, %p118
      %p120 = scmp.ne.s32.totalorder %s106, %s107
      %p121 = scmp.eq.s32.totalorder %s17, 1
      %p122 = por %p120, %p121
      %p124 = scmp.ne.s32.totalorder %s107, %s123
      %p125 = scmp.eq.s32.totalorder %s17, 0
      %p126 = por %p124, %p125
      %p127 = scmp.le.s32.totalorder 1, %s11
      %p128 = scmp.lt.s32.totalorder %s11, 3
      %p129 = pnand %p127, %p128
      %p130 = pneg %p129
      // Predicated region
      $region9: #{msn_forward.4} parent=5 // pred_check
        _
      $region10: #{msn_forward.4} parent=5 // pred_check_branch
        %132 = sbr.rel (%p129) target = $region12
      $region11: #{msn_forward.4} parent=5 // pred_region
        %s133 = ssub.s32 %s11, 1
        // Predicated region
        $region13: #{msn_forward.4} parent=11 // pred_check
          %p134 = pneg %p72
        $region14: #{msn_forward.4} parent=11 // pred_check_branch
          %136 = sbr.rel (%p134) target = $region16
        $region15: #{msn_forward.4} parent=11 // pred_region
          %s138 = ssub.s32 64, 64
          %139 = vsyncadd [#allocation4], %s138
          %s141 = sshll.u32 [#allocation3], 4
          %s142 = int_to_ptr.vmem [resolvable:$true] %s141
          %144 = dma.hbm_to_vmem [thread:$0]  %s1, 64, %s142, [#allocation4]
        $region16: #{msn_forward.4} parent=11 // pred_fallthru
          _
        // Predicated region
        $region17: #{msn_forward.4} parent=11 // pred_check
          %p145 = pneg %p93
        $region18: #{msn_forward.4} parent=11 // pred_check_branch
          %147 = sbr.rel (%p145) target = $region20
        $region19: #{msn_forward.4} parent=11 // pred_region
          %s149 = ssub.s32 16, 16
          %150 = vsyncadd [#allocation6], %s149
          %s152 = sshll.u32 [#allocation5], 4
          %s153 = int_to_ptr.vmem [resolvable:$true] %s152
          %155 = dma.hbm_to_vmem [thread:$0]  %s2, 16, %s153, [#allocation6]
        $region20: #{msn_forward.4} parent=11 // pred_fallthru
          _
      $region12: #{msn_forward.4} parent=5 // pred_fallthru
        _
      %p156 = scmp.lt.s32.totalorder %s11, 2
      // Predicated region
      $region21: #{msn_forward.4} parent=5 // pred_check
        %p157 = pneg %p156
      $region22: #{msn_forward.4} parent=5 // pred_check_branch
        %159 = sbr.rel (%p157) target = $region24
      $region23: #{msn_forward.4} parent=5 // pred_region
        // Predicated region
        $region25: #{msn_forward.4} parent=23 // pred_check
          %p160 = pneg %p45
        $region26: #{msn_forward.4} parent=23 // pred_check_branch
          %162 = sbr.rel (%p160) target = $region28
        $region27: #{msn_forward.4} parent=23 // pred_region
          %s163 = smul.u32 2, %s19
          %p164 = scmp.lt.s32.totalorder %s18, 1
          %s165 = scalar_select %p164, %s18, 1
          %p166 = scmp.lt.s32.totalorder %s163, 1
          %s167 = scalar_select %p166, %s163, 1
          %s168 = smul.addr %s165, 2
          %s169 = sadd.s32 %s167, %s168
          %s170 = smul.addr %s169, 8
          %s171 = scalar_lea.vmem %s0, %s170
          %s172 = smul.u32 2, %s19
        $region28: #{msn_forward.4} parent=23 // pred_fallthru
          _
      $region24: #{msn_forward.4} parent=5 // pred_fallthru
        _
      %p173 = scmp.le.s32.totalorder 1, %s11
      %p174 = scmp.lt.s32.totalorder %s11, 3
      %p175 = pnand %p173, %p174
      %p176 = pneg %p175
      // Predicated region
      $region29: #{msn_forward.4} parent=5 // pred_check
        _
      $region30: #{msn_forward.4} parent=5 // pred_check_branch
        %178 = sbr.rel (%p175) target = $region32
      $region31: #{msn_forward.4} parent=5 // pred_region
        %s179 = ssub.s32 %s11, 1
        // Predicated region
        $region33: #{msn_forward.4} parent=31 // pred_check
          %p180 = pneg %p72
        $region34: #{msn_forward.4} parent=31 // pred_check_branch
          %182 = sbr.rel (%p180) target = $region36
        $region35: #{msn_forward.4} parent=31 // pred_region
          %183 = dma.done [#allocation4], 64
        $region36: #{msn_forward.4} parent=31 // pred_fallthru
          _
        // Predicated region
        $region37: #{msn_forward.4} parent=31 // pred_check
          %p184 = pneg %p93
        $region38: #{msn_forward.4} parent=31 // pred_check_branch
          %186 = sbr.rel (%p184) target = $region40
        $region39: #{msn_forward.4} parent=31 // pred_region
          %187 = dma.done [#allocation6], 16
        $region40: #{msn_forward.4} parent=31 // pred_fallthru
          _
        %s188 = smul.u32 2, %s21
        %p189 = scmp.lt.s32.totalorder %s20, 1
        %s190 = scalar_select %p189, %s20, 1
        %p191 = scmp.lt.s32.totalorder %s188, 1
        %s192 = scalar_select %p191, %s188, 1
        %s193 = smul.addr %s190, 2
        %s194 = sadd.s32 %s192, %s193
        %s195 = smul.addr %s194, 8
        %s196 = scalar_lea.vmem %s0, %s195
        %p197 = pneg %p51
        %p198 = pneg %p48
        %p199 = pneg %p72
        %p200 = pneg %p69
        %p201 = pneg %p93
        %p202 = pneg %p90
        %p203 = pneg %p119
        %p204 = pneg %p116
        %p205 = scmp.lt.s32.totalorder %s20, 1
        %s206 = scalar_select %p205, %s20, 1
        %s207 = scalar_lea.vmem %s3, %s206
        %s208 = smul.u32 2, %s21
        %p209 = scmp.lt.s32.totalorder %s20, 1
        %s210 = scalar_select %p209, %s20, 1
        %p211 = scmp.lt.s32.totalorder %s208, 1
        %s212 = scalar_select %p211, %s208, 1
        %s213 = smul.addr %s210, 2
        %s214 = sadd.s32 %s212, %s213
        %s215 = smul.addr %s214, 8
        %s216 = scalar_lea.vmem %s0, %s215
        %s217 = smul.u32 2, %s21
        %p218 = scmp.lt.s32.totalorder %s20, 1
        %s219 = scalar_select %p218, %s20, 1
        %s220 = scalar_lea.vmem %s3, %s219
        %v221 = vld [vmem:[%s216] sm:$0xff]
        %v222 = vld [vmem:[%s216 + $0x8] sm:$0xff]
        %v223 = vld [vmem:[#allocation3] sm:$0x7]
        %v224 = vld [vmem:[#allocation5] sm:$0x1]
        %v226 = vlaneseq
        %v227 = vshrl.u32 %v226, 7
        %v228 = vsub.s32 0, %v227
        %v229 = vrot.slane %v224, %v228
        %vm231 = vcmask 23552
        %v233 = vsel %vm231, %v221, 0
        %v236 = vsel %vm231, %v222, 0
        %vm238 = vcmask 1042432
        %v240 = vsel %vm238, %v223, 0
        %242 = vmatprep.subr.mxu0 0.0
        %243 = vmatpush1.msra.mxu0 0.0
        %244 = vmatprep.subr.mxu0 0.0
        %245 = vmatpush1.msra.mxu0 0.0
        %246 = vmatprep.subr.mxu0 0.0
        %247 = vmatpush1.msra.mxu0 0.0
        %248 = vmatprep.subr.mxu0 0.0
        %249 = vmatpush1.msra.mxu0 0.0
        %250 = vmatprep.subr.mxu0 0.0
        %251 = vmatpush1.msra.mxu0 0.0
        %252 = vmatprep.subr.mxu0 0.0
        %253 = vmatpush1.msra.mxu0 0.0
        %254 = vmatprep.subr.mxu0 0.0
        %255 = vmatpush1.msra.mxu0 0.0
        %256 = vmatprep.subr.mxu0 0.0
        %257 = vmatpush1.msra.mxu0 0.0
        %258 = vmatprep.subr.mxu0 0.0
        %259 = vmatpush1.msra.mxu0 0.0
        %260 = vmatprep.subr.mxu0 0.0
        %261 = vmatpush1.msra.mxu0 0.0
        %262 = vmatprep.subr.mxu0 0.0
        %263 = vmatpush1.msra.mxu0 0.0
        %264 = vmatprep.subr.mxu0 0.0
        %265 = vmatpush1.msra.mxu0 0.0
        %266 = vmatprep.subr.mxu0 0.0
        %267 = vmatpush1.msra.mxu0 0.0
        %268 = vmatprep.subr.mxu0 0.0
        %269 = vmatpush1.msra.mxu0 0.0
        %270 = vmatprep.subr.mxu0 0.0
        %271 = vmatpush1.msra.mxu0 0.0
        %272 = vmatprep.subr.mxu0 0.0
        %273 = vmatpush1.msra.mxu0 %v240
        %274 = vmatprep.subr.mxu0 0.0
        %275 = vmatpush2.msra.mxu0 0.0
        %276 = vmatprep.subr.mxu0 0.0
        %277 = vmatpush2.msra.mxu0 0.0
        %278 = vmatprep.subr.mxu0 0.0
        %279 = vmatpush2.msra.mxu0 0.0
        %280 = vmatprep.subr.mxu0 0.0
        %281 = vmatpush2.msra.mxu0 0.0
        %282 = vmatprep.subr.mxu0 0.0
        %283 = vmatpush2.msra.mxu0 0.0
        %284 = vmatprep.subr.mxu0 0.0
        %285 = vmatpush2.msra.mxu0 0.0
        %286 = vmatprep.subr.mxu0 0.0
        %287 = vmatpush2.msra.mxu0 0.0
        %288 = vmatprep.subr.mxu0 0.0
        %289 = vmatpush2.msra.mxu0 0.0
        %290 = vmatprep.subr.mxu0 0.0
        %291 = vmatpush2.msra.mxu0 0.0
        %292 = vmatprep.subr.mxu0 0.0
        %293 = vmatpush2.msra.mxu0 0.0
        %294 = vmatprep.subr.mxu0 0.0
        %295 = vmatpush2.msra.mxu0 0.0
        %296 = vmatprep.subr.mxu0 0.0
        %297 = vmatpush2.msra.mxu0 0.0
        %298 = vmatprep.subr.mxu0 0.0
        %299 = vmatpush2.msra.mxu0 0.0
        %300 = vmatprep.subr.mxu0 0.0
        %301 = vmatpush2.msra.mxu0 0.0
        %302 = vmatprep.subr.mxu0 0.0
        %303 = vmatpush2.msra.mxu0 0.0
        %304 = vmatprep.subr.mxu0 0.0
        %305 = vmatpush2.msra.mxu0 0.0
        %306 = vmatprep.mubr.f32.mxu0 0.0
        %307 = vmatmul.mubr.f32.gmra.mxu0 %v233
        %v308 = vpop.f32.mrf.mxu0
        %v309 = vadd.f32 %v229, %v308
        %v310 = vpop.f32.mrf.mxu0
        %311 = vmatprep.mubr.f32.mxu0 0.0
        %312 = vmatmul.mubr.f32.gmra.mxu0 %v236
        %v313 = vpop.f32.mrf.mxu0
        %v314 = vadd.f32 %v229, %v313
        %v315 = vpop.f32.mrf.mxu0
        %316 = vdwg.mxu0
        %v317 = vmax.f32 %v309, 0.0
        %v318 = vmax.f32 %v314, 0.0
        %p319 = scmp.eq.s32.totalorder %s21, 0
        // Predicated region
        $region41: #{msn_forward.4} parent=31 // pred_check
          %p320 = pneg %p319
        $region42: #{msn_forward.4} parent=31 // pred_check_branch
          %322 = sbr.rel (%p320) target = $region44
        $region43: #{msn_forward.4} parent=31 // pred_region
          %vm323 = vcmask 253952
          %324 = vst.msk [vmem:[#allocation2] sm:$0x1] %vm323, -inf
        $region44: #{msn_forward.4} parent=31 // pred_fallthru
          _
        %v325 = vld [vmem:[#allocation2] sm:$0x1]
        %vm326 = vcmask 261120
        %v327 = vsel %vm326, %v317, -inf
        %v328 = vsel %vm326, %v318, -inf
        %v329 = vmax.f32 %v327, %v328
        %v330 = vrot.slane %v329, 4
        %v331 = vmax.f32 %v329, %v330
        %v332 = vrot.slane %v331, 2
        %v333 = vmax.f32 %v331, %v332
        %v334 = vrot.slane %v333, 1
        %v335 = vmax.f32 %v333, %v334
        %v336 = vmax.f32 %v325, %v335
        %vm337 = vcmask 253952
        %338 = vst.msk [vmem:[#allocation2] sm:$0x1] %vm337, %v336
        // Predicated region
        $region45: #{msn_forward.4} parent=31 // pred_check
          %p339 = pneg %p319
        $region46: #{msn_forward.4} parent=31 // pred_check_branch
          %341 = sbr.rel (%p339) target = $region48
        $region47: #{msn_forward.4} parent=31 // pred_region
          %v342 = vld [vmem:[#allocation2] sm:$0x1]
          %343 = vst.msk [vmem:[%s220] sm:$0x1] %vm337, %v342
        $region48: #{msn_forward.4} parent=31 // pred_fallthru
          _
        %p344 = scmp.lt.s32.totalorder %s20, 1
        %s345 = scalar_select %p344, %s20, 1
        %s346 = scalar_lea.vmem %s3, %s345
        // Predicated region
        $region49: #{msn_forward.4} parent=31 // pred_check
          %p347 = pneg %p116
        $region50: #{msn_forward.4} parent=31 // pred_check_branch
          %349 = sbr.rel (%p347) target = $region52
        $region51: #{msn_forward.4} parent=31 // pred_region
          _
        $region52: #{msn_forward.4} parent=31 // pred_fallthru
          _
      $region32: #{msn_forward.4} parent=5 // pred_fallthru
        _
      %p350 = scmp.le.s32.totalorder 2, %s11
      // Predicated region
      $region53: #{msn_forward.4} parent=5 // pred_check
        %p351 = pneg %p350
      $region54: #{msn_forward.4} parent=5 // pred_check_branch
        %353 = sbr.rel (%p351) target = $region56
      $region55: #{msn_forward.4} parent=5 // pred_region
        %s354 = ssub.s32 %s11, 2
        // Predicated region
        $region57: #{msn_forward.4} parent=55 // pred_check
          %p355 = pneg %p122
        $region58: #{msn_forward.4} parent=55 // pred_check_branch
          %357 = sbr.rel (%p355) target = $region60
        $region59: #{msn_forward.4} parent=55 // pred_region
          %p358 = scmp.lt.s32.totalorder %s22, 1
          %s359 = scalar_select %p358, %s22, 1
          %s360 = scalar_lea.vmem %s3, %s359
        $region60: #{msn_forward.4} parent=55 // pred_fallthru
          _
      $region56: #{msn_forward.4} parent=5 // pred_fallthru
        _
    $region6: #{msn_forward.4} parent=1 // loop_footer
      %s15 = sadd.s32 1, %s11
    $region7: #{msn_forward.4} parent=1 // loop_footer_branch
      %10 = sbr.rel target = $region3
    $region8: #{msn_forward.4} parent=1 // loop_exit
      _
    %361 = vsyncpa [#allocation4], 1
    %s362 = scalar_lea.sflag [#allocation4], 1
    %363 = vsyncpa %s362, 1
    %364 = vsyncpa [#allocation6], 1

// kernel: msn_forward.5
$region0: #{msn_forward.5}
  #allocation0 [shape = 'u32[]', space=smem, size = 0x4, offset = 0x4, fixed_abs, tag = 'smem constant byte address 0x4 - core index']
  #allocation1 [shape = 'u32[144,128]{1,0:T(1,128)}', space=vmem, size = 0x12000, scoped, tag = 'internal scratch']
  %s0 = inlined_call_operand.vmem [shape: f32[4,2,8,2], index: 0, kind: input, shape index: {}]
  %s1 = inlined_call_operand.vmem [shape: f32[4,2,1,34], index: 1, kind: input, shape index: {}]
  %s2 = inlined_call_operand.hbm [shape: f32[4,2,34], index: 2, kind: input, shape index: {}]
  %s3 = inlined_call_operand.vmem [shape: f32[4,34,17], index: 3, kind: input, shape index: {}]
  %s4 = inlined_call_operand.hbm [shape: f32[4,1,17], index: 4, kind: input, shape index: {}]
  %s5 = inlined_call_operand.vmem [shape: f32[4,17,8], index: 5, kind: input, shape index: {}]
  %s6 = inlined_call_operand.hbm [shape: f32[4,1,8], index: 6, kind: input, shape index: {}]
  %s7 = inlined_call_operand.vmem [shape: f32[4,8,3], index: 7, kind: input, shape index: {}]
  %s8 = inlined_call_operand.vmem [shape: f32[4,1,3], index: 8, kind: input, shape index: {}]
  %s9 = inlined_call_operand.vmem [shape: f32[4,2,8,3], index: 9, kind: output, shape index: {}]
  %s10 = sld [smem:[#allocation0]]
  $region81: #{msn_forward.5} parent=0
    _
  %s12 = ssub.s32 1, %s10
  %s13 = scalar_select 0, %s12, %s10
  $region1: #{msn_forward.5} parent=0
    #allocation2 [shape = 'u8[2048]{0}', space=vmem, size = 0x800, scoped, tag = 'input window, operand 2']
    #allocation3 [shape = 's32[2]{0}', space=sflag, size = 0x8, scoped, tag = 'scoped memory for msn_forward.5']
    #allocation4 [shape = 'u8[1024]{0}', space=vmem, size = 0x400, scoped, tag = 'input window, operand 4']
    #allocation5 [shape = 's32[2]{0}', space=sflag, size = 0x8, scoped, tag = 'scoped memory for msn_forward.5']
    #allocation6 [shape = 'u8[1024]{0}', space=vmem, size = 0x400, scoped, tag = 'input window, operand 6']
    %14 = vsyncpa [#allocation3], 0
    %s15 = scalar_lea.sflag [#allocation3], 1
    %16 = vsyncpa %s15, 0
    %17 = vsyncpa [#allocation5], 0
    %s18 = scalar_lea.sflag [#allocation5], 1
    %19 = vsyncpa %s18, 0
    loop: start=0, step=1, limit=10
    $region2: #{msn_forward.5} parent=1 // loop_pre_header
      _
    $region3: #{msn_forward.5} parent=1 // loop_header
      %s21 = sphi 0, %s25
      %p22 = scmp.ge.s32.totalorder %s21, 10
      %s28 = sphi 0, %s47
      %s29 = sphi 0, %s43
      %s30 = sphi 0, %s39
      %s31 = sphi 0, %s28
      %s32 = sphi 0, %s29
      %s33 = sphi 0, %s30
      %s34 = sphi 0, %s31
      %s35 = sphi 0, %s32
      %s36 = sphi 0, %s33
      %s54 = sphi 0, %s56
      %s57 = sphi 0, %s54
      %s58 = sphi 0, %s57
      %s74 = sphi 0, %s58
      %s82 = sphi 0, %s84
      %s85 = sphi 0, %s82
      %s86 = sphi 0, %s85
      %s102 = sphi 0, %s86
      %s108 = sphi 0, %s110
      %s111 = sphi 0, %s108
      %s112 = sphi 0, %s111
      %s128 = sphi 0, %s112
      %s134 = sphi 0, %s136
      %s137 = sphi 0, %s134
      %s138 = sphi 0, %s137
      %s154 = sphi 0, %s138
      %s160 = sphi 0, %s162
      %s163 = sphi 0, %s160
      %s164 = sphi 0, %s163
      %s180 = sphi 0, %s164
      %s186 = sphi 0, %s188
      %s189 = sphi 0, %s186
      %s190 = sphi 0, %s189
      %s206 = sphi 0, %s190
      %s212 = sphi 0, %s214
      %s215 = sphi 0, %s212
      %s216 = sphi 0, %s215
      %s232 = sphi 0, %s216
      %s238 = sphi 0, %s240
      %s241 = sphi 0, %s238
      %s242 = sphi 0, %s241
      %s258 = sphi 0, %s242
      %s264 = sphi 0, %s266
      %s267 = sphi 0, %s264
      %s268 = sphi 0, %s267
      %s284 = sphi 0, %s268
      %s294 = sphi 0, %s296
      %s297 = sphi 0, %s294
      %s298 = sphi 0, %s297
      %s314 = sphi 0, %s298
    $region4: #{msn_forward.5} parent=1 // loop_header_branch
      %24 = sbr.rel (%p22) target = $region8
    $region5: #{msn_forward.5} parent=1 // loop_body
      %s26 = ssub.s32 %s21, 1
      %s27 = ssub.s32 %s21, 2
      %s37 = sadd.s32 1, %s30
      %p38 = scmp.ge.s32.totalorder %s37, 1
      %s39 = scalar_select %p38, 0, %s37
      %s40 = sadd.s32 1, %s29
      %s41 = scalar_select %p38, %s40, %s29
      %p42 = scmp.ge.s32.totalorder %s41, 2
      %s43 = scalar_select %p42, 0, %s41
      %s44 = sadd.s32 1, %s28
      %s45 = scalar_select %p42, %s44, %s28
      %p46 = scmp.ge.s32.totalorder %s45, 4
      %s47 = scalar_select %p46, 0, %s45
      %s48 = ssub.s32 %s28, %s47
      %s49 = ssub.s32 %s29, %s43
      %s50 = sor.u32 %s48, %s49
      %s51 = ssub.s32 %s30, %s39
      %s52 = sor.u32 %s50, %s51
      %p53 = scmp.eq.s32.totalorder %s52, 0
      %s55 = sadd.s32 %s54, 1
      %s56 = scalar_select %p53, %s54, %s55
      %p59 = pneg %p53
      %p60 = scmp.eq.s32.totalorder %s21, 7
      %p61 = por %p59, %p60
      %p62 = scmp.ne.s32.totalorder %s54, %s57
      %p63 = scmp.eq.s32.totalorder %s21, 0
      %p64 = por %p62, %p63
      %p65 = scmp.ne.s32.totalorder %s54, %s57
      %p66 = scmp.eq.s32.totalorder %s26, 7
      %p67 = por %p65, %p66
      %p68 = scmp.ne.s32.totalorder %s57, %s58
      %p69 = scmp.eq.s32.totalorder %s26, 0
      %p70 = por %p68, %p69
      %p71 = scmp.ne.s32.totalorder %s57, %s58
      %p72 = scmp.eq.s32.totalorder %s27, 7
      %p73 = por %p71, %p72
      %p75 = scmp.ne.s32.totalorder %s58, %s74
      %p76 = scmp.eq.s32.totalorder %s27, 0
      %p77 = por %p75, %p76
      %s78 = ssub.s32 %s28, %s47
      %s79 = ssub.s32 %s29, %s43
      %s80 = sor.u32 %s78, %s79
      %p81 = scmp.eq.s32.totalorder %s80, 0
      %s83 = sadd.s32 %s82, 1
      %s84 = scalar_select %p81, %s82, %s83
      %p87 = pneg %p81
      %p88 = scmp.eq.s32.totalorder %s21, 7
      %p89 = por %p87, %p88
      %p90 = scmp.ne.s32.totalorder %s82, %s85
      %p91 = scmp.eq.s32.totalorder %s21, 0
      %p92 = por %p90, %p91
      %p93 = scmp.ne.s32.totalorder %s82, %s85
      %p94 = scmp.eq.s32.totalorder %s26, 7
      %p95 = por %p93, %p94
      %p96 = scmp.ne.s32.totalorder %s85, %s86
      %p97 = scmp.eq.s32.totalorder %s26, 0
      %p98 = por %p96, %p97
      %p99 = scmp.ne.s32.totalorder %s85, %s86
      %p100 = scmp.eq.s32.totalorder %s27, 7
      %p101 = por %p99, %p100
      %p103 = scmp.ne.s32.totalorder %s86, %s102
      %p104 = scmp.eq.s32.totalorder %s27, 0
      %p105 = por %p103, %p104
      %s106 = ssub.s32 %s28, %s47
      %p107 = scmp.eq.s32.totalorder %s106, 0
      %s109 = sadd.s32 %s108, 1
      %s110 = scalar_select %p107, %s108, %s109
      %p113 = pneg %p107
      %p114 = scmp.eq.s32.totalorder %s21, 7
      %p115 = por %p113, %p114
      %p116 = scmp.ne.s32.totalorder %s108, %s111
      %p117 = scmp.eq.s32.totalorder %s21, 0
      %p118 = por %p116, %p117
      %p119 = scmp.ne.s32.totalorder %s108, %s111
      %p120 = scmp.eq.s32.totalorder %s26, 7
      %p121 = por %p119, %p120
      %p122 = scmp.ne.s32.totalorder %s111, %s112
      %p123 = scmp.eq.s32.totalorder %s26, 0
      %p124 = por %p122, %p123
      %p125 = scmp.ne.s32.totalorder %s111, %s112
      %p126 = scmp.eq.s32.totalorder %s27, 7
      %p127 = por %p125, %p126
      %p129 = scmp.ne.s32.totalorder %s112, %s128
      %p130 = scmp.eq.s32.totalorder %s27, 0
      %p131 = por %p129, %p130
      %s132 = ssub.s32 %s28, %s47
      %p133 = scmp.eq.s32.totalorder %s132, 0
      %s135 = sadd.s32 %s134, 1
      %s136 = scalar_select %p133, %s134, %s135
      %p139 = pneg %p133
      %p140 = scmp.eq.s32.totalorder %s21, 7
      %p141 = por %p139, %p140
      %p142 = scmp.ne.s32.totalorder %s134, %s137
      %p143 = scmp.eq.s32.totalorder %s21, 0
      %p144 = por %p142, %p143
      %p145 = scmp.ne.s32.totalorder %s134, %s137
      %p146 = scmp.eq.s32.totalorder %s26, 7
      %p147 = por %p145, %p146
      %p148 = scmp.ne.s32.totalorder %s137, %s138
      %p149 = scmp.eq.s32.totalorder %s26, 0
      %p150 = por %p148, %p149
      %p151 = scmp.ne.s32.totalorder %s137, %s138
      %p152 = scmp.eq.s32.totalorder %s27, 7
      %p153 = por %p151, %p152
      %p155 = scmp.ne.s32.totalorder %s138, %s154
      %p156 = scmp.eq.s32.totalorder %s27, 0
      %p157 = por %p155, %p156
      %s158 = ssub.s32 %s28, %s47
      %p159 = scmp.eq.s32.totalorder %s158, 0
      %s161 = sadd.s32 %s160, 1
      %s162 = scalar_select %p159, %s160, %s161
      %p165 = pneg %p159
      %p166 = scmp.eq.s32.totalorder %s21, 7
      %p167 = por %p165, %p166
      %p168 = scmp.ne.s32.totalorder %s160, %s163
      %p169 = scmp.eq.s32.totalorder %s21, 0
      %p170 = por %p168, %p169
      %p171 = scmp.ne.s32.totalorder %s160, %s163
      %p172 = scmp.eq.s32.totalorder %s26, 7
      %p173 = por %p171, %p172
      %p174 = scmp.ne.s32.totalorder %s163, %s164
      %p175 = scmp.eq.s32.totalorder %s26, 0
      %p176 = por %p174, %p175
      %p177 = scmp.ne.s32.totalorder %s163, %s164
      %p178 = scmp.eq.s32.totalorder %s27, 7
      %p179 = por %p177, %p178
      %p181 = scmp.ne.s32.totalorder %s164, %s180
      %p182 = scmp.eq.s32.totalorder %s27, 0
      %p183 = por %p181, %p182
      %s184 = ssub.s32 %s28, %s47
      %p185 = scmp.eq.s32.totalorder %s184, 0
      %s187 = sadd.s32 %s186, 1
      %s188 = scalar_select %p185, %s186, %s187
      %p191 = pneg %p185
      %p192 = scmp.eq.s32.totalorder %s21, 7
      %p193 = por %p191, %p192
      %p194 = scmp.ne.s32.totalorder %s186, %s189
      %p195 = scmp.eq.s32.totalorder %s21, 0
      %p196 = por %p194, %p195
      %p197 = scmp.ne.s32.totalorder %s186, %s189
      %p198 = scmp.eq.s32.totalorder %s26, 7
      %p199 = por %p197, %p198
      %p200 = scmp.ne.s32.totalorder %s189, %s190
      %p201 = scmp.eq.s32.totalorder %s26, 0
      %p202 = por %p200, %p201
      %p203 = scmp.ne.s32.totalorder %s189, %s190
      %p204 = scmp.eq.s32.totalorder %s27, 7
      %p205 = por %p203, %p204
      %p207 = scmp.ne.s32.totalorder %s190, %s206
      %p208 = scmp.eq.s32.totalorder %s27, 0
      %p209 = por %p207, %p208
      %s210 = ssub.s32 %s28, %s47
      %p211 = scmp.eq.s32.totalorder %s210, 0
      %s213 = sadd.s32 %s212, 1
      %s214 = scalar_select %p211, %s212, %s213
      %p217 = pneg %p211
      %p218 = scmp.eq.s32.totalorder %s21, 7
      %p219 = por %p217, %p218
      %p220 = scmp.ne.s32.totalorder %s212, %s215
      %p221 = scmp.eq.s32.totalorder %s21, 0
      %p222 = por %p220, %p221
      %p223 = scmp.ne.s32.totalorder %s212, %s215
      %p224 = scmp.eq.s32.totalorder %s26, 7
      %p225 = por %p223, %p224
      %p226 = scmp.ne.s32.totalorder %s215, %s216
      %p227 = scmp.eq.s32.totalorder %s26, 0
      %p228 = por %p226, %p227
      %p229 = scmp.ne.s32.totalorder %s215, %s216
      %p230 = scmp.eq.s32.totalorder %s27, 7
      %p231 = por %p229, %p230
      %p233 = scmp.ne.s32.totalorder %s216, %s232
      %p234 = scmp.eq.s32.totalorder %s27, 0
      %p235 = por %p233, %p234
      %s236 = ssub.s32 %s28, %s47
      %p237 = scmp.eq.s32.totalorder %s236, 0
      %s239 = sadd.s32 %s238, 1
      %s240 = scalar_select %p237, %s238, %s239
      %p243 = pneg %p237
      %p244 = scmp.eq.s32.totalorder %s21, 7
      %p245 = por %p243, %p244
      %p246 = scmp.ne.s32.totalorder %s238, %s241
      %p247 = scmp.eq.s32.totalorder %s21, 0
      %p248 = por %p246, %p247
      %p249 = scmp.ne.s32.totalorder %s238, %s241
      %p250 = scmp.eq.s32.totalorder %s26, 7
      %p251 = por %p249, %p250
      %p252 = scmp.ne.s32.totalorder %s241, %s242
      %p253 = scmp.eq.s32.totalorder %s26, 0
      %p254 = por %p252, %p253
      %p255 = scmp.ne.s32.totalorder %s241, %s242
      %p256 = scmp.eq.s32.totalorder %s27, 7
      %p257 = por %p255, %p256
      %p259 = scmp.ne.s32.totalorder %s242, %s258
      %p260 = scmp.eq.s32.totalorder %s27, 0
      %p261 = por %p259, %p260
      %s262 = ssub.s32 %s28, %s47
      %p263 = scmp.eq.s32.totalorder %s262, 0
      %s265 = sadd.s32 %s264, 1
      %s266 = scalar_select %p263, %s264, %s265
      %p269 = pneg %p263
      %p270 = scmp.eq.s32.totalorder %s21, 7
      %p271 = por %p269, %p270
      %p272 = scmp.ne.s32.totalorder %s264, %s267
      %p273 = scmp.eq.s32.totalorder %s21, 0
      %p274 = por %p272, %p273
      %p275 = scmp.ne.s32.totalorder %s264, %s267
      %p276 = scmp.eq.s32.totalorder %s26, 7
      %p277 = por %p275, %p276
      %p278 = scmp.ne.s32.totalorder %s267, %s268
      %p279 = scmp.eq.s32.totalorder %s26, 0
      %p280 = por %p278, %p279
      %p281 = scmp.ne.s32.totalorder %s267, %s268
      %p282 = scmp.eq.s32.totalorder %s27, 7
      %p283 = por %p281, %p282
      %p285 = scmp.ne.s32.totalorder %s268, %s284
      %p286 = scmp.eq.s32.totalorder %s27, 0
      %p287 = por %p285, %p286
      %s288 = ssub.s32 %s28, %s47
      %s289 = ssub.s32 %s29, %s43
      %s290 = sor.u32 %s288, %s289
      %s291 = ssub.s32 %s30, %s39
      %s292 = sor.u32 %s290, %s291
      %p293 = scmp.eq.s32.totalorder %s292, 0
      %s295 = sadd.s32 %s294, 1
      %s296 = scalar_select %p293, %s294, %s295
      %p299 = pneg %p293
      %p300 = scmp.eq.s32.totalorder %s21, 7
      %p301 = por %p299, %p300
      %p302 = scmp.ne.s32.totalorder %s294, %s297
      %p303 = scmp.eq.s32.totalorder %s21, 0
      %p304 = por %p302, %p303
      %p305 = scmp.ne.s32.totalorder %s294, %s297
      %p306 = scmp.eq.s32.totalorder %s26, 7
      %p307 = por %p305, %p306
      %p308 = scmp.ne.s32.totalorder %s297, %s298
      %p309 = scmp.eq.s32.totalorder %s26, 0
      %p310 = por %p308, %p309
      %p311 = scmp.ne.s32.totalorder %s297, %s298
      %p312 = scmp.eq.s32.totalorder %s27, 7
      %p313 = por %p311, %p312
      %p315 = scmp.ne.s32.totalorder %s298, %s314
      %p316 = scmp.eq.s32.totalorder %s27, 0
      %p317 = por %p315, %p316
      %p318 = scmp.le.s32.totalorder 1, %s21
      %p319 = scmp.lt.s32.totalorder %s21, 9
      %p320 = pnand %p318, %p319
      %p321 = pneg %p320
      // Predicated region
      $region9: #{msn_forward.5} parent=5 // pred_check
        _
      $region10: #{msn_forward.5} parent=5 // pred_check_branch
        %323 = sbr.rel (%p320) target = $region12
      $region11: #{msn_forward.5} parent=5 // pred_region
        %s324 = ssub.s32 %s21, 1
      $region12: #{msn_forward.5} parent=5 // pred_fallthru
        _
      %p325 = scmp.lt.s32.totalorder %s21, 8
      // Predicated region
      $region13: #{msn_forward.5} parent=5 // pred_check
        %p326 = pneg %p325
      $region14: #{msn_forward.5} parent=5 // pred_check_branch
        %328 = sbr.rel (%p326) target = $region16
      $region15: #{msn_forward.5} parent=5 // pred_region
        // Predicated region
        $region17: #{msn_forward.5} parent=15 // pred_check
          %p329 = pneg %p64
        $region18: #{msn_forward.5} parent=15 // pred_check_branch
          %331 = sbr.rel (%p329) target = $region20
        $region19: #{msn_forward.5} parent=15 // pred_region
          %p332 = scmp.lt.s32.totalorder %s28, 3
          %s333 = scalar_select %p332, %s28, 3
          %p334 = scmp.lt.s32.totalorder %s29, 1
          %s335 = scalar_select %p334, %s29, 1
          %p336 = scmp.lt.s32.totalorder %s30, 0
          %s337 = scalar_select %p336, %s30, 0
          %s338 = sadd.s32 %s337, %s335
          %s339 = smul.addr %s333, 2
          %s340 = sadd.s32 %s338, %s339
          %s341 = smul.addr %s340, 8
          %s342 = scalar_lea.vmem %s0, %s341
        $region20: #{msn_forward.5} parent=15 // pred_fallthru
          _
        // Predicated region
        $region21: #{msn_forward.5} parent=15 // pred_check
          %p343 = pneg %p92
        $region22: #{msn_forward.5} parent=15 // pred_check_branch
          %345 = sbr.rel (%p343) target = $region24
        $region23: #{msn_forward.5} parent=15 // pred_region
          %p346 = scmp.lt.s32.totalorder %s28, 3
          %s347 = scalar_select %p346, %s28, 3
          %p348 = scmp.lt.s32.totalorder %s29, 1
          %s349 = scalar_select %p348, %s29, 1
          %s350 = smul.addr %s347, 2
          %s351 = sadd.s32 %s349, %s350
          %s352 = scalar_lea.vmem %s1, %s351
        $region24: #{msn_forward.5} parent=15 // pred_fallthru
          _
        // Predicated region
        $region25: #{msn_forward.5} parent=15 // pred_check
          %p353 = pneg %p118
        $region26: #{msn_forward.5} parent=15 // pred_check_branch
          %355 = sbr.rel (%p353) target = $region28
        $region27: #{msn_forward.5} parent=15 // pred_region
          %s356 = sand.u32 %s108, 1
          %s357 = scalar_lea.sflag [#allocation3], %s356
          %s358 = sand.u32 %s108, 1
          %s359 = smul.addr %s358, 2
          %s360 = scalar_lea.vmem [#allocation2], %s359
          %s362 = ssub.s32 32, 32
          %363 = vsyncadd %s357, %s362
          %s364 = smul.addr %s28, 32
          %s365 = scalar_lea.hbm %s2, %s364
          %s367 = sshll.u32 %s360, 4
          %s368 = int_to_ptr.vmem [resolvable:$true] %s367
          %370 = dma.hbm_to_vmem [thread:$0]  %s365, 32, %s368, %s357
        $region28: #{msn_forward.5} parent=15 // pred_fallthru
          _
        // Predicated region
        $region29: #{msn_forward.5} parent=15 // pred_check
          %p371 = pneg %p144
        $region30: #{msn_forward.5} parent=15 // pred_check_branch
          %373 = sbr.rel (%p371) target = $region32
        $region31: #{msn_forward.5} parent=15 // pred_region
          %p374 = scmp.lt.s32.totalorder %s28, 3
          %s375 = scalar_select %p374, %s28, 3
          %s376 = smul.addr %s375, 5
          %s377 = smul.addr %s376, 8
          %s378 = scalar_lea.vmem %s3, %s377
        $region32: #{msn_forward.5} parent=15 // pred_fallthru
          _
        // Predicated region
        $region33: #{msn_forward.5} parent=15 // pred_check
          %p379 = pneg %p170
        $region34: #{msn_forward.5} parent=15 // pred_check_branch
          %381 = sbr.rel (%p379) target = $region36
        $region35: #{msn_forward.5} parent=15 // pred_region
          %s382 = sand.u32 %s21, 1
          %s383 = scalar_lea.sflag [#allocation5], %s382
          %s384 = sand.u32 %s160, 1
          %s385 = scalar_lea.vmem [#allocation4], %s384
          %s387 = ssub.s32 16, 16
          %388 = vsyncadd %s383, %s387
          %s389 = smul.addr %s28, 16
          %s390 = scalar_lea.hbm %s4, %s389
          %s392 = sshll.u32 %s385, 4
          %s393 = int_to_ptr.vmem [resolvable:$true] %s392
          %395 = dma.hbm_to_vmem [thread:$0]  %s390, 16, %s393, %s383
        $region36: #{msn_forward.5} parent=15 // pred_fallthru
          _
        // Predicated region
        $region37: #{msn_forward.5} parent=15 // pred_check
          %p396 = pneg %p196
        $region38: #{msn_forward.5} parent=15 // pred_check_branch
          %398 = sbr.rel (%p396) target = $region40
        $region39: #{msn_forward.5} parent=15 // pred_region
          %p399 = scmp.lt.s32.totalorder %s28, 3
          %s400 = scalar_select %p399, %s28, 3
          %s401 = smul.addr %s400, 3
          %s402 = smul.addr %s401, 8
          %s403 = scalar_lea.vmem %s5, %s402
        $region40: #{msn_forward.5} parent=15 // pred_fallthru
          _
        // Predicated region
        $region41: #{msn_forward.5} parent=15 // pred_check
          %p404 = pneg %p222
        $region42: #{msn_forward.5} parent=15 // pred_check_branch
          %406 = sbr.rel (%p404) target = $region44
        $region43: #{msn_forward.5} parent=15 // pred_region
          %s407 = sand.u32 %s21, 1
          %s408 = scalar_lea.sflag [#allocation5], %s407
          %s409 = sand.u32 %s212, 1
          %s410 = scalar_lea.vmem [#allocation6], %s409
          %s412 = ssub.s32 16, 16
          %413 = vsyncadd %s408, %s412
          %s414 = smul.addr %s28, 16
          %s415 = scalar_lea.hbm %s6, %s414
          %s417 = sshll.u32 %s410, 4
          %s418 = int_to_ptr.vmem [resolvable:$true] %s417
          %420 = dma.hbm_to_vmem [thread:$0]  %s415, 16, %s418, %s408
        $region44: #{msn_forward.5} parent=15 // pred_fallthru
          _
        // Predicated region
        $region45: #{msn_forward.5} parent=15 // pred_check
          %p421 = pneg %p248
        $region46: #{msn_forward.5} parent=15 // pred_check_branch
          %423 = sbr.rel (%p421) target = $region48
        $region47: #{msn_forward.5} parent=15 // pred_region
          %p424 = scmp.lt.s32.totalorder %s28, 3
          %s425 = scalar_select %p424, %s28, 3
          %s426 = smul.addr %s425, 8
          %s427 = scalar_lea.vmem %s7, %s426
        $region48: #{msn_forward.5} parent=15 // pred_fallthru
          _
        // Predicated region
        $region49: #{msn_forward.5} parent=15 // pred_check
          %p428 = pneg %p274
        $region50: #{msn_forward.5} parent=15 // pred_check_branch
          %430 = sbr.rel (%p428) target = $region52
        $region51: #{msn_forward.5} parent=15 // pred_region
          %p431 = scmp.lt.s32.totalorder %s28, 3
          %s432 = scalar_select %p431, %s28, 3
          %s433 = scalar_lea.vmem %s8, %s432
        $region52: #{msn_forward.5} parent=15 // pred_fallthru
          _
      $region16: #{msn_forward.5} parent=5 // pred_fallthru
        _
      %p434 = scmp.le.s32.totalorder 1, %s21
      %p435 = scmp.lt.s32.totalorder %s21, 9
      %p436 = pnand %p434, %p435
      %p437 = pneg %p436
      // Predicated region
      $region53: #{msn_forward.5} parent=5 // pred_check
        _
      $region54: #{msn_forward.5} parent=5 // pred_check_branch
        %439 = sbr.rel (%p436) target = $region56
      $region55: #{msn_forward.5} parent=5 // pred_region
        %s440 = ssub.s32 %s21, 1
        %s441 = sand.u32 %s111, 1
        %s442 = scalar_lea.sflag [#allocation3], %s441
        %s443 = sand.u32 %s111, 1
        %s444 = smul.addr %s443, 2
        %s445 = scalar_lea.vmem [#allocation2], %s444
        // Predicated region
        $region57: #{msn_forward.5} parent=55 // pred_check
          %p446 = pneg %p124
        $region58: #{msn_forward.5} parent=55 // pred_check_branch
          %448 = sbr.rel (%p446) target = $region60
        $region59: #{msn_forward.5} parent=55 // pred_region
          %449 = dma.done %s442, 32
        $region60: #{msn_forward.5} parent=55 // pred_fallthru
          _
        %s450 = sand.u32 %s26, 1
        %s451 = scalar_lea.sflag [#allocation5], %s450
        %s452 = sand.u32 %s163, 1
        %s453 = scalar_lea.vmem [#allocation4], %s452
        // Predicated region
        $region61: #{msn_forward.5} parent=55 // pred_check
          %p454 = pneg %p176
        $region62: #{msn_forward.5} parent=55 // pred_check_branch
          %456 = sbr.rel (%p454) target = $region64
        $region63: #{msn_forward.5} parent=55 // pred_region
          %457 = dma.done %s451, 16
        $region64: #{msn_forward.5} parent=55 // pred_fallthru
          _
        %s458 = sand.u32 %s26, 1
        %s459 = scalar_lea.sflag [#allocation5], %s458
        %s460 = sand.u32 %s215, 1
        %s461 = scalar_lea.vmem [#allocation6], %s460
        // Predicated region
        $region65: #{msn_forward.5} parent=55 // pred_check
          %p462 = pneg %p228
        $region66: #{msn_forward.5} parent=55 // pred_check_branch
          %464 = sbr.rel (%p462) target = $region68
        $region67: #{msn_forward.5} parent=55 // pred_region
          %465 = dma.done %s459, 16
        $region68: #{msn_forward.5} parent=55 // pred_fallthru
          _
        %p466 = scmp.lt.s32.totalorder %s31, 3
        %s467 = scalar_select %p466, %s31, 3
        %p468 = scmp.lt.s32.totalorder %s32, 1
        %s469 = scalar_select %p468, %s32, 1
        %p470 = scmp.lt.s32.totalorder %s33, 0
        %s471 = scalar_select %p470, %s33, 0
        %s472 = sadd.s32 %s471, %s469
        %s473 = smul.addr %s467, 2
        %s474 = sadd.s32 %s472, %s473
        %s475 = smul.addr %s474, 8
        %s476 = scalar_lea.vmem %s0, %s475
        %p477 = pneg %p70
        %p478 = pneg %p67
        %p479 = scmp.lt.s32.totalorder %s31, 3
        %s480 = scalar_select %p479, %s31, 3
        %p481 = scmp.lt.s32.totalorder %s32, 1
        %s482 = scalar_select %p481, %s32, 1
        %s483 = smul.addr %s480, 2
        %s484 = sadd.s32 %s482, %s483
        %s485 = scalar_lea.vmem %s1, %s484
        %p486 = pneg %p98
        %p487 = pneg %p95
        %s488 = sand.u32 %s111, 1
        %s489 = scalar_lea.sflag [#allocation3], %s488
        %s490 = sand.u32 %s111, 1
        %s491 = smul.addr %s490, 2
        %s492 = scalar_lea.vmem [#allocation2], %s491
        %p493 = pneg %p124
        %p494 = pneg %p121
        %p495 = scmp.lt.s32.totalorder %s31, 3
        %s496 = scalar_select %p495, %s31, 3
        %s497 = smul.addr %s496, 5
        %s498 = smul.addr %s497, 8
        %s499 = scalar_lea.vmem %s3, %s498
        %p500 = pneg %p150
        %p501 = pneg %p147
        %s502 = sand.u32 %s26, 1
        %s503 = scalar_lea.sflag [#allocation5], %s502
        %s504 = sand.u32 %s163, 1
        %s505 = scalar_lea.vmem [#allocation4], %s504
        %p506 = pneg %p176
        %p507 = pneg %p173
        %p508 = scmp.lt.s32.totalorder %s31, 3
        %s509 = scalar_select %p508, %s31, 3
        %s510 = smul.addr %s509, 3
        %s511 = smul.addr %s510, 8
        %s512 = scalar_lea.vmem %s5, %s511
        %p513 = pneg %p202
        %p514 = pneg %p199
        %s515 = sand.u32 %s26, 1
        %s516 = scalar_lea.sflag [#allocation5], %s515
        %s517 = sand.u32 %s215, 1
        %s518 = scalar_lea.vmem [#allocation6], %s517
        %p519 = pneg %p228
        %p520 = pneg %p225
        %p521 = scmp.lt.s32.totalorder %s31, 3
        %s522 = scalar_select %p521, %s31, 3
        %s523 = smul.addr %s522, 8
        %s524 = scalar_lea.vmem %s7, %s523
        %p525 = pneg %p254
        %p526 = pneg %p251
        %p527 = scmp.lt.s32.totalorder %s31, 3
        %s528 = scalar_select %p527, %s31, 3
        %s529 = scalar_lea.vmem %s8, %s528
        %p530 = pneg %p280
        %p531 = pneg %p277
        %p532 = pneg %p310
        %p533 = pneg %p307
        %p534 = scmp.lt.s32.totalorder %s31, 3
        %s535 = scalar_select %p534, %s31, 3
        %p536 = scmp.lt.s32.totalorder %s32, 1
        %s537 = scalar_select %p536, %s32, 1
        %p538 = scmp.lt.s32.totalorder %s33, 0
        %s539 = scalar_select %p538, %s33, 0
        %s540 = sadd.s32 %s539, %s537
        %s541 = smul.addr %s535, 2
        %s542 = sadd.s32 %s540, %s541
        %s543 = smul.addr %s542, 8
        %s544 = scalar_lea.vmem %s9, %s543
        %p545 = scmp.lt.s32.totalorder %s31, 3
        %s546 = scalar_select %p545, %s31, 3
        %p547 = scmp.lt.s32.totalorder %s32, 1
        %s548 = scalar_select %p547, %s32, 1
        %p549 = scmp.lt.s32.totalorder %s33, 0
        %s550 = scalar_select %p549, %s33, 0
        %s551 = sadd.s32 %s550, %s548
        %s552 = smul.addr %s546, 2
        %s553 = sadd.s32 %s551, %s552
        %s554 = smul.addr %s553, 8
        %s555 = scalar_lea.vmem %s0, %s554
        %p556 = scmp.lt.s32.totalorder %s31, 3
        %s557 = scalar_select %p556, %s31, 3
        %p558 = scmp.lt.s32.totalorder %s32, 1
        %s559 = scalar_select %p558, %s32, 1
        %s560 = smul.addr %s557, 2
        %s561 = sadd.s32 %s559, %s560
        %s562 = scalar_lea.vmem %s1, %s561
        %p563 = scmp.lt.s32.totalorder %s31, 3
        %s564 = scalar_select %p563, %s31, 3
        %s565 = smul.addr %s564, 5
        %s566 = smul.addr %s565, 8
        %s567 = scalar_lea.vmem %s3, %s566
        %p568 = scmp.lt.s32.totalorder %s31, 3
        %s569 = scalar_select %p568, %s31, 3
        %s570 = smul.addr %s569, 3
        %s571 = smul.addr %s570, 8
        %s572 = scalar_lea.vmem %s5, %s571
        %p573 = scmp.lt.s32.totalorder %s31, 3
        %s574 = scalar_select %p573, %s31, 3
        %s575 = smul.addr %s574, 8
        %s576 = scalar_lea.vmem %s7, %s575
        %p577 = scmp.lt.s32.totalorder %s31, 3
        %s578 = scalar_select %p577, %s31, 3
        %s579 = scalar_lea.vmem %s8, %s578
        %p580 = scmp.lt.s32.totalorder %s31, 3
        %s581 = scalar_select %p580, %s31, 3
        %p582 = scmp.lt.s32.totalorder %s32, 1
        %s583 = scalar_select %p582, %s32, 1
        %p584 = scmp.lt.s32.totalorder %s33, 0
        %s585 = scalar_select %p584, %s33, 0
        %s586 = sadd.s32 %s585, %s583
        %s587 = smul.addr %s581, 2
        %s588 = sadd.s32 %s586, %s587
        %s589 = smul.addr %s588, 8
        %s590 = scalar_lea.vmem %s9, %s589
        %v591 = vld [vmem:[%s555] sm:$0xff]
        %v592 = vld [vmem:[%s445] sm:$0x3]
        %v593 = vld [vmem:[%s562] sm:$0x1]
        %v595 = vlaneseq
        %v596 = vshrl.u32 %v595, 7
        %v597 = vsub.s32 0, %v596
        %v598 = vrot.slane %v593, %v597
        %vm600 = vcmask 15360
        %v602 = vsel %vm600, %v591, 0
        %vm604 = vcmask 1041408
        %v606 = vsel %vm604, %v592, 0
        %608 = vmatprep.subr.mxu0 0.0
        %609 = vmatpush1.msra.mxu0 0.0
        %610 = vmatprep.subr.mxu0 0.0
        %611 = vmatpush1.msra.mxu0 0.0
        %612 = vmatprep.subr.mxu0 0.0
        %613 = vmatpush1.msra.mxu0 0.0
        %614 = vmatprep.subr.mxu0 0.0
        %615 = vmatpush1.msra.mxu0 0.0
        %616 = vmatprep.subr.mxu0 0.0
        %617 = vmatpush1.msra.mxu0 0.0
        %618 = vmatprep.subr.mxu0 0.0
        %619 = vmatpush1.msra.mxu0 0.0
        %620 = vmatprep.subr.mxu0 0.0
        %621 = vmatpush1.msra.mxu0 0.0
        %622 = vmatprep.subr.mxu0 0.0
        %623 = vmatpush1.msra.mxu0 0.0
        %624 = vmatprep.subr.mxu0 0.0
        %625 = vmatpush1.msra.mxu0 0.0
        %626 = vmatprep.subr.mxu0 0.0
        %627 = vmatpush1.msra.mxu0 0.0
        %628 = vmatprep.subr.mxu0 0.0
        %629 = vmatpush1.msra.mxu0 0.0
        %630 = vmatprep.subr.mxu0 0.0
        %631 = vmatpush1.msra.mxu0 0.0
        %632 = vmatprep.subr.mxu0 0.0
        %633 = vmatpush1.msra.mxu0 0.0
        %634 = vmatprep.subr.mxu0 0.0
        %635 = vmatpush1.msra.mxu0 0.0
        %636 = vmatprep.subr.mxu0 0.0
        %637 = vmatpush1.msra.mxu0 0.0
        %638 = vmatprep.subr.mxu0 0.0
        %639 = vmatpush1.msra.mxu0 %v606
        %640 = vmatprep.subr.mxu0 0.0
        %641 = vmatpush2.msra.mxu0 0.0
        %642 = vmatprep.subr.mxu0 0.0
        %643 = vmatpush2.msra.mxu0 0.0
        %644 = vmatprep.subr.mxu0 0.0
        %645 = vmatpush2.msra.mxu0 0.0
        %646 = vmatprep.subr.mxu0 0.0
        %647 = vmatpush2.msra.mxu0 0.0
        %648 = vmatprep.subr.mxu0 0.0
        %649 = vmatpush2.msra.mxu0 0.0
        %650 = vmatprep.subr.mxu0 0.0
        %651 = vmatpush2.msra.mxu0 0.0
        %652 = vmatprep.subr.mxu0 0.0
        %653 = vmatpush2.msra.mxu0 0.0
        %654 = vmatprep.subr.mxu0 0.0
        %655 = vmatpush2.msra.mxu0 0.0
        %656 = vmatprep.subr.mxu0 0.0
        %657 = vmatpush2.msra.mxu0 0.0
        %658 = vmatprep.subr.mxu0 0.0
        %659 = vmatpush2.msra.mxu0 0.0
        %660 = vmatprep.subr.mxu0 0.0
        %661 = vmatpush2.msra.mxu0 0.0
        %662 = vmatprep.subr.mxu0 0.0
        %663 = vmatpush2.msra.mxu0 0.0
        %664 = vmatprep.subr.mxu0 0.0
        %665 = vmatpush2.msra.mxu0 0.0
        %666 = vmatprep.subr.mxu0 0.0
        %667 = vmatpush2.msra.mxu0 0.0
        %668 = vmatprep.subr.mxu0 0.0
        %669 = vmatpush2.msra.mxu0 0.0
        %670 = vmatprep.subr.mxu0 0.0
        %671 = vmatpush2.msra.mxu0 0.0
        %672 = vmatprep.mubr.f32.mxu0 0.0
        %673 = vmatmul.mubr.f32.gmra.mxu0 %v602
        %v674 = vpop.f32.mrf.mxu0
        %v675 = vadd.f32 %v598, %v674
        %v676 = vpop.f32.mrf.mxu0
        %677 = vdwg.mxu0
        %v678 = vmax.f32 %v675, 0.0
        %v679 = vld [vmem:[%s567] sm:$0xff]
        %v680 = vld [vmem:[%s567 + $0x8] sm:$0xff]
        %v681 = vld [vmem:[%s567 + $0x10] sm:$0xff]
        %v682 = vld [vmem:[%s567 + $0x18] sm:$0xff]
        %v683 = vld [vmem:[%s567 + $0x20] sm:$0x3]
        %v684 = vld [vmem:[%s453] sm:$0x1]
        %v686 = vlaneseq
        %v687 = vshrl.u32 %v686, 7
        %v688 = vsub.s32 0, %v687
        %v689 = vrot.slane %v684, %v688
        %vm691 = vcmask 277504
        %v693 = vsel %vm691, %v678, 0
        %v696 = vsel %vm604, %v683, 0
        %698 = vmatprep.subr.mxu0 0.0
        %699 = vmatpush1.msra.mxu0 0.0
        %700 = vmatprep.subr.mxu0 0.0
        %701 = vmatpush1.msra.mxu0 0.0
        %702 = vmatprep.subr.mxu0 0.0
        %703 = vmatpush1.msra.mxu0 0.0
        %704 = vmatprep.subr.mxu0 0.0
        %705 = vmatpush1.msra.mxu0 0.0
        %706 = vmatprep.subr.mxu0 0.0
        %707 = vmatpush1.msra.mxu0 0.0
        %708 = vmatprep.subr.mxu0 0.0
        %709 = vmatpush1.msra.mxu0 0.0
        %710 = vmatprep.subr.mxu0 0.0
        %711 = vmatpush1.msra.mxu0 0.0
        %712 = vmatprep.subr.mxu0 0.0
        %713 = vmatpush1.msra.mxu0 0.0
        %714 = vmatprep.subr.mxu0 0.0
        %715 = vmatpush1.msra.mxu0 0.0
        %716 = vmatprep.subr.mxu0 0.0
        %717 = vmatpush1.msra.mxu0 0.0
        %718 = vmatprep.subr.mxu0 0.0
        %719 = vmatpush1.msra.mxu0 0.0
        %720 = vmatprep.subr.mxu0 0.0
        %721 = vmatpush1.msra.mxu0 %v696
        %722 = vmatprep.subr.mxu0 0.0
        %723 = vmatpush1.msra.mxu0 %v682
        %724 = vmatprep.subr.mxu0 0.0
        %725 = vmatpush1.msra.mxu0 %v681
        %726 = vmatprep.subr.mxu0 0.0
        %727 = vmatpush1.msra.mxu0 %v680
        %728 = vmatprep.subr.mxu0 0.0
        %729 = vmatpush1.msra.mxu0 %v679
        %730 = vmatprep.subr.mxu0 0.0
        %731 = vmatpush2.msra.mxu0 0.0
        %732 = vmatprep.subr.mxu0 0.0
        %733 = vmatpush2.msra.mxu0 0.0
        %734 = vmatprep.subr.mxu0 0.0
        %735 = vmatpush2.msra.mxu0 0.0
        %736 = vmatprep.subr.mxu0 0.0
        %737 = vmatpush2.msra.mxu0 0.0
        %738 = vmatprep.subr.mxu0 0.0
        %739 = vmatpush2.msra.mxu0 0.0
        %740 = vmatprep.subr.mxu0 0.0
        %741 = vmatpush2.msra.mxu0 0.0
        %742 = vmatprep.subr.mxu0 0.0
        %743 = vmatpush2.msra.mxu0 0.0
        %744 = vmatprep.subr.mxu0 0.0
        %745 = vmatpush2.msra.mxu0 0.0
        %746 = vmatprep.subr.mxu0 0.0
        %747 = vmatpush2.msra.mxu0 0.0
        %748 = vmatprep.subr.mxu0 0.0
        %749 = vmatpush2.msra.mxu0 0.0
        %750 = vmatprep.subr.mxu0 0.0
        %751 = vmatpush2.msra.mxu0 0.0
        %752 = vmatprep.subr.mxu0 0.0
        %753 = vmatpush2.msra.mxu0 0.0
        %754 = vmatprep.subr.mxu0 0.0
        %755 = vmatpush2.msra.mxu0 0.0
        %756 = vmatprep.subr.mxu0 0.0
        %757 = vmatpush2.msra.mxu0 0.0
        %758 = vmatprep.subr.mxu0 0.0
        %759 = vmatpush2.msra.mxu0 0.0
        %760 = vmatprep.subr.mxu0 0.0
        %761 = vmatpush2.msra.mxu0 0.0
        %762 = vmatprep.mubr.f32.mxu0 0.0
        %763 = vmatmul.mubr.f32.gmra.mxu0 %v693
        %v764 = vpop.f32.mrf.mxu0
        %v765 = vadd.f32 %v689, %v764
        %v766 = vpop.f32.mrf.mxu0
        %767 = vdwg.mxu0
        %v768 = vmax.f32 %v765, 0.0
        %v769 = vld [vmem:[%s572] sm:$0xff]
        %v770 = vld [vmem:[%s572 + $0x8] sm:$0xff]
        %v771 = vld [vmem:[%s572 + $0x10] sm:$0x1]
        %v772 = vld [vmem:[%s461] sm:$0x1]
        %v774 = vlaneseq
        %v775 = vshrl.u32 %v774, 7
        %v776 = vsub.s32 0, %v775
        %v777 = vrot.slane %v772, %v776
        %vm779 = vcmask 138240
        %v781 = vsel %vm779, %v768, 0
        %vm783 = vcmask 1040384
        %v785 = vsel %vm783, %v771, 0
        %787 = vmatprep.subr.mxu0 0.0
        %788 = vmatpush1.msra.mxu0 0.0
        %789 = vmatprep.subr.mxu0 0.0
        %790 = vmatpush1.msra.mxu0 0.0
        %791 = vmatprep.subr.mxu0 0.0
        %792 = vmatpush1.msra.mxu0 0.0
        %793 = vmatprep.subr.mxu0 0.0
        %794 = vmatpush1.msra.mxu0 0.0
        %795 = vmatprep.subr.mxu0 0.0
        %796 = vmatpush1.msra.mxu0 0.0
        %797 = vmatprep.subr.mxu0 0.0
        %798 = vmatpush1.msra.mxu0 0.0
        %799 = vmatprep.subr.mxu0 0.0
        %800 = vmatpush1.msra.mxu0 0.0
        %801 = vmatprep.subr.mxu0 0.0
        %802 = vmatpush1.msra.mxu0 0.0
        %803 = vmatprep.subr.mxu0 0.0
        %804 = vmatpush1.msra.mxu0 0.0
        %805 = vmatprep.subr.mxu0 0.0
        %806 = vmatpush1.msra.mxu0 0.0
        %807 = vmatprep.subr.mxu0 0.0
        %808 = vmatpush1.msra.mxu0 0.0
        %809 = vmatprep.subr.mxu0 0.0
        %810 = vmatpush1.msra.mxu0 0.0
        %811 = vmatprep.subr.mxu0 0.0
        %812 = vmatpush1.msra.mxu0 0.0
        %813 = vmatprep.subr.mxu0 0.0
        %814 = vmatpush1.msra.mxu0 %v785
        %815 = vmatprep.subr.mxu0 0.0
        %816 = vmatpush1.msra.mxu0 %v770
        %817 = vmatprep.subr.mxu0 0.0
        %818 = vmatpush1.msra.mxu0 %v769
        %819 = vmatprep.subr.mxu0 0.0
        %820 = vmatpush2.msra.mxu0 0.0
        %821 = vmatprep.subr.mxu0 0.0
        %822 = vmatpush2.msra.mxu0 0.0
        %823 = vmatprep.subr.mxu0 0.0
        %824 = vmatpush2.msra.mxu0 0.0
        %825 = vmatprep.subr.mxu0 0.0
        %826 = vmatpush2.msra.mxu0 0.0
        %827 = vmatprep.subr.mxu0 0.0
        %828 = vmatpush2.msra.mxu0 0.0
        %829 = vmatprep.subr.mxu0 0.0
        %830 = vmatpush2.msra.mxu0 0.0
        %831 = vmatprep.subr.mxu0 0.0
        %832 = vmatpush2.msra.mxu0 0.0
        %833 = vmatprep.subr.mxu0 0.0
        %834 = vmatpush2.msra.mxu0 0.0
        %835 = vmatprep.subr.mxu0 0.0
        %836 = vmatpush2.msra.mxu0 0.0
        %837 = vmatprep.subr.mxu0 0.0
        %838 = vmatpush2.msra.mxu0 0.0
        %839 = vmatprep.subr.mxu0 0.0
        %840 = vmatpush2.msra.mxu0 0.0
        %841 = vmatprep.subr.mxu0 0.0
        %842 = vmatpush2.msra.mxu0 0.0
        %843 = vmatprep.subr.mxu0 0.0
        %844 = vmatpush2.msra.mxu0 0.0
        %845 = vmatprep.subr.mxu0 0.0
        %846 = vmatpush2.msra.mxu0 0.0
        %847 = vmatprep.subr.mxu0 0.0
        %848 = vmatpush2.msra.mxu0 0.0
        %849 = vmatprep.subr.mxu0 0.0
        %850 = vmatpush2.msra.mxu0 0.0
        %851 = vmatprep.mubr.f32.mxu0 0.0
        %852 = vmatmul.mubr.f32.gmra.mxu0 %v781
        %v853 = vpop.f32.mrf.mxu0
        %v854 = vadd.f32 %v777, %v853
        %v855 = vpop.f32.mrf.mxu0
        %856 = vdwg.mxu0
        %v857 = vmax.f32 %v854, 0.0
        %v858 = vld [vmem:[%s576] sm:$0xff]
        %v859 = vld [vmem:[%s579] sm:$0x1]
        %v861 = vlaneseq
        %v862 = vshrl.u32 %v861, 7
        %v863 = vsub.s32 0, %v862
        %v864 = vrot.slane %v859, %v863
        %vm866 = vcmask 64512
        %v868 = vsel %vm866, %v857, 0
        %870 = vmatprep.subr.mxu0 0.0
        %871 = vmatpush1.msra.mxu0 0.0
        %872 = vmatprep.subr.mxu0 0.0
        %873 = vmatpush1.msra.mxu0 0.0
        %874 = vmatprep.subr.mxu0 0.0
        %875 = vmatpush1.msra.mxu0 0.0
        %876 = vmatprep.subr.mxu0 0.0
        %877 = vmatpush1.msra.mxu0 0.0
        %878 = vmatprep.subr.mxu0 0.0
        %879 = vmatpush1.msra.mxu0 0.0
        %880 = vmatprep.subr.mxu0 0.0
        %881 = vmatpush1.msra.mxu0 0.0
        %882 = vmatprep.subr.mxu0 0.0
        %883 = vmatpush1.msra.mxu0 0.0
        %884 = vmatprep.subr.mxu0 0.0
        %885 = vmatpush1.msra.mxu0 0.0
        %886 = vmatprep.subr.mxu0 0.0
        %887 = vmatpush1.msra.mxu0 0.0
        %888 = vmatprep.subr.mxu0 0.0
        %889 = vmatpush1.msra.mxu0 0.0
        %890 = vmatprep.subr.mxu0 0.0
        %891 = vmatpush1.msra.mxu0 0.0
        %892 = vmatprep.subr.mxu0 0.0
        %893 = vmatpush1.msra.mxu0 0.0
        %894 = vmatprep.subr.mxu0 0.0
        %895 = vmatpush1.msra.mxu0 0.0
        %896 = vmatprep.subr.mxu0 0.0
        %897 = vmatpush1.msra.mxu0 0.0
        %898 = vmatprep.subr.mxu0 0.0
        %899 = vmatpush1.msra.mxu0 0.0
        %900 = vmatprep.subr.mxu0 0.0
        %901 = vmatpush1.msra.mxu0 %v858
        %902 = vmatprep.subr.mxu0 0.0
        %903 = vmatpush2.msra.mxu0 0.0
        %904 = vmatprep.subr.mxu0 0.0
        %905 = vmatpush2.msra.mxu0 0.0
        %906 = vmatprep.subr.mxu0 0.0
        %907 = vmatpush2.msra.mxu0 0.0
        %908 = vmatprep.subr.mxu0 0.0
        %909 = vmatpush2.msra.mxu0 0.0
        %910 = vmatprep.subr.mxu0 0.0
        %911 = vmatpush2.msra.mxu0 0.0
        %912 = vmatprep.subr.mxu0 0.0
        %913 = vmatpush2.msra.mxu0 0.0
        %914 = vmatprep.subr.mxu0 0.0
        %915 = vmatpush2.msra.mxu0 0.0
        %916 = vmatprep.subr.mxu0 0.0
        %917 = vmatpush2.msra.mxu0 0.0
        %918 = vmatprep.subr.mxu0 0.0
        %919 = vmatpush2.msra.mxu0 0.0
        %920 = vmatprep.subr.mxu0 0.0
        %921 = vmatpush2.msra.mxu0 0.0
        %922 = vmatprep.subr.mxu0 0.0
        %923 = vmatpush2.msra.mxu0 0.0
        %924 = vmatprep.subr.mxu0 0.0
        %925 = vmatpush2.msra.mxu0 0.0
        %926 = vmatprep.subr.mxu0 0.0
        %927 = vmatpush2.msra.mxu0 0.0
        %928 = vmatprep.subr.mxu0 0.0
        %929 = vmatpush2.msra.mxu0 0.0
        %930 = vmatprep.subr.mxu0 0.0
        %931 = vmatpush2.msra.mxu0 0.0
        %932 = vmatprep.subr.mxu0 0.0
        %933 = vmatpush2.msra.mxu0 0.0
        %934 = vmatprep.mubr.f32.mxu0 0.0
        %935 = vmatmul.mubr.f32.gmra.mxu0 %v868
        %v936 = vpop.f32.mrf.mxu0
        %v937 = vadd.f32 %v864, %v936
        %v938 = vpop.f32.mrf.mxu0
        %939 = vdwg.mxu0
        %v940 = vtanh.pop %v937
        %vm941 = vcmask 23552
        %942 = vst.msk [vmem:[%s590] sm:$0xff] %vm941, %v940
        %p943 = scmp.lt.s32.totalorder %s31, 3
        %s944 = scalar_select %p943, %s31, 3
        %p945 = scmp.lt.s32.totalorder %s32, 1
        %s946 = scalar_select %p945, %s32, 1
        %p947 = scmp.lt.s32.totalorder %s33, 0
        %s948 = scalar_select %p947, %s33, 0
        %s949 = sadd.s32 %s948, %s946
        %s950 = smul.addr %s944, 2
        %s951 = sadd.s32 %s949, %s950
        %s952 = smul.addr %s951, 8
        %s953 = scalar_lea.vmem %s9, %s952
        // Predicated region
        $region69: #{msn_forward.5} parent=55 // pred_check
          %p954 = pneg %p307
        $region70: #{msn_forward.5} parent=55 // pred_check_branch
          %956 = sbr.rel (%p954) target = $region72
        $region71: #{msn_forward.5} parent=55 // pred_region
          _
        $region72: #{msn_forward.5} parent=55 // pred_fallthru
          _
      $region56: #{msn_forward.5} parent=5 // pred_fallthru
        _
      %p957 = scmp.le.s32.totalorder 2, %s21
      // Predicated region
      $region73: #{msn_forward.5} parent=5 // pred_check
        %p958 = pneg %p957
      $region74: #{msn_forward.5} parent=5 // pred_check_branch
        %960 = sbr.rel (%p958) target = $region76
      $region75: #{msn_forward.5} parent=5 // pred_region
        %s961 = ssub.s32 %s21, 2
        // Predicated region
        $region77: #{msn_forward.5} parent=75 // pred_check
          %p962 = pneg %p313
        $region78: #{msn_forward.5} parent=75 // pred_check_branch
          %964 = sbr.rel (%p962) target = $region80
        $region79: #{msn_forward.5} parent=75 // pred_region
          %p965 = scmp.lt.s32.totalorder %s34, 3
          %s966 = scalar_select %p965, %s34, 3
          %p967 = scmp.lt.s32.totalorder %s35, 1
          %s968 = scalar_select %p967, %s35, 1
          %p969 = scmp.lt.s32.totalorder %s36, 0
          %s970 = scalar_select %p969, %s36, 0
          %s971 = sadd.s32 %s970, %s968
          %s972 = smul.addr %s966, 2
          %s973 = sadd.s32 %s971, %s972
          %s974 = smul.addr %s973, 8
          %s975 = scalar_lea.vmem %s9, %s974
        $region80: #{msn_forward.5} parent=75 // pred_fallthru
          _
      $region76: #{msn_forward.5} parent=5 // pred_fallthru
        _
    $region6: #{msn_forward.5} parent=1 // loop_footer
      %s25 = sadd.s32 1, %s21
    $region7: #{msn_forward.5} parent=1 // loop_footer_branch
      %20 = sbr.rel target = $region3
    $region8: #{msn_forward.5} parent=1 // loop_exit
      _
    %976 = vsyncpa [#allocation3], 1
    %s977 = scalar_lea.sflag [#allocation3], 1
    %978 = vsyncpa %s977, 1
    %979 = vsyncpa [#allocation5], 1
    %s980 = scalar_lea.sflag [#allocation5], 1
    %981 = vsyncpa %s980, 1

// kernel: msn_forward.6
$region0: #{msn_forward.6}
  #allocation0 [shape = 'u32[]', space=smem, size = 0x4, offset = 0x4, fixed_abs, tag = 'smem constant byte address 0x4 - core index']
  #allocation1 [shape = 'u32[144,128]{1,0:T(1,128)}', space=vmem, size = 0x12000, scoped, tag = 'internal scratch']
  #allocation2 [shape = 'f32[1,1024]{1,0:T(1,128)}', space=vmem, size = 0x1000, scoped, tag = 'scratch operand']
  %s0 = inlined_call_operand.vmem [shape: f32[2,32,4], index: 0, kind: input, shape index: {}]
  %s1 = inlined_call_operand.hbm [shape: f32[4,64], index: 1, kind: input, shape index: {}]
  %s2 = inlined_call_operand.hbm [shape: f32[1,64], index: 2, kind: input, shape index: {}]
  %s3 = inlined_call_operand.hbm [shape: f32[64,128], index: 3, kind: input, shape index: {}]
  %s4 = inlined_call_operand.hbm [shape: f32[1,128], index: 4, kind: input, shape index: {}]
  %s5 = inlined_call_operand.hbm [shape: f32[128,1024], index: 5, kind: input, shape index: {}]
  %s6 = inlined_call_operand.hbm [shape: f32[1,1024], index: 6, kind: input, shape index: {}]
  %s7 = inlined_call_operand.vmem [shape: f32[2,32,64], index: 7, kind: output, shape index: {0}]
  %s8 = inlined_call_operand.vmem [shape: f32[2,1,1024], index: 8, kind: output, shape index: {1}]
  %9 = xla_tuple %s7, %s8
  %s10 = sld [smem:[#allocation0]]
  $region101: #{msn_forward.6} parent=0
    _
  %s12 = ssub.s32 1, %s10
  %s13 = scalar_select 0, %s12, %s10
  $region1: #{msn_forward.6} parent=0
    #allocation3 [shape = 'u8[2048]{0}', space=vmem, size = 0x800, scoped, tag = 'input window, operand 1, single buffered']
    #allocation4 [shape = 's32[2]{0}', space=sflag, size = 0x8, scoped, tag = 'scoped memory for msn_forward.6']
    #allocation5 [shape = 'u8[512]{0}', space=vmem, size = 0x400, scoped, tag = 'input window, operand 2, single buffered']
    #allocation6 [shape = 's32[1]{0}', space=sflag, size = 0x4, scoped, tag = 'scoped memory for msn_forward.6']
    #allocation7 [shape = 'u8[32768]{0}', space=vmem, size = 0x8000, scoped, tag = 'input window, operand 3, single buffered']
    #allocation8 [shape = 'u8[512]{0}', space=vmem, size = 0x400, scoped, tag = 'input window, operand 4, single buffered']
    #allocation9 [shape = 's32[1]{0}', space=sflag, size = 0x4, scoped, tag = 'scoped memory for msn_forward.6']
    #allocation10 [shape = 'u8[524288]{0}', space=vmem, size = 0x80000, scoped, tag = 'input window, operand 5, single buffered']
    #allocation11 [shape = 'u8[4096]{0}', space=vmem, size = 0x1000, scoped, tag = 'input window, operand 6, single buffered']
    #allocation12 [shape = 's32[1]{0}', space=sflag, size = 0x4, scoped, tag = 'scoped memory for msn_forward.6']
    %14 = vsyncpa [#allocation4], 0
    %15 = vsyncpa [#allocation6], 0
    %16 = vsyncpa [#allocation9], 0
    %17 = vsyncpa [#allocation12], 0
    loop: start=0, step=1, limit=4
    $region2: #{msn_forward.6} parent=1 // loop_pre_header
      _
    $region3: #{msn_forward.6} parent=1 // loop_header
      %s19 = sphi 0, %s23
      %p20 = scmp.ge.s32.totalorder %s19, 4
      %s26 = sphi 0, %s38
      %s27 = sphi 0, %s34
      %s28 = sphi 0, %s26
      %s29 = sphi 0, %s27
      %s30 = sphi 0, %s28
      %s31 = sphi 0, %s29
      %s43 = sphi 0, %s45
      %s46 = sphi 0, %s43
      %s47 = sphi 0, %s46
      %s63 = sphi 0, %s47
      %s67 = sphi 0, %s67
      %s69 = sphi 0, %s67
      %s70 = sphi 0, %s69
      %s84 = sphi 0, %s70
      %s88 = sphi 0, %s88
      %s90 = sphi 0, %s88
      %s91 = sphi 0, %s90
      %s105 = sphi 0, %s91
      %s109 = sphi 0, %s109
      %s111 = sphi 0, %s109
      %s112 = sphi 0, %s111
      %s126 = sphi 0, %s112
      %s130 = sphi 0, %s130
      %s132 = sphi 0, %s130
      %s133 = sphi 0, %s132
      %s147 = sphi 0, %s133
      %s151 = sphi 0, %s151
      %s153 = sphi 0, %s151
      %s154 = sphi 0, %s153
      %s168 = sphi 0, %s154
      %s172 = sphi 0, %s172
      %s174 = sphi 0, %s172
      %s175 = sphi 0, %s174
      %s189 = sphi 0, %s175
      %s197 = sphi 0, %s199
      %s200 = sphi 0, %s197
      %s201 = sphi 0, %s200
      %s217 = sphi 0, %s201
      %s223 = sphi 0, %s225
      %s226 = sphi 0, %s223
      %s227 = sphi 0, %s226
      %s243 = sphi 0, %s227
    $region4: #{msn_forward.6} parent=1 // loop_header_branch
      %22 = sbr.rel (%p20) target = $region8
    $region5: #{msn_forward.6} parent=1 // loop_body
      %s24 = ssub.s32 %s19, 1
      %s25 = ssub.s32 %s19, 2
      %s32 = sadd.s32 1, %s27
      %p33 = scmp.ge.s32.totalorder %s32, 1
      %s34 = scalar_select %p33, 0, %s32
      %s35 = sadd.s32 1, %s26
      %s36 = scalar_select %p33, %s35, %s26
      %p37 = scmp.ge.s32.totalorder %s36, 2
      %s38 = scalar_select %p37, 0, %s36
      %s39 = ssub.s32 %s26, %s38
      %s40 = ssub.s32 %s27, %s34
      %s41 = sor.u32 %s39, %s40
      %p42 = scmp.eq.s32.totalorder %s41, 0
      %s44 = sadd.s32 %s43, 1
      %s45 = scalar_select %p42, %s43, %s44
      %p48 = pneg %p42
      %p49 = scmp.eq.s32.totalorder %s19, 1
      %p50 = por %p48, %p49
      %p51 = scmp.ne.s32.totalorder %s43, %s46
      %p52 = scmp.eq.s32.totalorder %s19, 0
      %p53 = por %p51, %p52
      %p54 = scmp.ne.s32.totalorder %s43, %s46
      %p55 = scmp.eq.s32.totalorder %s24, 1
      %p56 = por %p54, %p55
      %p57 = scmp.ne.s32.totalorder %s46, %s47
      %p58 = scmp.eq.s32.totalorder %s24, 0
      %p59 = por %p57, %p58
      %p60 = scmp.ne.s32.totalorder %s46, %s47
      %p61 = scmp.eq.s32.totalorder %s25, 1
      %p62 = por %p60, %p61
      %p64 = scmp.ne.s32.totalorder %s47, %s63
      %p65 = scmp.eq.s32.totalorder %s25, 0
      %p66 = por %p64, %p65
      %s68 = sadd.s32 %s67, 1
      %p71 = scmp.eq.s32.totalorder %s19, 1
      %p72 = scmp.ne.s32.totalorder %s67, %s69
      %p73 = scmp.eq.s32.totalorder %s19, 0
      %p74 = por %p72, %p73
      %p75 = scmp.ne.s32.totalorder %s67, %s69
      %p76 = scmp.eq.s32.totalorder %s24, 1
      %p77 = por %p75, %p76
      %p78 = scmp.ne.s32.totalorder %s69, %s70
      %p79 = scmp.eq.s32.totalorder %s24, 0
      %p80 = por %p78, %p79
      %p81 = scmp.ne.s32.totalorder %s69, %s70
      %p82 = scmp.eq.s32.totalorder %s25, 1
      %p83 = por %p81, %p82
      %p85 = scmp.ne.s32.totalorder %s70, %s84
      %p86 = scmp.eq.s32.totalorder %s25, 0
      %p87 = por %p85, %p86
      %s89 = sadd.s32 %s88, 1
      %p92 = scmp.eq.s32.totalorder %s19, 1
      %p93 = scmp.ne.s32.totalorder %s88, %s90
      %p94 = scmp.eq.s32.totalorder %s19, 0
      %p95 = por %p93, %p94
      %p96 = scmp.ne.s32.totalorder %s88, %s90
      %p97 = scmp.eq.s32.totalorder %s24, 1
      %p98 = por %p96, %p97
      %p99 = scmp.ne.s32.totalorder %s90, %s91
      %p100 = scmp.eq.s32.totalorder %s24, 0
      %p101 = por %p99, %p100
      %p102 = scmp.ne.s32.totalorder %s90, %s91
      %p103 = scmp.eq.s32.totalorder %s25, 1
      %p104 = por %p102, %p103
      %p106 = scmp.ne.s32.totalorder %s91, %s105
      %p107 = scmp.eq.s32.totalorder %s25, 0
      %p108 = por %p106, %p107
      %s110 = sadd.s32 %s109, 1
      %p113 = scmp.eq.s32.totalorder %s19, 1
      %p114 = scmp.ne.s32.totalorder %s109, %s111
      %p115 = scmp.eq.s32.totalorder %s19, 0
      %p116 = por %p114, %p115
      %p117 = scmp.ne.s32.totalorder %s109, %s111
      %p118 = scmp.eq.s32.totalorder %s24, 1
      %p119 = por %p117, %p118
      %p120 = scmp.ne.s32.totalorder %s111, %s112
      %p121 = scmp.eq.s32.totalorder %s24, 0
      %p122 = por %p120, %p121
      %p123 = scmp.ne.s32.totalorder %s111, %s112
      %p124 = scmp.eq.s32.totalorder %s25, 1
      %p125 = por %p123, %p124
      %p127 = scmp.ne.s32.totalorder %s112, %s126
      %p128 = scmp.eq.s32.totalorder %s25, 0
      %p129 = por %p127, %p128
      %s131 = sadd.s32 %s130, 1
      %p134 = scmp.eq.s32.totalorder %s19, 1
      %p135 = scmp.ne.s32.totalorder %s130, %s132
      %p136 = scmp.eq.s32.totalorder %s19, 0
      %p137 = por %p135, %p136
      %p138 = scmp.ne.s32.totalorder %s130, %s132
      %p139 = scmp.eq.s32.totalorder %s24, 1
      %p140 = por %p138, %p139
      %p141 = scmp.ne.s32.totalorder %s132, %s133
      %p142 = scmp.eq.s32.totalorder %s24, 0
      %p143 = por %p141, %p142
      %p144 = scmp.ne.s32.totalorder %s132, %s133
      %p145 = scmp.eq.s32.totalorder %s25, 1
      %p146 = por %p144, %p145
      %p148 = scmp.ne.s32.totalorder %s133, %s147
      %p149 = scmp.eq.s32.totalorder %s25, 0
      %p150 = por %p148, %p149
      %s152 = sadd.s32 %s151, 1
      %p155 = scmp.eq.s32.totalorder %s19, 1
      %p156 = scmp.ne.s32.totalorder %s151, %s153
      %p157 = scmp.eq.s32.totalorder %s19, 0
      %p158 = por %p156, %p157
      %p159 = scmp.ne.s32.totalorder %s151, %s153
      %p160 = scmp.eq.s32.totalorder %s24, 1
      %p161 = por %p159, %p160
      %p162 = scmp.ne.s32.totalorder %s153, %s154
      %p163 = scmp.eq.s32.totalorder %s24, 0
      %p164 = por %p162, %p163
      %p165 = scmp.ne.s32.totalorder %s153, %s154
      %p166 = scmp.eq.s32.totalorder %s25, 1
      %p167 = por %p165, %p166
      %p169 = scmp.ne.s32.totalorder %s154, %s168
      %p170 = scmp.eq.s32.totalorder %s25, 0
      %p171 = por %p169, %p170
      %s173 = sadd.s32 %s172, 1
      %p176 = scmp.eq.s32.totalorder %s19, 1
      %p177 = scmp.ne.s32.totalorder %s172, %s174
      %p178 = scmp.eq.s32.totalorder %s19, 0
      %p179 = por %p177, %p178
      %p180 = scmp.ne.s32.totalorder %s172, %s174
      %p181 = scmp.eq.s32.totalorder %s24, 1
      %p182 = por %p180, %p181
      %p183 = scmp.ne.s32.totalorder %s174, %s175
      %p184 = scmp.eq.s32.totalorder %s24, 0
      %p185 = por %p183, %p184
      %p186 = scmp.ne.s32.totalorder %s174, %s175
      %p187 = scmp.eq.s32.totalorder %s25, 1
      %p188 = por %p186, %p187
      %p190 = scmp.ne.s32.totalorder %s175, %s189
      %p191 = scmp.eq.s32.totalorder %s25, 0
      %p192 = por %p190, %p191
      %s193 = ssub.s32 %s26, %s38
      %s194 = ssub.s32 %s27, %s34
      %s195 = sor.u32 %s193, %s194
      %p196 = scmp.eq.s32.totalorder %s195, 0
      %s198 = sadd.s32 %s197, 1
      %s199 = scalar_select %p196, %s197, %s198
      %p202 = pneg %p196
      %p203 = scmp.eq.s32.totalorder %s19, 1
      %p204 = por %p202, %p203
      %p205 = scmp.ne.s32.totalorder %s197, %s200
      %p206 = scmp.eq.s32.totalorder %s19, 0
      %p207 = por %p205, %p206
      %p208 = scmp.ne.s32.totalorder %s197, %s200
      %p209 = scmp.eq.s32.totalorder %s24, 1
      %p210 = por %p208, %p209
      %p211 = scmp.ne.s32.totalorder %s200, %s201
      %p212 = scmp.eq.s32.totalorder %s24, 0
      %p213 = por %p211, %p212
      %p214 = scmp.ne.s32.totalorder %s200, %s201
      %p215 = scmp.eq.s32.totalorder %s25, 1
      %p216 = por %p214, %p215
      %p218 = scmp.ne.s32.totalorder %s201, %s217
      %p219 = scmp.eq.s32.totalorder %s25, 0
      %p220 = por %p218, %p219
      %s221 = ssub.s32 %s26, %s38
      %p222 = scmp.eq.s32.totalorder %s221, 0
      %s224 = sadd.s32 %s223, 1
      %s225 = scalar_select %p222, %s223, %s224
      %p228 = pneg %p222
      %p229 = scmp.eq.s32.totalorder %s19, 1
      %p230 = por %p228, %p229
      %p231 = scmp.ne.s32.totalorder %s223, %s226
      %p232 = scmp.eq.s32.totalorder %s19, 0
      %p233 = por %p231, %p232
      %p234 = scmp.ne.s32.totalorder %s223, %s226
      %p235 = scmp.eq.s32.totalorder %s24, 1
      %p236 = por %p234, %p235
      %p237 = scmp.ne.s32.totalorder %s226, %s227
      %p238 = scmp.eq.s32.totalorder %s24, 0
      %p239 = por %p237, %p238
      %p240 = scmp.ne.s32.totalorder %s226, %s227
      %p241 = scmp.eq.s32.totalorder %s25, 1
      %p242 = por %p240, %p241
      %p244 = scmp.ne.s32.totalorder %s227, %s243
      %p245 = scmp.eq.s32.totalorder %s25, 0
      %p246 = por %p244, %p245
      %p247 = scmp.le.s32.totalorder 1, %s19
      %p248 = scmp.lt.s32.totalorder %s19, 3
      %p249 = pnand %p247, %p248
      %p250 = pneg %p249
      // Predicated region
      $region9: #{msn_forward.6} parent=5 // pred_check
        _
      $region10: #{msn_forward.6} parent=5 // pred_check_branch
        %252 = sbr.rel (%p249) target = $region12
      $region11: #{msn_forward.6} parent=5 // pred_region
        %s253 = ssub.s32 %s19, 1
        // Predicated region
        $region13: #{msn_forward.6} parent=11 // pred_check
          %p254 = pneg %p80
        $region14: #{msn_forward.6} parent=11 // pred_check_branch
          %256 = sbr.rel (%p254) target = $region16
        $region15: #{msn_forward.6} parent=11 // pred_region
          %s258 = ssub.s32 64, 64
          %259 = vsyncadd [#allocation4], %s258
          %s261 = sshll.u32 [#allocation3], 4
          %s262 = int_to_ptr.vmem [resolvable:$true] %s261
          %264 = dma.hbm_to_vmem [thread:$0]  %s1, 64, %s262, [#allocation4]
        $region16: #{msn_forward.6} parent=11 // pred_fallthru
          _
        // Predicated region
        $region17: #{msn_forward.6} parent=11 // pred_check
          %p265 = pneg %p101
        $region18: #{msn_forward.6} parent=11 // pred_check_branch
          %267 = sbr.rel (%p265) target = $region20
        $region19: #{msn_forward.6} parent=11 // pred_region
          %s269 = ssub.s32 16, 16
          %270 = vsyncadd [#allocation6], %s269
          %s272 = sshll.u32 [#allocation5], 4
          %s273 = int_to_ptr.vmem [resolvable:$true] %s272
          %275 = dma.hbm_to_vmem [thread:$0]  %s2, 16, %s273, [#allocation6]
        $region20: #{msn_forward.6} parent=11 // pred_fallthru
          _
        // Predicated region
        $region21: #{msn_forward.6} parent=11 // pred_check
          %p276 = pneg %p122
        $region22: #{msn_forward.6} parent=11 // pred_check_branch
          %278 = sbr.rel (%p276) target = $region24
        $region23: #{msn_forward.6} parent=11 // pred_region
          %s280 = ssub.s32 1024, 1024
          %281 = vsyncadd [#allocation6], %s280
          %s282 = sshll.u32 [#allocation7], 4
          %s283 = int_to_ptr.vmem [resolvable:$true] %s282
          %288 = dma.hbm_to_vmem [thread:$0]  %s3, 1024, %s283, [#allocation6], 128, 128, 8
        $region24: #{msn_forward.6} parent=11 // pred_fallthru
          _
        // Predicated region
        $region25: #{msn_forward.6} parent=11 // pred_check
          %p289 = pneg %p143
        $region26: #{msn_forward.6} parent=11 // pred_check_branch
          %291 = sbr.rel (%p289) target = $region28
        $region27: #{msn_forward.6} parent=11 // pred_region
          %s293 = ssub.s32 16, 16
          %294 = vsyncadd [#allocation9], %s293
          %s296 = sshll.u32 [#allocation8], 4
          %s297 = int_to_ptr.vmem [resolvable:$true] %s296
          %299 = dma.hbm_to_vmem [thread:$0]  %s4, 16, %s297, [#allocation9]
        $region28: #{msn_forward.6} parent=11 // pred_fallthru
          _
        // Predicated region
        $region29: #{msn_forward.6} parent=11 // pred_check
          %p300 = pneg %p164
        $region30: #{msn_forward.6} parent=11 // pred_check_branch
          %302 = sbr.rel (%p300) target = $region32
        $region31: #{msn_forward.6} parent=11 // pred_region
          %s304 = ssub.s32 16384, 16384
          %305 = vsyncadd [#allocation9], %s304
          %s306 = sshll.u32 [#allocation10], 4
          %s307 = int_to_ptr.vmem [resolvable:$true] %s306
          %312 = dma.hbm_to_vmem [thread:$0]  %s5, 16384, %s307, [#allocation9], 1024, 1024, 64
        $region32: #{msn_forward.6} parent=11 // pred_fallthru
          _
        // Predicated region
        $region33: #{msn_forward.6} parent=11 // pred_check
          %p313 = pneg %p185
        $region34: #{msn_forward.6} parent=11 // pred_check_branch
          %315 = sbr.rel (%p313) target = $region36
        $region35: #{msn_forward.6} parent=11 // pred_region
          %s317 = ssub.s32 128, 128
          %318 = vsyncadd [#allocation12], %s317
          %s320 = sshll.u32 [#allocation11], 4
          %s321 = int_to_ptr.vmem [resolvable:$true] %s320
          %323 = dma.hbm_to_vmem [thread:$0]  %s6, 128, %s321, [#allocation12]
        $region36: #{msn_forward.6} parent=11 // pred_fallthru
          _
      $region12: #{msn_forward.6} parent=5 // pred_fallthru
        _
      %p324 = scmp.lt.s32.totalorder %s19, 2
      // Predicated region
      $region37: #{msn_forward.6} parent=5 // pred_check
        %p325 = pneg %p324
      $region38: #{msn_forward.6} parent=5 // pred_check_branch
        %327 = sbr.rel (%p325) target = $region40
      $region39: #{msn_forward.6} parent=5 // pred_region
        // Predicated region
        $region41: #{msn_forward.6} parent=39 // pred_check
          %p328 = pneg %p53
        $region42: #{msn_forward.6} parent=39 // pred_check_branch
          %330 = sbr.rel (%p328) target = $region44
        $region43: #{msn_forward.6} parent=39 // pred_region
          %s331 = smul.u32 4, %s27
          %p332 = scmp.lt.s32.totalorder %s26, 1
          %s333 = scalar_select %p332, %s26, 1
          %p334 = scmp.lt.s32.totalorder %s331, 3
          %s335 = scalar_select %p334, %s331, 3
          %s336 = smul.addr %s333, 4
          %s337 = sadd.s32 %s335, %s336
          %s338 = smul.addr %s337, 8
          %s339 = scalar_lea.vmem %s0, %s338
          %s340 = smul.u32 4, %s27
        $region44: #{msn_forward.6} parent=39 // pred_fallthru
          _
      $region40: #{msn_forward.6} parent=5 // pred_fallthru
        _
      %p341 = scmp.le.s32.totalorder 1, %s19
      %p342 = scmp.lt.s32.totalorder %s19, 3
      %p343 = pnand %p341, %p342
      %p344 = pneg %p343
      // Predicated region
      $region45: #{msn_forward.6} parent=5 // pred_check
        _
      $region46: #{msn_forward.6} parent=5 // pred_check_branch
        %346 = sbr.rel (%p343) target = $region48
      $region47: #{msn_forward.6} parent=5 // pred_region
        %s347 = ssub.s32 %s19, 1
        // Predicated region
        $region49: #{msn_forward.6} parent=47 // pred_check
          %p348 = pneg %p80
        $region50: #{msn_forward.6} parent=47 // pred_check_branch
          %350 = sbr.rel (%p348) target = $region52
        $region51: #{msn_forward.6} parent=47 // pred_region
          %351 = dma.done [#allocation4], 64
        $region52: #{msn_forward.6} parent=47 // pred_fallthru
          _
        // Predicated region
        $region53: #{msn_forward.6} parent=47 // pred_check
          %p352 = pneg %p101
        $region54: #{msn_forward.6} parent=47 // pred_check_branch
          %354 = sbr.rel (%p352) target = $region56
        $region55: #{msn_forward.6} parent=47 // pred_region
          %355 = dma.done [#allocation6], 16
        $region56: #{msn_forward.6} parent=47 // pred_fallthru
          _
        // Predicated region
        $region57: #{msn_forward.6} parent=47 // pred_check
          %p356 = pneg %p122
        $region58: #{msn_forward.6} parent=47 // pred_check_branch
          %358 = sbr.rel (%p356) target = $region60
        $region59: #{msn_forward.6} parent=47 // pred_region
          %359 = dma.done [#allocation6], 1024
        $region60: #{msn_forward.6} parent=47 // pred_fallthru
          _
        // Predicated region
        $region61: #{msn_forward.6} parent=47 // pred_check
          %p360 = pneg %p143
        $region62: #{msn_forward.6} parent=47 // pred_check_branch
          %362 = sbr.rel (%p360) target = $region64
        $region63: #{msn_forward.6} parent=47 // pred_region
          %363 = dma.done [#allocation9], 16
        $region64: #{msn_forward.6} parent=47 // pred_fallthru
          _
        // Predicated region
        $region65: #{msn_forward.6} parent=47 // pred_check
          %p364 = pneg %p164
        $region66: #{msn_forward.6} parent=47 // pred_check_branch
          %366 = sbr.rel (%p364) target = $region68
        $region67: #{msn_forward.6} parent=47 // pred_region
          %367 = dma.done [#allocation9], 16384
        $region68: #{msn_forward.6} parent=47 // pred_fallthru
          _
        // Predicated region
        $region69: #{msn_forward.6} parent=47 // pred_check
          %p368 = pneg %p185
        $region70: #{msn_forward.6} parent=47 // pred_check_branch
          %370 = sbr.rel (%p368) target = $region72
        $region71: #{msn_forward.6} parent=47 // pred_region
          %371 = dma.done [#allocation12], 128
        $region72: #{msn_forward.6} parent=47 // pred_fallthru
          _
        %s372 = smul.u32 4, %s29
        %p373 = scmp.lt.s32.totalorder %s28, 1
        %s374 = scalar_select %p373, %s28, 1
        %p375 = scmp.lt.s32.totalorder %s372, 3
        %s376 = scalar_select %p375, %s372, 3
        %s377 = smul.addr %s374, 4
        %s378 = sadd.s32 %s376, %s377
        %s379 = smul.addr %s378, 8
        %s380 = scalar_lea.vmem %s0, %s379
        %p381 = pneg %p59
        %p382 = pneg %p56
        %p383 = pneg %p80
        %p384 = pneg %p77
        %p385 = pneg %p101
        %p386 = pneg %p98
        %p387 = pneg %p122
        %p388 = pneg %p119
        %p389 = pneg %p143
        %p390 = pneg %p140
        %p391 = pneg %p164
        %p392 = pneg %p161
        %p393 = pneg %p185
        %p394 = pneg %p182
        %p395 = pneg %p213
        %p396 = pneg %p210
        %s397 = smul.u32 4, %s29
        %p398 = scmp.lt.s32.totalorder %s28, 1
        %s399 = scalar_select %p398, %s28, 1
        %p400 = scmp.lt.s32.totalorder %s397, 3
        %s401 = scalar_select %p400, %s397, 3
        %s402 = smul.addr %s399, 4
        %s403 = sadd.s32 %s401, %s402
        %s404 = smul.addr %s403, 8
        %s405 = scalar_lea.vmem %s7, %s404
        %p406 = pneg %p239
        %p407 = pneg %p236
        %p408 = scmp.lt.s32.totalorder %s28, 1
        %s409 = scalar_select %p408, %s28, 1
        %s410 = smul.addr %s409, 8
        %s411 = scalar_lea.vmem %s8, %s410
        %s412 = smul.u32 4, %s29
        %p413 = scmp.lt.s32.totalorder %s28, 1
        %s414 = scalar_select %p413, %s28, 1
        %p415 = scmp.lt.s32.totalorder %s412, 3
        %s416 = scalar_select %p415, %s412, 3
        %s417 = smul.addr %s414, 4
        %s418 = sadd.s32 %s416, %s417
        %s419 = smul.addr %s418, 8
        %s420 = scalar_lea.vmem %s0, %s419
        %s421 = smul.u32 4, %s29
        %s422 = smul.u32 4, %s29
        %p423 = scmp.lt.s32.totalorder %s28, 1
        %s424 = scalar_select %p423, %s28, 1
        %p425 = scmp.lt.s32.totalorder %s422, 3
        %s426 = scalar_select %p425, %s422, 3
        %s427 = smul.addr %s424, 4
        %s428 = sadd.s32 %s426, %s427
        %s429 = smul.addr %s428, 8
        %s430 = scalar_lea.vmem %s7, %s429
        %s431 = smul.u32 4, %s29
        %p432 = scmp.lt.s32.totalorder %s28, 1
        %s433 = scalar_select %p432, %s28, 1
        %s434 = smul.addr %s433, 8
        %s435 = scalar_lea.vmem %s8, %s434
        %v436 = vld [vmem:[%s420] sm:$0xff]
        %v437 = vld [vmem:[%s420 + $0x8] sm:$0xff]
        %v438 = vld [vmem:[%s420 + $0x10] sm:$0xff]
        %v439 = vld [vmem:[%s420 + $0x18] sm:$0xff]
        %v440 = vld [vmem:[#allocation3] sm:$0xf]
        %v441 = vld [vmem:[#allocation5] sm:$0x1]
        %v443 = vlaneseq
        %v444 = vshrl.u32 %v443, 7
        %v445 = vsub.s32 0, %v444
        %v446 = vrot.slane %v441, %v445
        %vm448 = vcmask 31744
        %v450 = vsel %vm448, %v436, 0
        %v453 = vsel %vm448, %v437, 0
        %v456 = vsel %vm448, %v438, 0
        %v459 = vsel %vm448, %v439, 0
        %vm461 = vcmask 1043456
        %v463 = vsel %vm461, %v440, 0
        %465 = vmatprep.subr.mxu0 0.0
        %466 = vmatpush1.msra.mxu0 0.0
        %467 = vmatprep.subr.mxu0 0.0
        %468 = vmatpush1.msra.mxu0 0.0
        %469 = vmatprep.subr.mxu0 0.0
        %470 = vmatpush1.msra.mxu0 0.0
        %471 = vmatprep.subr.mxu0 0.0
        %472 = vmatpush1.msra.mxu0 0.0
        %473 = vmatprep.subr.mxu0 0.0
        %474 = vmatpush1.msra.mxu0 0.0
        %475 = vmatprep.subr.mxu0 0.0
        %476 = vmatpush1.msra.mxu0 0.0
        %477 = vmatprep.subr.mxu0 0.0
        %478 = vmatpush1.msra.mxu0 0.0
        %479 = vmatprep.subr.mxu0 0.0
        %480 = vmatpush1.msra.mxu0 0.0
        %481 = vmatprep.subr.mxu0 0.0
        %482 = vmatpush1.msra.mxu0 0.0
        %483 = vmatprep.subr.mxu0 0.0
        %484 = vmatpush1.msra.mxu0 0.0
        %485 = vmatprep.subr.mxu0 0.0
        %486 = vmatpush1.msra.mxu0 0.0
        %487 = vmatprep.subr.mxu0 0.0
        %488 = vmatpush1.msra.mxu0 0.0
        %489 = vmatprep.subr.mxu0 0.0
        %490 = vmatpush1.msra.mxu0 0.0
        %491 = vmatprep.subr.mxu0 0.0
        %492 = vmatpush1.msra.mxu0 0.0
        %493 = vmatprep.subr.mxu0 0.0
        %494 = vmatpush1.msra.mxu0 0.0
        %495 = vmatprep.subr.mxu0 0.0
        %496 = vmatpush1.msra.mxu0 %v463
        %497 = vmatprep.subr.mxu0 0.0
        %498 = vmatpush2.msra.mxu0 0.0
        %499 = vmatprep.subr.mxu0 0.0
        %500 = vmatpush2.msra.mxu0 0.0
        %501 = vmatprep.subr.mxu0 0.0
        %502 = vmatpush2.msra.mxu0 0.0
        %503 = vmatprep.subr.mxu0 0.0
        %504 = vmatpush2.msra.mxu0 0.0
        %505 = vmatprep.subr.mxu0 0.0
        %506 = vmatpush2.msra.mxu0 0.0
        %507 = vmatprep.subr.mxu0 0.0
        %508 = vmatpush2.msra.mxu0 0.0
        %509 = vmatprep.subr.mxu0 0.0
        %510 = vmatpush2.msra.mxu0 0.0
        %511 = vmatprep.subr.mxu0 0.0
        %512 = vmatpush2.msra.mxu0 0.0
        %513 = vmatprep.subr.mxu0 0.0
        %514 = vmatpush2.msra.mxu0 0.0
        %515 = vmatprep.subr.mxu0 0.0
        %516 = vmatpush2.msra.mxu0 0.0
        %517 = vmatprep.subr.mxu0 0.0
        %518 = vmatpush2.msra.mxu0 0.0
        %519 = vmatprep.subr.mxu0 0.0
        %520 = vmatpush2.msra.mxu0 0.0
        %521 = vmatprep.subr.mxu0 0.0
        %522 = vmatpush2.msra.mxu0 0.0
        %523 = vmatprep.subr.mxu0 0.0
        %524 = vmatpush2.msra.mxu0 0.0
        %525 = vmatprep.subr.mxu0 0.0
        %526 = vmatpush2.msra.mxu0 0.0
        %527 = vmatprep.subr.mxu0 0.0
        %528 = vmatpush2.msra.mxu0 0.0
        %529 = vmatprep.mubr.f32.mxu0 0.0
        %530 = vmatmul.mubr.f32.gmra.mxu0 %v450
        %v531 = vpop.f32.mrf.mxu0
        %v532 = vadd.f32 %v446, %v531
        %v533 = vpop.f32.mrf.mxu0
        %534 = vmatprep.mubr.f32.mxu0 0.0
        %535 = vmatmul.mubr.f32.gmra.mxu0 %v453
        %v536 = vpop.f32.mrf.mxu0
        %v537 = vadd.f32 %v446, %v536
        %v538 = vpop.f32.mrf.mxu0
        %539 = vmatprep.mubr.f32.mxu0 0.0
        %540 = vmatmul.mubr.f32.gmra.mxu0 %v456
        %v541 = vpop.f32.mrf.mxu0
        %v542 = vadd.f32 %v446, %v541
        %v543 = vpop.f32.mrf.mxu0
        %544 = vmatprep.mubr.f32.mxu0 0.0
        %545 = vmatmul.mubr.f32.gmra.mxu0 %v459
        %v546 = vpop.f32.mrf.mxu0
        %v547 = vadd.f32 %v446, %v546
        %v548 = vpop.f32.mrf.mxu0
        %549 = vdwg.mxu0
        %v550 = vmax.f32 %v532, 0.0
        %v551 = vmax.f32 %v537, 0.0
        %v552 = vmax.f32 %v542, 0.0
        %v553 = vmax.f32 %v547, 0.0
        %vm554 = vcmask 523264
        %555 = vst.msk [vmem:[%s430] sm:$0xff] %vm554, %v550
        %556 = vst.msk [vmem:[%s430 + $0x8] sm:$0xff] %vm554, %v551
        %557 = vst.msk [vmem:[%s430 + $0x10] sm:$0xff] %vm554, %v552
        %558 = vst.msk [vmem:[%s430 + $0x18] sm:$0xff] %vm554, %v553
        %v559 = vld [vmem:[#allocation7] sm:$0xff]
        %v560 = vld [vmem:[#allocation7 + $0x8] sm:$0xff]
        %v561 = vld [vmem:[#allocation7 + $0x10] sm:$0xff]
        %v562 = vld [vmem:[#allocation7 + $0x18] sm:$0xff]
        %v563 = vld [vmem:[#allocation7 + $0x20] sm:$0xff]
        %v564 = vld [vmem:[#allocation7 + $0x28] sm:$0xff]
        %v565 = vld [vmem:[#allocation7 + $0x30] sm:$0xff]
        %v566 = vld [vmem:[#allocation7 + $0x38] sm:$0xff]
        %v567 = vld [vmem:[#allocation8] sm:$0x1]
        %v569 = vlaneseq
        %v570 = vshrl.u32 %v569, 7
        %v571 = vsub.s32 0, %v570
        %v572 = vrot.slane %v567, %v571
        %v575 = vsel %vm554, %v550, 0
        %v578 = vsel %vm554, %v551, 0
        %v581 = vsel %vm554, %v552, 0
        %v584 = vsel %vm554, %v553, 0
        %586 = vmatprep.subr.mxu0 0.0
        %587 = vmatpush1.msra.mxu0 0.0
        %588 = vmatprep.subr.mxu0 0.0
        %589 = vmatpush1.msra.mxu0 0.0
        %590 = vmatprep.subr.mxu0 0.0
        %591 = vmatpush1.msra.mxu0 0.0
        %592 = vmatprep.subr.mxu0 0.0
        %593 = vmatpush1.msra.mxu0 0.0
        %594 = vmatprep.subr.mxu0 0.0
        %595 = vmatpush1.msra.mxu0 0.0
        %596 = vmatprep.subr.mxu0 0.0
        %597 = vmatpush1.msra.mxu0 0.0
        %598 = vmatprep.subr.mxu0 0.0
        %599 = vmatpush1.msra.mxu0 0.0
        %600 = vmatprep.subr.mxu0 0.0
        %601 = vmatpush1.msra.mxu0 0.0
        %602 = vmatprep.subr.mxu0 0.0
        %603 = vmatpush1.msra.mxu0 %v566
        %604 = vmatprep.subr.mxu0 0.0
        %605 = vmatpush1.msra.mxu0 %v565
        %606 = vmatprep.subr.mxu0 0.0
        %607 = vmatpush1.msra.mxu0 %v564
        %608 = vmatprep.subr.mxu0 0.0
        %609 = vmatpush1.msra.mxu0 %v563
        %610 = vmatprep.subr.mxu0 0.0
        %611 = vmatpush1.msra.mxu0 %v562
        %612 = vmatprep.subr.mxu0 0.0
        %613 = vmatpush1.msra.mxu0 %v561
        %614 = vmatprep.subr.mxu0 0.0
        %615 = vmatpush1.msra.mxu0 %v560
        %616 = vmatprep.subr.mxu0 0.0
        %617 = vmatpush1.msra.mxu0 %v559
        %618 = vmatprep.subr.mxu0 0.0
        %619 = vmatpush2.msra.mxu0 0.0
        %620 = vmatprep.subr.mxu0 0.0
        %621 = vmatpush2.msra.mxu0 0.0
        %622 = vmatprep.subr.mxu0 0.0
        %623 = vmatpush2.msra.mxu0 0.0
        %624 = vmatprep.subr.mxu0 0.0
        %625 = vmatpush2.msra.mxu0 0.0
        %626 = vmatprep.subr.mxu0 0.0
        %627 = vmatpush2.msra.mxu0 0.0
        %628 = vmatprep.subr.mxu0 0.0
        %629 = vmatpush2.msra.mxu0 0.0
        %630 = vmatprep.subr.mxu0 0.0
        %631 = vmatpush2.msra.mxu0 0.0
        %632 = vmatprep.subr.mxu0 0.0
        %633 = vmatpush2.msra.mxu0 0.0
        %634 = vmatprep.subr.mxu0 0.0
        %635 = vmatpush2.msra.mxu0 0.0
        %636 = vmatprep.subr.mxu0 0.0
        %637 = vmatpush2.msra.mxu0 0.0
        %638 = vmatprep.subr.mxu0 0.0
        %639 = vmatpush2.msra.mxu0 0.0
        %640 = vmatprep.subr.mxu0 0.0
        %641 = vmatpush2.msra.mxu0 0.0
        %642 = vmatprep.subr.mxu0 0.0
        %643 = vmatpush2.msra.mxu0 0.0
        %644 = vmatprep.subr.mxu0 0.0
        %645 = vmatpush2.msra.mxu0 0.0
        %646 = vmatprep.subr.mxu0 0.0
        %647 = vmatpush2.msra.mxu0 0.0
        %648 = vmatprep.subr.mxu0 0.0
        %649 = vmatpush2.msra.mxu0 0.0
        %650 = vmatprep.mubr.f32.mxu0 0.0
        %651 = vmatmul.mubr.f32.gmra.mxu0 %v575
        %v652 = vpop.f32.mrf.mxu0
        %v653 = vadd.f32 %v572, %v652
        %v654 = vpop.f32.mrf.mxu0
        %655 = vmatprep.mubr.f32.mxu0 0.0
        %656 = vmatmul.mubr.f32.gmra.mxu0 %v578
        %v657 = vpop.f32.mrf.mxu0
        %v658 = vadd.f32 %v572, %v657
        %v659 = vpop.f32.mrf.mxu0
        %660 = vmatprep.mubr.f32.mxu0 0.0
        %661 = vmatmul.mubr.f32.gmra.mxu0 %v581
        %v662 = vpop.f32.mrf.mxu0
        %v663 = vadd.f32 %v572, %v662
        %v664 = vpop.f32.mrf.mxu0
        %665 = vmatprep.mubr.f32.mxu0 0.0
        %666 = vmatmul.mubr.f32.gmra.mxu0 %v584
        %v667 = vpop.f32.mrf.mxu0
        %v668 = vadd.f32 %v572, %v667
        %v669 = vpop.f32.mrf.mxu0
        %670 = vdwg.mxu0
        %v671 = vmax.f32 %v653, 0.0
        %v672 = vmax.f32 %v658, 0.0
        %v673 = vmax.f32 %v663, 0.0
        %v674 = vmax.f32 %v668, 0.0
        %v675 = vld [vmem:[#allocation10] sm:$0xff]
        %v676 = vld [vmem:[#allocation10 + $0x8] sm:$0xff]
        %v677 = vld [vmem:[#allocation10 + $0x10] sm:$0xff]
        %v678 = vld [vmem:[#allocation10 + $0x18] sm:$0xff]
        %v679 = vld [vmem:[#allocation10 + $0x20] sm:$0xff]
        %v680 = vld [vmem:[#allocation10 + $0x28] sm:$0xff]
        %v681 = vld [vmem:[#allocation10 + $0x30] sm:$0xff]
        %v682 = vld [vmem:[#allocation10 + $0x38] sm:$0xff]
        %v683 = vld [vmem:[#allocation10 + $0x40] sm:$0xff]
        %v684 = vld [vmem:[#allocation10 + $0x48] sm:$0xff]
        %v685 = vld [vmem:[#allocation10 + $0x50] sm:$0xff]
        %v686 = vld [vmem:[#allocation10 + $0x58] sm:$0xff]
        %v687 = vld [vmem:[#allocation10 + $0x60] sm:$0xff]
        %v688 = vld [vmem:[#allocation10 + $0x68] sm:$0xff]
        %v689 = vld [vmem:[#allocation10 + $0x70] sm:$0xff]
        %v690 = vld [vmem:[#allocation10 + $0x78] sm:$0xff]
        %v691 = vld [vmem:[#allocation10 + $0x80] sm:$0xff]
        %v692 = vld [vmem:[#allocation10 + $0x88] sm:$0xff]
        %v693 = vld [vmem:[#allocation10 + $0x90] sm:$0xff]
        %v694 = vld [vmem:[#allocation10 + $0x98] sm:$0xff]
        %v695 = vld [vmem:[#allocation10 + $0xa0] sm:$0xff]
        %v696 = vld [vmem:[#allocation10 + $0xa8] sm:$0xff]
        %v697 = vld [vmem:[#allocation10 + $0xb0] sm:$0xff]
        %v698 = vld [vmem:[#allocation10 + $0xb8] sm:$0xff]
        %v699 = vld [vmem:[#allocation10 + $0xc0] sm:$0xff]
        %v700 = vld [vmem:[#allocation10 + $0xc8] sm:$0xff]
        %v701 = vld [vmem:[#allocation10 + $0xd0] sm:$0xff]
        %v702 = vld [vmem:[#allocation10 + $0xd8] sm:$0xff]
        %v703 = vld [vmem:[#allocation10 + $0xe0] sm:$0xff]
        %v704 = vld [vmem:[#allocation10 + $0xe8] sm:$0xff]
        %v705 = vld [vmem:[#allocation10 + $0xf0] sm:$0xff]
        %v706 = vld [vmem:[#allocation10 + $0xf8] sm:$0xff]
        %v707 = vld [vmem:[#allocation10 + $0x100] sm:$0xff]
        %v708 = vld [vmem:[#allocation10 + $0x108] sm:$0xff]
        %v709 = vld [vmem:[#allocation10 + $0x110] sm:$0xff]
        %v710 = vld [vmem:[#allocation10 + $0x118] sm:$0xff]
        %v711 = vld [vmem:[#allocation10 + $0x120] sm:$0xff]
        %v712 = vld [vmem:[#allocation10 + $0x128] sm:$0xff]
        %v713 = vld [vmem:[#allocation10 + $0x130] sm:$0xff]
        %v714 = vld [vmem:[#allocation10 + $0x138] sm:$0xff]
        %v715 = vld [vmem:[#allocation10 + $0x140] sm:$0xff]
        %v716 = vld [vmem:[#allocation10 + $0x148] sm:$0xff]
        %v717 = vld [vmem:[#allocation10 + $0x150] sm:$0xff]
        %v718 = vld [vmem:[#allocation10 + $0x158] sm:$0xff]
        %v719 = vld [vmem:[#allocation10 + $0x160] sm:$0xff]
        %v720 = vld [vmem:[#allocation10 + $0x168] sm:$0xff]
        %v721 = vld [vmem:[#allocation10 + $0x170] sm:$0xff]
        %v722 = vld [vmem:[#allocation10 + $0x178] sm:$0xff]
        %v723 = vld [vmem:[#allocation10 + $0x180] sm:$0xff]
        %v724 = vld [vmem:[#allocation10 + $0x188] sm:$0xff]
        %v725 = vld [vmem:[#allocation10 + $0x190] sm:$0xff]
        %v726 = vld [vmem:[#allocation10 + $0x198] sm:$0xff]
        %v727 = vld [vmem:[#allocation10 + $0x1a0] sm:$0xff]
        %v728 = vld [vmem:[#allocation10 + $0x1a8] sm:$0xff]
        %v729 = vld [vmem:[#allocation10 + $0x1b0] sm:$0xff]
        %v730 = vld [vmem:[#allocation10 + $0x1b8] sm:$0xff]
        %v731 = vld [vmem:[#allocation10 + $0x1c0] sm:$0xff]
        %v732 = vld [vmem:[#allocation10 + $0x1c8] sm:$0xff]
        %v733 = vld [vmem:[#allocation10 + $0x1d0] sm:$0xff]
        %v734 = vld [vmem:[#allocation10 + $0x1d8] sm:$0xff]
        %v735 = vld [vmem:[#allocation10 + $0x1e0] sm:$0xff]
        %v736 = vld [vmem:[#allocation10 + $0x1e8] sm:$0xff]
        %v737 = vld [vmem:[#allocation10 + $0x1f0] sm:$0xff]
        %v738 = vld [vmem:[#allocation10 + $0x1f8] sm:$0xff]
        %v739 = vld [vmem:[#allocation10 + $0x200] sm:$0xff]
        %v740 = vld [vmem:[#allocation10 + $0x208] sm:$0xff]
        %v741 = vld [vmem:[#allocation10 + $0x210] sm:$0xff]
        %v742 = vld [vmem:[#allocation10 + $0x218] sm:$0xff]
        %v743 = vld [vmem:[#allocation10 + $0x220] sm:$0xff]
        %v744 = vld [vmem:[#allocation10 + $0x228] sm:$0xff]
        %v745 = vld [vmem:[#allocation10 + $0x230] sm:$0xff]
        %v746 = vld [vmem:[#allocation10 + $0x238] sm:$0xff]
        %v747 = vld [vmem:[#allocation10 + $0x240] sm:$0xff]
        %v748 = vld [vmem:[#allocation10 + $0x248] sm:$0xff]
        %v749 = vld [vmem:[#allocation10 + $0x250] sm:$0xff]
        %v750 = vld [vmem:[#allocation10 + $0x258] sm:$0xff]
        %v751 = vld [vmem:[#allocation10 + $0x260] sm:$0xff]
        %v752 = vld [vmem:[#allocation10 + $0x268] sm:$0xff]
        %v753 = vld [vmem:[#allocation10 + $0x270] sm:$0xff]
        %v754 = vld [vmem:[#allocation10 + $0x278] sm:$0xff]
        %v755 = vld [vmem:[#allocation10 + $0x280] sm:$0xff]
        %v756 = vld [vmem:[#allocation10 + $0x288] sm:$0xff]
        %v757 = vld [vmem:[#allocation10 + $0x290] sm:$0xff]
        %v758 = vld [vmem:[#allocation10 + $0x298] sm:$0xff]
        %v759 = vld [vmem:[#allocation10 + $0x2a0] sm:$0xff]
        %v760 = vld [vmem:[#allocation10 + $0x2a8] sm:$0xff]
        %v761 = vld [vmem:[#allocation10 + $0x2b0] sm:$0xff]
        %v762 = vld [vmem:[#allocation10 + $0x2b8] sm:$0xff]
        %v763 = vld [vmem:[#allocation10 + $0x2c0] sm:$0xff]
        %v764 = vld [vmem:[#allocation10 + $0x2c8] sm:$0xff]
        %v765 = vld [vmem:[#allocation10 + $0x2d0] sm:$0xff]
        %v766 = vld [vmem:[#allocation10 + $0x2d8] sm:$0xff]
        %v767 = vld [vmem:[#allocation10 + $0x2e0] sm:$0xff]
        %v768 = vld [vmem:[#allocation10 + $0x2e8] sm:$0xff]
        %v769 = vld [vmem:[#allocation10 + $0x2f0] sm:$0xff]
        %v770 = vld [vmem:[#allocation10 + $0x2f8] sm:$0xff]
        %v771 = vld [vmem:[#allocation10 + $0x300] sm:$0xff]
        %v772 = vld [vmem:[#allocation10 + $0x308] sm:$0xff]
        %v773 = vld [vmem:[#allocation10 + $0x310] sm:$0xff]
        %v774 = vld [vmem:[#allocation10 + $0x318] sm:$0xff]
        %v775 = vld [vmem:[#allocation10 + $0x320] sm:$0xff]
        %v776 = vld [vmem:[#allocation10 + $0x328] sm:$0xff]
        %v777 = vld [vmem:[#allocation10 + $0x330] sm:$0xff]
        %v778 = vld [vmem:[#allocation10 + $0x338] sm:$0xff]
        %v779 = vld [vmem:[#allocation10 + $0x340] sm:$0xff]
        %v780 = vld [vmem:[#allocation10 + $0x348] sm:$0xff]
        %v781 = vld [vmem:[#allocation10 + $0x350] sm:$0xff]
        %v782 = vld [vmem:[#allocation10 + $0x358] sm:$0xff]
        %v783 = vld [vmem:[#allocation10 + $0x360] sm:$0xff]
        %v784 = vld [vmem:[#allocation10 + $0x368] sm:$0xff]
        %v785 = vld [vmem:[#allocation10 + $0x370] sm:$0xff]
        %v786 = vld [vmem:[#allocation10 + $0x378] sm:$0xff]
        %v787 = vld [vmem:[#allocation10 + $0x380] sm:$0xff]
        %v788 = vld [vmem:[#allocation10 + $0x388] sm:$0xff]
        %v789 = vld [vmem:[#allocation10 + $0x390] sm:$0xff]
        %v790 = vld [vmem:[#allocation10 + $0x398] sm:$0xff]
        %v791 = vld [vmem:[#allocation10 + $0x3a0] sm:$0xff]
        %v792 = vld [vmem:[#allocation10 + $0x3a8] sm:$0xff]
        %v793 = vld [vmem:[#allocation10 + $0x3b0] sm:$0xff]
        %v794 = vld [vmem:[#allocation10 + $0x3b8] sm:$0xff]
        %v795 = vld [vmem:[#allocation10 + $0x3c0] sm:$0xff]
        %v796 = vld [vmem:[#allocation10 + $0x3c8] sm:$0xff]
        %v797 = vld [vmem:[#allocation10 + $0x3d0] sm:$0xff]
        %v798 = vld [vmem:[#allocation10 + $0x3d8] sm:$0xff]
        %v799 = vld [vmem:[#allocation10 + $0x3e0] sm:$0xff]
        %v800 = vld [vmem:[#allocation10 + $0x3e8] sm:$0xff]
        %v801 = vld [vmem:[#allocation10 + $0x3f0] sm:$0xff]
        %v802 = vld [vmem:[#allocation10 + $0x3f8] sm:$0xff]
        %v803 = vld [vmem:[#allocation11] sm:$0xff]
        %v805 = vlaneseq
        %v806 = vshrl.u32 %v805, 7
        %v807 = vsub.s32 0, %v806
        %v808 = vrot.slane %v803, %v807
        %v809 = vlaneseq
        %v810 = vshrl.u32 %v809, 7
        %v811 = vsub.s32 1, %v810
        %v812 = vrot.slane %v803, %v811
        %v813 = vlaneseq
        %v814 = vshrl.u32 %v813, 7
        %v815 = vsub.s32 2, %v814
        %v816 = vrot.slane %v803, %v815
        %v817 = vlaneseq
        %v818 = vshrl.u32 %v817, 7
        %v819 = vsub.s32 3, %v818
        %v820 = vrot.slane %v803, %v819
        %v821 = vlaneseq
        %v822 = vshrl.u32 %v821, 7
        %v823 = vsub.s32 4, %v822
        %v824 = vrot.slane %v803, %v823
        %v825 = vlaneseq
        %v826 = vshrl.u32 %v825, 7
        %v827 = vsub.s32 5, %v826
        %v828 = vrot.slane %v803, %v827
        %v829 = vlaneseq
        %v830 = vshrl.u32 %v829, 7
        %v831 = vsub.s32 6, %v830
        %v832 = vrot.slane %v803, %v831
        %v833 = vlaneseq
        %v834 = vshrl.u32 %v833, 7
        %v835 = vsub.s32 7, %v834
        %v836 = vrot.slane %v803, %v835
        %845 = vmatprep.subr.mxu0 %v796
        %846 = vmatpush1.msra.mxu0 %v795
        %847 = vmatprep.subr.mxu0 %v788
        %848 = vmatpush1.msra.mxu0 %v787
        %849 = vmatprep.subr.mxu0 %v780
        %850 = vmatpush1.msra.mxu0 %v779
        %851 = vmatprep.subr.mxu0 %v772
        %852 = vmatpush1.msra.mxu0 %v771
        %853 = vmatprep.subr.mxu0 %v764
        %854 = vmatpush1.msra.mxu0 %v763
        %855 = vmatprep.subr.mxu0 %v756
        %856 = vmatpush1.msra.mxu0 %v755
        %857 = vmatprep.subr.mxu0 %v748
        %858 = vmatpush1.msra.mxu0 %v747
        %859 = vmatprep.subr.mxu0 %v740
        %860 = vmatpush1.msra.mxu0 %v739
        %861 = vmatprep.subr.mxu0 %v732
        %862 = vmatpush1.msra.mxu0 %v731
        %863 = vmatprep.subr.mxu0 %v724
        %864 = vmatpush1.msra.mxu0 %v723
        %865 = vmatprep.subr.mxu0 %v716
        %866 = vmatpush1.msra.mxu0 %v715
        %867 = vmatprep.subr.mxu0 %v708
        %868 = vmatpush1.msra.mxu0 %v707
        %869 = vmatprep.subr.mxu0 %v700
        %870 = vmatpush1.msra.mxu0 %v699
        %871 = vmatprep.subr.mxu0 %v692
        %872 = vmatpush1.msra.mxu0 %v691
        %873 = vmatprep.subr.mxu0 %v684
        %874 = vmatpush1.msra.mxu0 %v683
        %875 = vmatprep.subr.mxu0 %v676
        %876 = vmatpush1.msra.mxu0 %v675
        %877 = vmatprep.subr.mxu0 0.0
        %878 = vmatpush2.msra.mxu0 0.0
        %879 = vmatprep.subr.mxu0 0.0
        %880 = vmatpush2.msra.mxu0 0.0
        %881 = vmatprep.subr.mxu0 0.0
        %882 = vmatpush2.msra.mxu0 0.0
        %883 = vmatprep.subr.mxu0 0.0
        %884 = vmatpush2.msra.mxu0 0.0
        %885 = vmatprep.subr.mxu0 0.0
        %886 = vmatpush2.msra.mxu0 0.0
        %887 = vmatprep.subr.mxu0 0.0
        %888 = vmatpush2.msra.mxu0 0.0
        %889 = vmatprep.subr.mxu0 0.0
        %890 = vmatpush2.msra.mxu0 0.0
        %891 = vmatprep.subr.mxu0 0.0
        %892 = vmatpush2.msra.mxu0 0.0
        %893 = vmatprep.subr.mxu0 0.0
        %894 = vmatpush2.msra.mxu0 0.0
        %895 = vmatprep.subr.mxu0 0.0
        %896 = vmatpush2.msra.mxu0 0.0
        %897 = vmatprep.subr.mxu0 0.0
        %898 = vmatpush2.msra.mxu0 0.0
        %899 = vmatprep.subr.mxu0 0.0
        %900 = vmatpush2.msra.mxu0 0.0
        %901 = vmatprep.subr.mxu0 0.0
        %902 = vmatpush2.msra.mxu0 0.0
        %903 = vmatprep.subr.mxu0 0.0
        %904 = vmatpush2.msra.mxu0 0.0
        %905 = vmatprep.subr.mxu0 0.0
        %906 = vmatpush2.msra.mxu0 0.0
        %907 = vmatprep.subr.mxu0 0.0
        %908 = vmatpush2.msra.mxu0 0.0
        %909 = vmatprep.mubr.f32.mxu0 0.0
        %910 = vmatmul.mubr.f32.gmra.mxu0 %v671
        %v911 = vpop.f32.mrf.mxu0
        %v912 = vadd.f32 %v808, %v911
        %v913 = vpop.f32.mrf.mxu0
        %v914 = vadd.f32 %v812, %v913
        %915 = vmatprep.mubr.f32.mxu0 0.0
        %916 = vmatmul.mubr.f32.gmra.mxu0 %v672
        %v917 = vpop.f32.mrf.mxu0
        %v918 = vadd.f32 %v808, %v917
        %v919 = vpop.f32.mrf.mxu0
        %v920 = vadd.f32 %v812, %v919
        %921 = vmatprep.mubr.f32.mxu0 0.0
        %922 = vmatmul.mubr.f32.gmra.mxu0 %v673
        %v923 = vpop.f32.mrf.mxu0
        %v924 = vadd.f32 %v808, %v923
        %v925 = vpop.f32.mrf.mxu0
        %v926 = vadd.f32 %v812, %v925
        %927 = vmatprep.mubr.f32.mxu0 0.0
        %928 = vmatmul.mubr.f32.gmra.mxu0 %v674
        %v929 = vpop.f32.mrf.mxu0
        %v930 = vadd.f32 %v808, %v929
        %v931 = vpop.f32.mrf.mxu0
        %v932 = vadd.f32 %v812, %v931
        %933 = vdwg.mxu0
        %934 = vmatprep.subr.mxu0 %v798
        %935 = vmatpush1.msra.mxu0 %v797
        %936 = vmatprep.subr.mxu0 %v790
        %937 = vmatpush1.msra.mxu0 %v789
        %938 = vmatprep.subr.mxu0 %v782
        %939 = vmatpush1.msra.mxu0 %v781
        %940 = vmatprep.subr.mxu0 %v774
        %941 = vmatpush1.msra.mxu0 %v773
        %942 = vmatprep.subr.mxu0 %v766
        %943 = vmatpush1.msra.mxu0 %v765
        %944 = vmatprep.subr.mxu0 %v758
        %945 = vmatpush1.msra.mxu0 %v757
        %946 = vmatprep.subr.mxu0 %v750
        %947 = vmatpush1.msra.mxu0 %v749
        %948 = vmatprep.subr.mxu0 %v742
        %949 = vmatpush1.msra.mxu0 %v741
        %950 = vmatprep.subr.mxu0 %v734
        %951 = vmatpush1.msra.mxu0 %v733
        %952 = vmatprep.subr.mxu0 %v726
        %953 = vmatpush1.msra.mxu0 %v725
        %954 = vmatprep.subr.mxu0 %v718
        %955 = vmatpush1.msra.mxu0 %v717
        %956 = vmatprep.subr.mxu0 %v710
        %957 = vmatpush1.msra.mxu0 %v709
        %958 = vmatprep.subr.mxu0 %v702
        %959 = vmatpush1.msra.mxu0 %v701
        %960 = vmatprep.subr.mxu0 %v694
        %961 = vmatpush1.msra.mxu0 %v693
        %962 = vmatprep.subr.mxu0 %v686
        %963 = vmatpush1.msra.mxu0 %v685
        %964 = vmatprep.subr.mxu0 %v678
        %965 = vmatpush1.msra.mxu0 %v677
        %966 = vmatprep.subr.mxu0 0.0
        %967 = vmatpush2.msra.mxu0 0.0
        %968 = vmatprep.subr.mxu0 0.0
        %969 = vmatpush2.msra.mxu0 0.0
        %970 = vmatprep.subr.mxu0 0.0
        %971 = vmatpush2.msra.mxu0 0.0
        %972 = vmatprep.subr.mxu0 0.0
        %973 = vmatpush2.msra.mxu0 0.0
        %974 = vmatprep.subr.mxu0 0.0
        %975 = vmatpush2.msra.mxu0 0.0
        %976 = vmatprep.subr.mxu0 0.0
        %977 = vmatpush2.msra.mxu0 0.0
        %978 = vmatprep.subr.mxu0 0.0
        %979 = vmatpush2.msra.mxu0 0.0
        %980 = vmatprep.subr.mxu0 0.0
        %981 = vmatpush2.msra.mxu0 0.0
        %982 = vmatprep.subr.mxu0 0.0
        %983 = vmatpush2.msra.mxu0 0.0
        %984 = vmatprep.subr.mxu0 0.0
        %985 = vmatpush2.msra.mxu0 0.0
        %986 = vmatprep.subr.mxu0 0.0
        %987 = vmatpush2.msra.mxu0 0.0
        %988 = vmatprep.subr.mxu0 0.0
        %989 = vmatpush2.msra.mxu0 0.0
        %990 = vmatprep.subr.mxu0 0.0
        %991 = vmatpush2.msra.mxu0 0.0
        %992 = vmatprep.subr.mxu0 0.0
        %993 = vmatpush2.msra.mxu0 0.0
        %994 = vmatprep.subr.mxu0 0.0
        %995 = vmatpush2.msra.mxu0 0.0
        %996 = vmatprep.subr.mxu0 0.0
        %997 = vmatpush2.msra.mxu0 0.0
        %998 = vmatprep.mubr.f32.mxu0 0.0
        %999 = vmatmul.mubr.f32.gmra.mxu0 %v671
        %v1000 = vpop.f32.mrf.mxu0
        %v1001 = vadd.f32 %v816, %v1000
        %v1002 = vpop.f32.mrf.mxu0
        %v1003 = vadd.f32 %v820, %v1002
        %1004 = vmatprep.mubr.f32.mxu0 0.0
        %1005 = vmatmul.mubr.f32.gmra.mxu0 %v672
        %v1006 = vpop.f32.mrf.mxu0
        %v1007 = vadd.f32 %v816, %v1006
        %v1008 = vpop.f32.mrf.mxu0
        %v1009 = vadd.f32 %v820, %v1008
        %1010 = vmatprep.mubr.f32.mxu0 0.0
        %1011 = vmatmul.mubr.f32.gmra.mxu0 %v673
        %v1012 = vpop.f32.mrf.mxu0
        %v1013 = vadd.f32 %v816, %v1012
        %v1014 = vpop.f32.mrf.mxu0
        %v1015 = vadd.f32 %v820, %v1014
        %1016 = vmatprep.mubr.f32.mxu0 0.0
        %1017 = vmatmul.mubr.f32.gmra.mxu0 %v674
        %v1018 = vpop.f32.mrf.mxu0
        %v1019 = vadd.f32 %v816, %v1018
        %v1020 = vpop.f32.mrf.mxu0
        %v1021 = vadd.f32 %v820, %v1020
        %1022 = vdwg.mxu0
        %1023 = vmatprep.subr.mxu0 %v800
        %1024 = vmatpush1.msra.mxu0 %v799
        %1025 = vmatprep.subr.mxu0 %v792
        %1026 = vmatpush1.msra.mxu0 %v791
        %1027 = vmatprep.subr.mxu0 %v784
        %1028 = vmatpush1.msra.mxu0 %v783
        %1029 = vmatprep.subr.mxu0 %v776
        %1030 = vmatpush1.msra.mxu0 %v775
        %1031 = vmatprep.subr.mxu0 %v768
        %1032 = vmatpush1.msra.mxu0 %v767
        %1033 = vmatprep.subr.mxu0 %v760
        %1034 = vmatpush1.msra.mxu0 %v759
        %1035 = vmatprep.subr.mxu0 %v752
        %1036 = vmatpush1.msra.mxu0 %v751
        %1037 = vmatprep.subr.mxu0 %v744
        %1038 = vmatpush1.msra.mxu0 %v743
        %1039 = vmatprep.subr.mxu0 %v736
        %1040 = vmatpush1.msra.mxu0 %v735
        %1041 = vmatprep.subr.mxu0 %v728
        %1042 = vmatpush1.msra.mxu0 %v727
        %1043 = vmatprep.subr.mxu0 %v720
        %1044 = vmatpush1.msra.mxu0 %v719
        %1045 = vmatprep.subr.mxu0 %v712
        %1046 = vmatpush1.msra.mxu0 %v711
        %1047 = vmatprep.subr.mxu0 %v704
        %1048 = vmatpush1.msra.mxu0 %v703
        %1049 = vmatprep.subr.mxu0 %v696
        %1050 = vmatpush1.msra.mxu0 %v695
        %1051 = vmatprep.subr.mxu0 %v688
        %1052 = vmatpush1.msra.mxu0 %v687
        %1053 = vmatprep.subr.mxu0 %v680
        %1054 = vmatpush1.msra.mxu0 %v679
        %1055 = vmatprep.subr.mxu0 0.0
        %1056 = vmatpush2.msra.mxu0 0.0
        %1057 = vmatprep.subr.mxu0 0.0
        %1058 = vmatpush2.msra.mxu0 0.0
        %1059 = vmatprep.subr.mxu0 0.0
        %1060 = vmatpush2.msra.mxu0 0.0
        %1061 = vmatprep.subr.mxu0 0.0
        %1062 = vmatpush2.msra.mxu0 0.0
        %1063 = vmatprep.subr.mxu0 0.0
        %1064 = vmatpush2.msra.mxu0 0.0
        %1065 = vmatprep.subr.mxu0 0.0
        %1066 = vmatpush2.msra.mxu0 0.0
        %1067 = vmatprep.subr.mxu0 0.0
        %1068 = vmatpush2.msra.mxu0 0.0
        %1069 = vmatprep.subr.mxu0 0.0
        %1070 = vmatpush2.msra.mxu0 0.0
        %1071 = vmatprep.subr.mxu0 0.0
        %1072 = vmatpush2.msra.mxu0 0.0
        %1073 = vmatprep.subr.mxu0 0.0
        %1074 = vmatpush2.msra.mxu0 0.0
        %1075 = vmatprep.subr.mxu0 0.0
        %1076 = vmatpush2.msra.mxu0 0.0
        %1077 = vmatprep.subr.mxu0 0.0
        %1078 = vmatpush2.msra.mxu0 0.0
        %1079 = vmatprep.subr.mxu0 0.0
        %1080 = vmatpush2.msra.mxu0 0.0
        %1081 = vmatprep.subr.mxu0 0.0
        %1082 = vmatpush2.msra.mxu0 0.0
        %1083 = vmatprep.subr.mxu0 0.0
        %1084 = vmatpush2.msra.mxu0 0.0
        %1085 = vmatprep.subr.mxu0 0.0
        %1086 = vmatpush2.msra.mxu0 0.0
        %1087 = vmatprep.mubr.f32.mxu0 0.0
        %1088 = vmatmul.mubr.f32.gmra.mxu0 %v671
        %v1089 = vpop.f32.mrf.mxu0
        %v1090 = vadd.f32 %v824, %v1089
        %v1091 = vpop.f32.mrf.mxu0
        %v1092 = vadd.f32 %v828, %v1091
        %1093 = vmatprep.mubr.f32.mxu0 0.0
        %1094 = vmatmul.mubr.f32.gmra.mxu0 %v672
        %v1095 = vpop.f32.mrf.mxu0
        %v1096 = vadd.f32 %v824, %v1095
        %v1097 = vpop.f32.mrf.mxu0
        %v1098 = vadd.f32 %v828, %v1097
        %1099 = vmatprep.mubr.f32.mxu0 0.0
        %1100 = vmatmul.mubr.f32.gmra.mxu0 %v673
        %v1101 = vpop.f32.mrf.mxu0
        %v1102 = vadd.f32 %v824, %v1101
        %v1103 = vpop.f32.mrf.mxu0
        %v1104 = vadd.f32 %v828, %v1103
        %1105 = vmatprep.mubr.f32.mxu0 0.0
        %1106 = vmatmul.mubr.f32.gmra.mxu0 %v674
        %v1107 = vpop.f32.mrf.mxu0
        %v1108 = vadd.f32 %v824, %v1107
        %v1109 = vpop.f32.mrf.mxu0
        %v1110 = vadd.f32 %v828, %v1109
        %1111 = vdwg.mxu0
        %1112 = vmatprep.subr.mxu0 %v802
        %1113 = vmatpush1.msra.mxu0 %v801
        %1114 = vmatprep.subr.mxu0 %v794
        %1115 = vmatpush1.msra.mxu0 %v793
        %1116 = vmatprep.subr.mxu0 %v786
        %1117 = vmatpush1.msra.mxu0 %v785
        %1118 = vmatprep.subr.mxu0 %v778
        %1119 = vmatpush1.msra.mxu0 %v777
        %1120 = vmatprep.subr.mxu0 %v770
        %1121 = vmatpush1.msra.mxu0 %v769
        %1122 = vmatprep.subr.mxu0 %v762
        %1123 = vmatpush1.msra.mxu0 %v761
        %1124 = vmatprep.subr.mxu0 %v754
        %1125 = vmatpush1.msra.mxu0 %v753
        %1126 = vmatprep.subr.mxu0 %v746
        %1127 = vmatpush1.msra.mxu0 %v745
        %1128 = vmatprep.subr.mxu0 %v738
        %1129 = vmatpush1.msra.mxu0 %v737
        %1130 = vmatprep.subr.mxu0 %v730
        %1131 = vmatpush1.msra.mxu0 %v729
        %1132 = vmatprep.subr.mxu0 %v722
        %1133 = vmatpush1.msra.mxu0 %v721
        %1134 = vmatprep.subr.mxu0 %v714
        %1135 = vmatpush1.msra.mxu0 %v713
        %1136 = vmatprep.subr.mxu0 %v706
        %1137 = vmatpush1.msra.mxu0 %v705
        %1138 = vmatprep.subr.mxu0 %v698
        %1139 = vmatpush1.msra.mxu0 %v697
        %1140 = vmatprep.subr.mxu0 %v690
        %1141 = vmatpush1.msra.mxu0 %v689
        %1142 = vmatprep.subr.mxu0 %v682
        %1143 = vmatpush1.msra.mxu0 %v681
        %1144 = vmatprep.subr.mxu0 0.0
        %1145 = vmatpush2.msra.mxu0 0.0
        %1146 = vmatprep.subr.mxu0 0.0
        %1147 = vmatpush2.msra.mxu0 0.0
        %1148 = vmatprep.subr.mxu0 0.0
        %1149 = vmatpush2.msra.mxu0 0.0
        %1150 = vmatprep.subr.mxu0 0.0
        %1151 = vmatpush2.msra.mxu0 0.0
        %1152 = vmatprep.subr.mxu0 0.0
        %1153 = vmatpush2.msra.mxu0 0.0
        %1154 = vmatprep.subr.mxu0 0.0
        %1155 = vmatpush2.msra.mxu0 0.0
        %1156 = vmatprep.subr.mxu0 0.0
        %1157 = vmatpush2.msra.mxu0 0.0
        %1158 = vmatprep.subr.mxu0 0.0
        %1159 = vmatpush2.msra.mxu0 0.0
        %1160 = vmatprep.subr.mxu0 0.0
        %1161 = vmatpush2.msra.mxu0 0.0
        %1162 = vmatprep.subr.mxu0 0.0
        %1163 = vmatpush2.msra.mxu0 0.0
        %1164 = vmatprep.subr.mxu0 0.0
        %1165 = vmatpush2.msra.mxu0 0.0
        %1166 = vmatprep.subr.mxu0 0.0
        %1167 = vmatpush2.msra.mxu0 0.0
        %1168 = vmatprep.subr.mxu0 0.0
        %1169 = vmatpush2.msra.mxu0 0.0
        %1170 = vmatprep.subr.mxu0 0.0
        %1171 = vmatpush2.msra.mxu0 0.0
        %1172 = vmatprep.subr.mxu0 0.0
        %1173 = vmatpush2.msra.mxu0 0.0
        %1174 = vmatprep.subr.mxu0 0.0
        %1175 = vmatpush2.msra.mxu0 0.0
        %1176 = vmatprep.mubr.f32.mxu0 0.0
        %1177 = vmatmul.mubr.f32.gmra.mxu0 %v671
        %v1178 = vpop.f32.mrf.mxu0
        %v1179 = vadd.f32 %v832, %v1178
        %v1180 = vpop.f32.mrf.mxu0
        %v1181 = vadd.f32 %v836, %v1180
        %1182 = vmatprep.mubr.f32.mxu0 0.0
        %1183 = vmatmul.mubr.f32.gmra.mxu0 %v672
        %v1184 = vpop.f32.mrf.mxu0
        %v1185 = vadd.f32 %v832, %v1184
        %v1186 = vpop.f32.mrf.mxu0
        %v1187 = vadd.f32 %v836, %v1186
        %1188 = vmatprep.mubr.f32.mxu0 0.0
        %1189 = vmatmul.mubr.f32.gmra.mxu0 %v673
        %v1190 = vpop.f32.mrf.mxu0
        %v1191 = vadd.f32 %v832, %v1190
        %v1192 = vpop.f32.mrf.mxu0
        %v1193 = vadd.f32 %v836, %v1192
        %1194 = vmatprep.mubr.f32.mxu0 0.0
        %1195 = vmatmul.mubr.f32.gmra.mxu0 %v674
        %v1196 = vpop.f32.mrf.mxu0
        %v1197 = vadd.f32 %v832, %v1196
        %v1198 = vpop.f32.mrf.mxu0
        %v1199 = vadd.f32 %v836, %v1198
        %1200 = vdwg.mxu0
        %p1201 = scmp.eq.s32.totalorder %s29, 0
        // Predicated region
        $region73: #{msn_forward.6} parent=47 // pred_check
          %p1202 = pneg %p1201
        $region74: #{msn_forward.6} parent=47 // pred_check_branch
          %1204 = sbr.rel (%p1202) target = $region76
        $region75: #{msn_forward.6} parent=47 // pred_region
          %1205 = vst [vmem:[#allocation2] sm:$0xff] -inf
        $region76: #{msn_forward.6} parent=47 // pred_fallthru
          _
        %v1206 = vld [vmem:[#allocation2] sm:$0xff]
        %v1207 = vmax.f32 %v912, %v918
        %v1208 = vmax.f32 %v1207, %v924
        %v1209 = vmax.f32 %v1208, %v930
        %v1210 = vrot.slane %v1209, 4
        %v1211 = vmax.f32 %v1209, %v1210
        %v1212 = vrot.slane %v1211, 2
        %v1213 = vmax.f32 %v1211, %v1212
        %v1214 = vrot.slane %v1213, 1
        %v1215 = vmax.f32 %v1213, %v1214
        %v1216 = vmax.f32 %v914, %v920
        %v1217 = vmax.f32 %v1216, %v926
        %v1218 = vmax.f32 %v1217, %v932
        %v1219 = vrot.slane %v1218, 4
        %v1220 = vmax.f32 %v1218, %v1219
        %v1221 = vrot.slane %v1220, 2
        %v1222 = vmax.f32 %v1220, %v1221
        %v1223 = vrot.slane %v1222, 1
        %v1224 = vmax.f32 %v1222, %v1223
        %v1225 = vmax.f32 %v1001, %v1007
        %v1226 = vmax.f32 %v1225, %v1013
        %v1227 = vmax.f32 %v1226, %v1019
        %v1228 = vrot.slane %v1227, 4
        %v1229 = vmax.f32 %v1227, %v1228
        %v1230 = vrot.slane %v1229, 2
        %v1231 = vmax.f32 %v1229, %v1230
        %v1232 = vrot.slane %v1231, 1
        %v1233 = vmax.f32 %v1231, %v1232
        %v1234 = vmax.f32 %v1003, %v1009
        %v1235 = vmax.f32 %v1234, %v1015
        %v1236 = vmax.f32 %v1235, %v1021
        %v1237 = vrot.slane %v1236, 4
        %v1238 = vmax.f32 %v1236, %v1237
        %v1239 = vrot.slane %v1238, 2
        %v1240 = vmax.f32 %v1238, %v1239
        %v1241 = vrot.slane %v1240, 1
        %v1242 = vmax.f32 %v1240, %v1241
        %v1243 = vmax.f32 %v1090, %v1096
        %v1244 = vmax.f32 %v1243, %v1102
        %v1245 = vmax.f32 %v1244, %v1108
        %v1246 = vrot.slane %v1245, 4
        %v1247 = vmax.f32 %v1245, %v1246
        %v1248 = vrot.slane %v1247, 2
        %v1249 = vmax.f32 %v1247, %v1248
        %v1250 = vrot.slane %v1249, 1
        %v1251 = vmax.f32 %v1249, %v1250
        %v1252 = vmax.f32 %v1092, %v1098
        %v1253 = vmax.f32 %v1252, %v1104
        %v1254 = vmax.f32 %v1253, %v1110
        %v1255 = vrot.slane %v1254, 4
        %v1256 = vmax.f32 %v1254, %v1255
        %v1257 = vrot.slane %v1256, 2
        %v1258 = vmax.f32 %v1256, %v1257
        %v1259 = vrot.slane %v1258, 1
        %v1260 = vmax.f32 %v1258, %v1259
        %v1261 = vmax.f32 %v1179, %v1185
        %v1262 = vmax.f32 %v1261, %v1191
        %v1263 = vmax.f32 %v1262, %v1197
        %v1264 = vrot.slane %v1263, 4
        %v1265 = vmax.f32 %v1263, %v1264
        %v1266 = vrot.slane %v1265, 2
        %v1267 = vmax.f32 %v1265, %v1266
        %v1268 = vrot.slane %v1267, 1
        %v1269 = vmax.f32 %v1267, %v1268
        %v1270 = vmax.f32 %v1181, %v1187
        %v1271 = vmax.f32 %v1270, %v1193
        %v1272 = vmax.f32 %v1271, %v1199
        %v1273 = vrot.slane %v1272, 4
        %v1274 = vmax.f32 %v1272, %v1273
        %v1275 = vrot.slane %v1274, 2
        %v1276 = vmax.f32 %v1274, %v1275
        %v1277 = vrot.slane %v1276, 1
        %v1278 = vmax.f32 %v1276, %v1277
        %v1287 = vcombine.low %v1215, %v1224
        %v1288 = vcombine.low %v1233, %v1242
        %v1289 = vcombine.low %v1251, %v1260
        %v1290 = vcombine.low %v1269, %v1278
        %v1292 = vunpack.c.l.s4 1966171168
        %v1293 = vunpack.c.0.s8 %v1292
        %v1294 = vlaneseq
        %v1295 = vshrl.u32 %v1294, 7
        %v1296 = vsub.s32 %v1293, %v1295
        %v1297 = vrot.slane %v1287, %v1296
        %v1299 = vunpack.c.l.s4 1966171168
        %v1300 = vunpack.c.0.s8 %v1299
        %v1301 = vlaneseq
        %v1302 = vshrl.u32 %v1301, 7
        %v1303 = vsub.s32 %v1300, %v1302
        %v1304 = vrot.slane %v1288, %v1303
        %v1306 = vunpack.c.l.s4 1966171168
        %v1307 = vunpack.c.0.s8 %v1306
        %v1308 = vlaneseq
        %v1309 = vshrl.u32 %v1308, 7
        %v1310 = vsub.s32 %v1307, %v1309
        %v1311 = vrot.slane %v1289, %v1310
        %v1313 = vunpack.c.l.s4 1966171168
        %v1314 = vunpack.c.0.s8 %v1313
        %v1315 = vlaneseq
        %v1316 = vshrl.u32 %v1315, 7
        %v1317 = vsub.s32 %v1314, %v1316
        %v1318 = vrot.slane %v1290, %v1317
        %v1319 = vcombine.low %v1297, %v1304
        %v1320 = vcombine.low %v1311, %v1318
        %v1322 = vunpack.c.l.s4 1966171168
        %v1323 = vunpack.c.0.s8 %v1322
        %v1324 = vlaneseq
        %v1325 = vshrl.u32 %v1324, 7
        %v1326 = vsub.s32 %v1323, %v1325
        %v1327 = vrot.slane %v1319, %v1326
        %v1329 = vunpack.c.l.s4 1966171168
        %v1330 = vunpack.c.0.s8 %v1329
        %v1331 = vlaneseq
        %v1332 = vshrl.u32 %v1331, 7
        %v1333 = vsub.s32 %v1330, %v1332
        %v1334 = vrot.slane %v1320, %v1333
        %v1335 = vcombine.low %v1327, %v1334
        %v1337 = vmax.f32 %v1206, %v1335
        %1338 = vst [vmem:[#allocation2] sm:$0xff] %v1337
        // Predicated region
        $region77: #{msn_forward.6} parent=47 // pred_check
          %p1339 = pneg %p1201
        $region78: #{msn_forward.6} parent=47 // pred_check_branch
          %1341 = sbr.rel (%p1339) target = $region80
        $region79: #{msn_forward.6} parent=47 // pred_region
          %v1342 = vld [vmem:[#allocation2] sm:$0xff]
          %1343 = vst [vmem:[%s435] sm:$0xff] %v1342
        $region80: #{msn_forward.6} parent=47 // pred_fallthru
          _
        %s1344 = smul.u32 4, %s29
        %p1345 = scmp.lt.s32.totalorder %s28, 1
        %s1346 = scalar_select %p1345, %s28, 1
        %p1347 = scmp.lt.s32.totalorder %s1344, 3
        %s1348 = scalar_select %p1347, %s1344, 3
        %s1349 = smul.addr %s1346, 4
        %s1350 = sadd.s32 %s1348, %s1349
        %s1351 = smul.addr %s1350, 8
        %s1352 = scalar_lea.vmem %s7, %s1351
        %p1353 = scmp.lt.s32.totalorder %s28, 1
        %s1354 = scalar_select %p1353, %s28, 1
        %s1355 = smul.addr %s1354, 8
        %s1356 = scalar_lea.vmem %s8, %s1355
        // Predicated region
        $region81: #{msn_forward.6} parent=47 // pred_check
          %p1357 = pneg %p210
        $region82: #{msn_forward.6} parent=47 // pred_check_branch
          %1359 = sbr.rel (%p1357) target = $region84
        $region83: #{msn_forward.6} parent=47 // pred_region
          %s1360 = smul.u32 4, %s29
        $region84: #{msn_forward.6} parent=47 // pred_fallthru
          _
        // Predicated region
        $region85: #{msn_forward.6} parent=47 // pred_check
          %p1361 = pneg %p236
        $region86: #{msn_forward.6} parent=47 // pred_check_branch
          %1363 = sbr.rel (%p1361) target = $region88
        $region87: #{msn_forward.6} parent=47 // pred_region
          _
        $region88: #{msn_forward.6} parent=47 // pred_fallthru
          _
      $region48: #{msn_forward.6} parent=5 // pred_fallthru
        _
      %p1364 = scmp.le.s32.totalorder 2, %s19
      // Predicated region
      $region89: #{msn_forward.6} parent=5 // pred_check
        %p1365 = pneg %p1364
      $region90: #{msn_forward.6} parent=5 // pred_check_branch
        %1367 = sbr.rel (%p1365) target = $region92
      $region91: #{msn_forward.6} parent=5 // pred_region
        %s1368 = ssub.s32 %s19, 2
        // Predicated region
        $region93: #{msn_forward.6} parent=91 // pred_check
          %p1369 = pneg %p216
        $region94: #{msn_forward.6} parent=91 // pred_check_branch
          %1371 = sbr.rel (%p1369) target = $region96
        $region95: #{msn_forward.6} parent=91 // pred_region
          %s1372 = smul.u32 4, %s31
          %p1373 = scmp.lt.s32.totalorder %s30, 1
          %s1374 = scalar_select %p1373, %s30, 1
          %p1375 = scmp.lt.s32.totalorder %s1372, 3
          %s1376 = scalar_select %p1375, %s1372, 3
          %s1377 = smul.addr %s1374, 4
          %s1378 = sadd.s32 %s1376, %s1377
          %s1379 = smul.addr %s1378, 8
          %s1380 = scalar_lea.vmem %s7, %s1379
        $region96: #{msn_forward.6} parent=91 // pred_fallthru
          _
        // Predicated region
        $region97: #{msn_forward.6} parent=91 // pred_check
          %p1381 = pneg %p242
        $region98: #{msn_forward.6} parent=91 // pred_check_branch
          %1383 = sbr.rel (%p1381) target = $region100
        $region99: #{msn_forward.6} parent=91 // pred_region
          %p1384 = scmp.lt.s32.totalorder %s30, 1
          %s1385 = scalar_select %p1384, %s30, 1
          %s1386 = smul.addr %s1385, 8
          %s1387 = scalar_lea.vmem %s8, %s1386
        $region100: #{msn_forward.6} parent=91 // pred_fallthru
          _
      $region92: #{msn_forward.6} parent=5 // pred_fallthru
        _
    $region6: #{msn_forward.6} parent=1 // loop_footer
      %s23 = sadd.s32 1, %s19
    $region7: #{msn_forward.6} parent=1 // loop_footer_branch
      %18 = sbr.rel target = $region3
    $region8: #{msn_forward.6} parent=1 // loop_exit
      _
    %1388 = vsyncpa [#allocation4], 1
    %s1389 = scalar_lea.sflag [#allocation4], 1
    %1390 = vsyncpa %s1389, 1
    %1391 = vsyncpa [#allocation6], 1
    %1392 = vsyncpa [#allocation9], 1
    %1393 = vsyncpa [#allocation12], 1

// kernel: msn_forward.7
$region0: #{msn_forward.7}
  #allocation0 [shape = 'u32[]', space=smem, size = 0x4, offset = 0x4, fixed_abs, tag = 'smem constant byte address 0x4 - core index']
  #allocation1 [shape = 'u32[144,128]{1,0:T(1,128)}', space=vmem, size = 0x12000, scoped, tag = 'internal scratch']
  %s0 = inlined_call_operand.vmem [shape: f32[2,32,64], index: 0, kind: input, shape index: {}]
  %s1 = inlined_call_operand.vmem [shape: f32[2,1,512], index: 1, kind: input, shape index: {}]
  %s2 = inlined_call_operand.vmem [shape: f32[64,512], index: 2, kind: input, shape index: {}]
  %s3 = inlined_call_operand.vmem [shape: f32[512,256], index: 3, kind: input, shape index: {}]
  %s4 = inlined_call_operand.vmem [shape: f32[1,256], index: 4, kind: input, shape index: {}]
  %s5 = inlined_call_operand.vmem [shape: f32[256,128], index: 5, kind: input, shape index: {}]
  %s6 = inlined_call_operand.vmem [shape: f32[1,128], index: 6, kind: input, shape index: {}]
  %s7 = inlined_call_operand.vmem [shape: f32[128,3], index: 7, kind: input, shape index: {}]
  %s8 = inlined_call_operand.vmem [shape: f32[1,3], index: 8, kind: input, shape index: {}]
  %s9 = inlined_call_operand.vmem [shape: f32[2,32,3], index: 9, kind: output, shape index: {}]
  %s10 = sld [smem:[#allocation0]]
  $region69: #{msn_forward.7} parent=0
    _
  %s12 = ssub.s32 1, %s10
  %s13 = scalar_select 0, %s12, %s10
  loop: start=0, step=1, limit=4
  $region2: #{msn_forward.7} parent=0 // loop_pre_header
    _
  $region3: #{msn_forward.7} parent=0 // loop_header
    %s15 = sphi 0, %s19
    %p16 = scmp.ge.s32.totalorder %s15, 4
    %s22 = sphi 0, %s34
    %s23 = sphi 0, %s30
    %s24 = sphi 0, %s22
    %s25 = sphi 0, %s23
    %s26 = sphi 0, %s24
    %s27 = sphi 0, %s25
    %s39 = sphi 0, %s41
    %s42 = sphi 0, %s39
    %s43 = sphi 0, %s42
    %s59 = sphi 0, %s43
    %s65 = sphi 0, %s67
    %s68 = sphi 0, %s65
    %s69 = sphi 0, %s68
    %s85 = sphi 0, %s69
    %s89 = sphi 0, %s89
    %s91 = sphi 0, %s89
    %s92 = sphi 0, %s91
    %s106 = sphi 0, %s92
    %s110 = sphi 0, %s110
    %s112 = sphi 0, %s110
    %s113 = sphi 0, %s112
    %s127 = sphi 0, %s113
    %s131 = sphi 0, %s131
    %s133 = sphi 0, %s131
    %s134 = sphi 0, %s133
    %s148 = sphi 0, %s134
    %s152 = sphi 0, %s152
    %s154 = sphi 0, %s152
    %s155 = sphi 0, %s154
    %s169 = sphi 0, %s155
    %s173 = sphi 0, %s173
    %s175 = sphi 0, %s173
    %s176 = sphi 0, %s175
    %s190 = sphi 0, %s176
    %s194 = sphi 0, %s194
    %s196 = sphi 0, %s194
    %s197 = sphi 0, %s196
    %s211 = sphi 0, %s197
    %s215 = sphi 0, %s215
    %s217 = sphi 0, %s215
    %s218 = sphi 0, %s217
    %s232 = sphi 0, %s218
    %s240 = sphi 0, %s242
    %s243 = sphi 0, %s240
    %s244 = sphi 0, %s243
    %s260 = sphi 0, %s244
  $region4: #{msn_forward.7} parent=0 // loop_header_branch
    %18 = sbr.rel (%p16) target = $region8
  $region5: #{msn_forward.7} parent=0 // loop_body
    %s20 = ssub.s32 %s15, 1
    %s21 = ssub.s32 %s15, 2
    %s28 = sadd.s32 1, %s23
    %p29 = scmp.ge.s32.totalorder %s28, 1
    %s30 = scalar_select %p29, 0, %s28
    %s31 = sadd.s32 1, %s22
    %s32 = scalar_select %p29, %s31, %s22
    %p33 = scmp.ge.s32.totalorder %s32, 2
    %s34 = scalar_select %p33, 0, %s32
    %s35 = ssub.s32 %s22, %s34
    %s36 = ssub.s32 %s23, %s30
    %s37 = sor.u32 %s35, %s36
    %p38 = scmp.eq.s32.totalorder %s37, 0
    %s40 = sadd.s32 %s39, 1
    %s41 = scalar_select %p38, %s39, %s40
    %p44 = pneg %p38
    %p45 = scmp.eq.s32.totalorder %s15, 1
    %p46 = por %p44, %p45
    %p47 = scmp.ne.s32.totalorder %s39, %s42
    %p48 = scmp.eq.s32.totalorder %s15, 0
    %p49 = por %p47, %p48
    %p50 = scmp.ne.s32.totalorder %s39, %s42
    %p51 = scmp.eq.s32.totalorder %s20, 1
    %p52 = por %p50, %p51
    %p53 = scmp.ne.s32.totalorder %s42, %s43
    %p54 = scmp.eq.s32.totalorder %s20, 0
    %p55 = por %p53, %p54
    %p56 = scmp.ne.s32.totalorder %s42, %s43
    %p57 = scmp.eq.s32.totalorder %s21, 1
    %p58 = por %p56, %p57
    %p60 = scmp.ne.s32.totalorder %s43, %s59
    %p61 = scmp.eq.s32.totalorder %s21, 0
    %p62 = por %p60, %p61
    %s63 = ssub.s32 %s22, %s34
    %p64 = scmp.eq.s32.totalorder %s63, 0
    %s66 = sadd.s32 %s65, 1
    %s67 = scalar_select %p64, %s65, %s66
    %p70 = pneg %p64
    %p71 = scmp.eq.s32.totalorder %s15, 1
    %p72 = por %p70, %p71
    %p73 = scmp.ne.s32.totalorder %s65, %s68
    %p74 = scmp.eq.s32.totalorder %s15, 0
    %p75 = por %p73, %p74
    %p76 = scmp.ne.s32.totalorder %s65, %s68
    %p77 = scmp.eq.s32.totalorder %s20, 1
    %p78 = por %p76, %p77
    %p79 = scmp.ne.s32.totalorder %s68, %s69
    %p80 = scmp.eq.s32.totalorder %s20, 0
    %p81 = por %p79, %p80
    %p82 = scmp.ne.s32.totalorder %s68, %s69
    %p83 = scmp.eq.s32.totalorder %s21, 1
    %p84 = por %p82, %p83
    %p86 = scmp.ne.s32.totalorder %s69, %s85
    %p87 = scmp.eq.s32.totalorder %s21, 0
    %p88 = por %p86, %p87
    %s90 = sadd.s32 %s89, 1
    %p93 = scmp.eq.s32.totalorder %s15, 1
    %p94 = scmp.ne.s32.totalorder %s89, %s91
    %p95 = scmp.eq.s32.totalorder %s15, 0
    %p96 = por %p94, %p95
    %p97 = scmp.ne.s32.totalorder %s89, %s91
    %p98 = scmp.eq.s32.totalorder %s20, 1
    %p99 = por %p97, %p98
    %p100 = scmp.ne.s32.totalorder %s91, %s92
    %p101 = scmp.eq.s32.totalorder %s20, 0
    %p102 = por %p100, %p101
    %p103 = scmp.ne.s32.totalorder %s91, %s92
    %p104 = scmp.eq.s32.totalorder %s21, 1
    %p105 = por %p103, %p104
    %p107 = scmp.ne.s32.totalorder %s92, %s106
    %p108 = scmp.eq.s32.totalorder %s21, 0
    %p109 = por %p107, %p108
    %s111 = sadd.s32 %s110, 1
    %p114 = scmp.eq.s32.totalorder %s15, 1
    %p115 = scmp.ne.s32.totalorder %s110, %s112
    %p116 = scmp.eq.s32.totalorder %s15, 0
    %p117 = por %p115, %p116
    %p118 = scmp.ne.s32.totalorder %s110, %s112
    %p119 = scmp.eq.s32.totalorder %s20, 1
    %p120 = por %p118, %p119
    %p121 = scmp.ne.s32.totalorder %s112, %s113
    %p122 = scmp.eq.s32.totalorder %s20, 0
    %p123 = por %p121, %p122
    %p124 = scmp.ne.s32.totalorder %s112, %s113
    %p125 = scmp.eq.s32.totalorder %s21, 1
    %p126 = por %p124, %p125
    %p128 = scmp.ne.s32.totalorder %s113, %s127
    %p129 = scmp.eq.s32.totalorder %s21, 0
    %p130 = por %p128, %p129
    %s132 = sadd.s32 %s131, 1
    %p135 = scmp.eq.s32.totalorder %s15, 1
    %p136 = scmp.ne.s32.totalorder %s131, %s133
    %p137 = scmp.eq.s32.totalorder %s15, 0
    %p138 = por %p136, %p137
    %p139 = scmp.ne.s32.totalorder %s131, %s133
    %p140 = scmp.eq.s32.totalorder %s20, 1
    %p141 = por %p139, %p140
    %p142 = scmp.ne.s32.totalorder %s133, %s134
    %p143 = scmp.eq.s32.totalorder %s20, 0
    %p144 = por %p142, %p143
    %p145 = scmp.ne.s32.totalorder %s133, %s134
    %p146 = scmp.eq.s32.totalorder %s21, 1
    %p147 = por %p145, %p146
    %p149 = scmp.ne.s32.totalorder %s134, %s148
    %p150 = scmp.eq.s32.totalorder %s21, 0
    %p151 = por %p149, %p150
    %s153 = sadd.s32 %s152, 1
    %p156 = scmp.eq.s32.totalorder %s15, 1
    %p157 = scmp.ne.s32.totalorder %s152, %s154
    %p158 = scmp.eq.s32.totalorder %s15, 0
    %p159 = por %p157, %p158
    %p160 = scmp.ne.s32.totalorder %s152, %s154
    %p161 = scmp.eq.s32.totalorder %s20, 1
    %p162 = por %p160, %p161
    %p163 = scmp.ne.s32.totalorder %s154, %s155
    %p164 = scmp.eq.s32.totalorder %s20, 0
    %p165 = por %p163, %p164
    %p166 = scmp.ne.s32.totalorder %s154, %s155
    %p167 = scmp.eq.s32.totalorder %s21, 1
    %p168 = por %p166, %p167
    %p170 = scmp.ne.s32.totalorder %s155, %s169
    %p171 = scmp.eq.s32.totalorder %s21, 0
    %p172 = por %p170, %p171
    %s174 = sadd.s32 %s173, 1
    %p177 = scmp.eq.s32.totalorder %s15, 1
    %p178 = scmp.ne.s32.totalorder %s173, %s175
    %p179 = scmp.eq.s32.totalorder %s15, 0
    %p180 = por %p178, %p179
    %p181 = scmp.ne.s32.totalorder %s173, %s175
    %p182 = scmp.eq.s32.totalorder %s20, 1
    %p183 = por %p181, %p182
    %p184 = scmp.ne.s32.totalorder %s175, %s176
    %p185 = scmp.eq.s32.totalorder %s20, 0
    %p186 = por %p184, %p185
    %p187 = scmp.ne.s32.totalorder %s175, %s176
    %p188 = scmp.eq.s32.totalorder %s21, 1
    %p189 = por %p187, %p188
    %p191 = scmp.ne.s32.totalorder %s176, %s190
    %p192 = scmp.eq.s32.totalorder %s21, 0
    %p193 = por %p191, %p192
    %s195 = sadd.s32 %s194, 1
    %p198 = scmp.eq.s32.totalorder %s15, 1
    %p199 = scmp.ne.s32.totalorder %s194, %s196
    %p200 = scmp.eq.s32.totalorder %s15, 0
    %p201 = por %p199, %p200
    %p202 = scmp.ne.s32.totalorder %s194, %s196
    %p203 = scmp.eq.s32.totalorder %s20, 1
    %p204 = por %p202, %p203
    %p205 = scmp.ne.s32.totalorder %s196, %s197
    %p206 = scmp.eq.s32.totalorder %s20, 0
    %p207 = por %p205, %p206
    %p208 = scmp.ne.s32.totalorder %s196, %s197
    %p209 = scmp.eq.s32.totalorder %s21, 1
    %p210 = por %p208, %p209
    %p212 = scmp.ne.s32.totalorder %s197, %s211
    %p213 = scmp.eq.s32.totalorder %s21, 0
    %p214 = por %p212, %p213
    %s216 = sadd.s32 %s215, 1
    %p219 = scmp.eq.s32.totalorder %s15, 1
    %p220 = scmp.ne.s32.totalorder %s215, %s217
    %p221 = scmp.eq.s32.totalorder %s15, 0
    %p222 = por %p220, %p221
    %p223 = scmp.ne.s32.totalorder %s215, %s217
    %p224 = scmp.eq.s32.totalorder %s20, 1
    %p225 = por %p223, %p224
    %p226 = scmp.ne.s32.totalorder %s217, %s218
    %p227 = scmp.eq.s32.totalorder %s20, 0
    %p228 = por %p226, %p227
    %p229 = scmp.ne.s32.totalorder %s217, %s218
    %p230 = scmp.eq.s32.totalorder %s21, 1
    %p231 = por %p229, %p230
    %p233 = scmp.ne.s32.totalorder %s218, %s232
    %p234 = scmp.eq.s32.totalorder %s21, 0
    %p235 = por %p233, %p234
    %s236 = ssub.s32 %s22, %s34
    %s237 = ssub.s32 %s23, %s30
    %s238 = sor.u32 %s236, %s237
    %p239 = scmp.eq.s32.totalorder %s238, 0
    %s241 = sadd.s32 %s240, 1
    %s242 = scalar_select %p239, %s240, %s241
    %p245 = pneg %p239
    %p246 = scmp.eq.s32.totalorder %s15, 1
    %p247 = por %p245, %p246
    %p248 = scmp.ne.s32.totalorder %s240, %s243
    %p249 = scmp.eq.s32.totalorder %s15, 0
    %p250 = por %p248, %p249
    %p251 = scmp.ne.s32.totalorder %s240, %s243
    %p252 = scmp.eq.s32.totalorder %s20, 1
    %p253 = por %p251, %p252
    %p254 = scmp.ne.s32.totalorder %s243, %s244
    %p255 = scmp.eq.s32.totalorder %s20, 0
    %p256 = por %p254, %p255
    %p257 = scmp.ne.s32.totalorder %s243, %s244
    %p258 = scmp.eq.s32.totalorder %s21, 1
    %p259 = por %p257, %p258
    %p261 = scmp.ne.s32.totalorder %s244, %s260
    %p262 = scmp.eq.s32.totalorder %s21, 0
    %p263 = por %p261, %p262
    %p264 = scmp.le.s32.totalorder 1, %s15
    %p265 = scmp.lt.s32.totalorder %s15, 3
    %p266 = pnand %p264, %p265
    %p267 = pneg %p266
    // Predicated region
    $region9: #{msn_forward.7} parent=5 // pred_check
      _
    $region10: #{msn_forward.7} parent=5 // pred_check_branch
      %269 = sbr.rel (%p266) target = $region12
    $region11: #{msn_forward.7} parent=5 // pred_region
      %s270 = ssub.s32 %s15, 1
      // Predicated region
      $region13: #{msn_forward.7} parent=11 // pred_check
        %p271 = pneg %p102
      $region14: #{msn_forward.7} parent=11 // pred_check_branch
        %273 = sbr.rel (%p271) target = $region16
      $region15: #{msn_forward.7} parent=11 // pred_region
        _
      $region16: #{msn_forward.7} parent=11 // pred_fallthru
        _
      // Predicated region
      $region17: #{msn_forward.7} parent=11 // pred_check
        %p274 = pneg %p123
      $region18: #{msn_forward.7} parent=11 // pred_check_branch
        %276 = sbr.rel (%p274) target = $region20
      $region19: #{msn_forward.7} parent=11 // pred_region
        _
      $region20: #{msn_forward.7} parent=11 // pred_fallthru
        _
      // Predicated region
      $region21: #{msn_forward.7} parent=11 // pred_check
        %p277 = pneg %p144
      $region22: #{msn_forward.7} parent=11 // pred_check_branch
        %279 = sbr.rel (%p277) target = $region24
      $region23: #{msn_forward.7} parent=11 // pred_region
        _
      $region24: #{msn_forward.7} parent=11 // pred_fallthru
        _
      // Predicated region
      $region25: #{msn_forward.7} parent=11 // pred_check
        %p280 = pneg %p165
      $region26: #{msn_forward.7} parent=11 // pred_check_branch
        %282 = sbr.rel (%p280) target = $region28
      $region27: #{msn_forward.7} parent=11 // pred_region
        _
      $region28: #{msn_forward.7} parent=11 // pred_fallthru
        _
      // Predicated region
      $region29: #{msn_forward.7} parent=11 // pred_check
        %p283 = pneg %p186
      $region30: #{msn_forward.7} parent=11 // pred_check_branch
        %285 = sbr.rel (%p283) target = $region32
      $region31: #{msn_forward.7} parent=11 // pred_region
        _
      $region32: #{msn_forward.7} parent=11 // pred_fallthru
        _
      // Predicated region
      $region33: #{msn_forward.7} parent=11 // pred_check
        %p286 = pneg %p207
      $region34: #{msn_forward.7} parent=11 // pred_check_branch
        %288 = sbr.rel (%p286) target = $region36
      $region35: #{msn_forward.7} parent=11 // pred_region
        _
      $region36: #{msn_forward.7} parent=11 // pred_fallthru
        _
      // Predicated region
      $region37: #{msn_forward.7} parent=11 // pred_check
        %p289 = pneg %p228
      $region38: #{msn_forward.7} parent=11 // pred_check_branch
        %291 = sbr.rel (%p289) target = $region40
      $region39: #{msn_forward.7} parent=11 // pred_region
        _
      $region40: #{msn_forward.7} parent=11 // pred_fallthru
        _
    $region12: #{msn_forward.7} parent=5 // pred_fallthru
      _
    %p292 = scmp.lt.s32.totalorder %s15, 2
    // Predicated region
    $region41: #{msn_forward.7} parent=5 // pred_check
      %p293 = pneg %p292
    $region42: #{msn_forward.7} parent=5 // pred_check_branch
      %295 = sbr.rel (%p293) target = $region44
    $region43: #{msn_forward.7} parent=5 // pred_region
      // Predicated region
      $region45: #{msn_forward.7} parent=43 // pred_check
        %p296 = pneg %p49
      $region46: #{msn_forward.7} parent=43 // pred_check_branch
        %298 = sbr.rel (%p296) target = $region48
      $region47: #{msn_forward.7} parent=43 // pred_region
        %s299 = smul.u32 4, %s23
        %p300 = scmp.lt.s32.totalorder %s22, 1
        %s301 = scalar_select %p300, %s22, 1
        %p302 = scmp.lt.s32.totalorder %s299, 3
        %s303 = scalar_select %p302, %s299, 3
        %s304 = smul.addr %s301, 4
        %s305 = sadd.s32 %s303, %s304
        %s306 = smul.addr %s305, 8
        %s307 = scalar_lea.vmem %s0, %s306
        %s308 = smul.u32 4, %s23
      $region48: #{msn_forward.7} parent=43 // pred_fallthru
        _
      // Predicated region
      $region49: #{msn_forward.7} parent=43 // pred_check
        %p309 = pneg %p75
      $region50: #{msn_forward.7} parent=43 // pred_check_branch
        %311 = sbr.rel (%p309) target = $region52
      $region51: #{msn_forward.7} parent=43 // pred_region
        %p312 = scmp.lt.s32.totalorder %s22, 1
        %s313 = scalar_select %p312, %s22, 1
        %s314 = smul.addr %s313, 4
        %s315 = scalar_lea.vmem %s1, %s314
      $region52: #{msn_forward.7} parent=43 // pred_fallthru
        _
    $region44: #{msn_forward.7} parent=5 // pred_fallthru
      _
    %p316 = scmp.le.s32.totalorder 1, %s15
    %p317 = scmp.lt.s32.totalorder %s15, 3
    %p318 = pnand %p316, %p317
    %p319 = pneg %p318
    // Predicated region
    $region53: #{msn_forward.7} parent=5 // pred_check
      _
    $region54: #{msn_forward.7} parent=5 // pred_check_branch
      %321 = sbr.rel (%p318) target = $region56
    $region55: #{msn_forward.7} parent=5 // pred_region
      %s322 = ssub.s32 %s15, 1
      %s323 = smul.u32 4, %s25
      %p324 = scmp.lt.s32.totalorder %s24, 1
      %s325 = scalar_select %p324, %s24, 1
      %p326 = scmp.lt.s32.totalorder %s323, 3
      %s327 = scalar_select %p326, %s323, 3
      %s328 = smul.addr %s325, 4
      %s329 = sadd.s32 %s327, %s328
      %s330 = smul.addr %s329, 8
      %s331 = scalar_lea.vmem %s0, %s330
      %p332 = pneg %p55
      %p333 = pneg %p52
      %p334 = scmp.lt.s32.totalorder %s24, 1
      %s335 = scalar_select %p334, %s24, 1
      %s336 = smul.addr %s335, 4
      %s337 = scalar_lea.vmem %s1, %s336
      %p338 = pneg %p81
      %p339 = pneg %p78
      %p340 = pneg %p102
      %p341 = pneg %p99
      %p342 = pneg %p123
      %p343 = pneg %p120
      %p344 = pneg %p144
      %p345 = pneg %p141
      %p346 = pneg %p165
      %p347 = pneg %p162
      %p348 = pneg %p186
      %p349 = pneg %p183
      %p350 = pneg %p207
      %p351 = pneg %p204
      %p352 = pneg %p228
      %p353 = pneg %p225
      %p354 = pneg %p256
      %p355 = pneg %p253
      %s356 = smul.u32 4, %s25
      %p357 = scmp.lt.s32.totalorder %s24, 1
      %s358 = scalar_select %p357, %s24, 1
      %p359 = scmp.lt.s32.totalorder %s356, 3
      %s360 = scalar_select %p359, %s356, 3
      %s361 = smul.addr %s358, 4
      %s362 = sadd.s32 %s360, %s361
      %s363 = smul.addr %s362, 8
      %s364 = scalar_lea.vmem %s9, %s363
      %s365 = smul.u32 4, %s25
      %p366 = scmp.lt.s32.totalorder %s24, 1
      %s367 = scalar_select %p366, %s24, 1
      %p368 = scmp.lt.s32.totalorder %s365, 3
      %s369 = scalar_select %p368, %s365, 3
      %s370 = smul.addr %s367, 4
      %s371 = sadd.s32 %s369, %s370
      %s372 = smul.addr %s371, 8
      %s373 = scalar_lea.vmem %s0, %s372
      %s374 = smul.u32 4, %s25
      %p375 = scmp.lt.s32.totalorder %s24, 1
      %s376 = scalar_select %p375, %s24, 1
      %s377 = smul.addr %s376, 4
      %s378 = scalar_lea.vmem %s1, %s377
      %s379 = smul.u32 4, %s25
      %p380 = scmp.lt.s32.totalorder %s24, 1
      %s381 = scalar_select %p380, %s24, 1
      %p382 = scmp.lt.s32.totalorder %s379, 3
      %s383 = scalar_select %p382, %s379, 3
      %s384 = smul.addr %s381, 4
      %s385 = sadd.s32 %s383, %s384
      %s386 = smul.addr %s385, 8
      %s387 = scalar_lea.vmem %s9, %s386
      %s388 = smul.u32 4, %s25
      %v389 = vld [vmem:[%s373] sm:$0xff]
      %v390 = vld [vmem:[%s373 + $0x8] sm:$0xff]
      %v391 = vld [vmem:[%s373 + $0x10] sm:$0xff]
      %v392 = vld [vmem:[%s373 + $0x18] sm:$0xff]
      %v393 = vld [vmem:[%s2] sm:$0xff]
      %v394 = vld [vmem:[%s2 + $0x8] sm:$0xff]
      %v395 = vld [vmem:[%s2 + $0x10] sm:$0xff]
      %v396 = vld [vmem:[%s2 + $0x18] sm:$0xff]
      %v397 = vld [vmem:[%s2 + $0x20] sm:$0xff]
      %v398 = vld [vmem:[%s2 + $0x28] sm:$0xff]
      %v399 = vld [vmem:[%s2 + $0x30] sm:$0xff]
      %v400 = vld [vmem:[%s2 + $0x38] sm:$0xff]
      %v401 = vld [vmem:[%s2 + $0x40] sm:$0xff]
      %v402 = vld [vmem:[%s2 + $0x48] sm:$0xff]
      %v403 = vld [vmem:[%s2 + $0x50] sm:$0xff]
      %v404 = vld [vmem:[%s2 + $0x58] sm:$0xff]
      %v405 = vld [vmem:[%s2 + $0x60] sm:$0xff]
      %v406 = vld [vmem:[%s2 + $0x68] sm:$0xff]
      %v407 = vld [vmem:[%s2 + $0x70] sm:$0xff]
      %v408 = vld [vmem:[%s2 + $0x78] sm:$0xff]
      %v409 = vld [vmem:[%s2 + $0x80] sm:$0xff]
      %v410 = vld [vmem:[%s2 + $0x88] sm:$0xff]
      %v411 = vld [vmem:[%s2 + $0x90] sm:$0xff]
      %v412 = vld [vmem:[%s2 + $0x98] sm:$0xff]
      %v413 = vld [vmem:[%s2 + $0xa0] sm:$0xff]
      %v414 = vld [vmem:[%s2 + $0xa8] sm:$0xff]
      %v415 = vld [vmem:[%s2 + $0xb0] sm:$0xff]
      %v416 = vld [vmem:[%s2 + $0xb8] sm:$0xff]
      %v417 = vld [vmem:[%s2 + $0xc0] sm:$0xff]
      %v418 = vld [vmem:[%s2 + $0xc8] sm:$0xff]
      %v419 = vld [vmem:[%s2 + $0xd0] sm:$0xff]
      %v420 = vld [vmem:[%s2 + $0xd8] sm:$0xff]
      %v421 = vld [vmem:[%s2 + $0xe0] sm:$0xff]
      %v422 = vld [vmem:[%s2 + $0xe8] sm:$0xff]
      %v423 = vld [vmem:[%s2 + $0xf0] sm:$0xff]
      %v424 = vld [vmem:[%s2 + $0xf8] sm:$0xff]
      %v425 = vld [vmem:[%s378] sm:$0xf]
      %v427 = vlaneseq
      %v428 = vshrl.u32 %v427, 7
      %v429 = vsub.s32 0, %v428
      %v430 = vrot.slane %v425, %v429
      %v431 = vlaneseq
      %v432 = vshrl.u32 %v431, 7
      %v433 = vsub.s32 1, %v432
      %v434 = vrot.slane %v425, %v433
      %v435 = vlaneseq
      %v436 = vshrl.u32 %v435, 7
      %v437 = vsub.s32 2, %v436
      %v438 = vrot.slane %v425, %v437
      %v439 = vlaneseq
      %v440 = vshrl.u32 %v439, 7
      %v441 = vsub.s32 3, %v440
      %v442 = vrot.slane %v425, %v441
      %vm447 = vcmask 523264
      %v449 = vsel %vm447, %v389, 0
      %v452 = vsel %vm447, %v390, 0
      %v455 = vsel %vm447, %v391, 0
      %v458 = vsel %vm447, %v392, 0
      %460 = vmatprep.subr.mxu0 0.0
      %461 = vmatpush1.msra.mxu0 0.0
      %462 = vmatprep.subr.mxu0 0.0
      %463 = vmatpush1.msra.mxu0 0.0
      %464 = vmatprep.subr.mxu0 0.0
      %465 = vmatpush1.msra.mxu0 0.0
      %466 = vmatprep.subr.mxu0 0.0
      %467 = vmatpush1.msra.mxu0 0.0
      %468 = vmatprep.subr.mxu0 0.0
      %469 = vmatpush1.msra.mxu0 0.0
      %470 = vmatprep.subr.mxu0 0.0
      %471 = vmatpush1.msra.mxu0 0.0
      %472 = vmatprep.subr.mxu0 0.0
      %473 = vmatpush1.msra.mxu0 0.0
      %474 = vmatprep.subr.mxu0 0.0
      %475 = vmatpush1.msra.mxu0 0.0
      %476 = vmatprep.subr.mxu0 %v422
      %477 = vmatpush1.msra.mxu0 %v421
      %478 = vmatprep.subr.mxu0 %v418
      %479 = vmatpush1.msra.mxu0 %v417
      %480 = vmatprep.subr.mxu0 %v414
      %481 = vmatpush1.msra.mxu0 %v413
      %482 = vmatprep.subr.mxu0 %v410
      %483 = vmatpush1.msra.mxu0 %v409
      %484 = vmatprep.subr.mxu0 %v406
      %485 = vmatpush1.msra.mxu0 %v405
      %486 = vmatprep.subr.mxu0 %v402
      %487 = vmatpush1.msra.mxu0 %v401
      %488 = vmatprep.subr.mxu0 %v398
      %489 = vmatpush1.msra.mxu0 %v397
      %490 = vmatprep.subr.mxu0 %v394
      %491 = vmatpush1.msra.mxu0 %v393
      %492 = vmatprep.subr.mxu0 0.0
      %493 = vmatpush2.msra.mxu0 0.0
      %494 = vmatprep.subr.mxu0 0.0
      %495 = vmatpush2.msra.mxu0 0.0
      %496 = vmatprep.subr.mxu0 0.0
      %497 = vmatpush2.msra.mxu0 0.0
      %498 = vmatprep.subr.mxu0 0.0
      %499 = vmatpush2.msra.mxu0 0.0
      %500 = vmatprep.subr.mxu0 0.0
      %501 = vmatpush2.msra.mxu0 0.0
      %502 = vmatprep.subr.mxu0 0.0
      %503 = vmatpush2.msra.mxu0 0.0
      %504 = vmatprep.subr.mxu0 0.0
      %505 = vmatpush2.msra.mxu0 0.0
      %506 = vmatprep.subr.mxu0 0.0
      %507 = vmatpush2.msra.mxu0 0.0
      %508 = vmatprep.subr.mxu0 0.0
      %509 = vmatpush2.msra.mxu0 0.0
      %510 = vmatprep.subr.mxu0 0.0
      %511 = vmatpush2.msra.mxu0 0.0
      %512 = vmatprep.subr.mxu0 0.0
      %513 = vmatpush2.msra.mxu0 0.0
      %514 = vmatprep.subr.mxu0 0.0
      %515 = vmatpush2.msra.mxu0 0.0
      %516 = vmatprep.subr.mxu0 0.0
      %517 = vmatpush2.msra.mxu0 0.0
      %518 = vmatprep.subr.mxu0 0.0
      %519 = vmatpush2.msra.mxu0 0.0
      %520 = vmatprep.subr.mxu0 0.0
      %521 = vmatpush2.msra.mxu0 0.0
      %522 = vmatprep.subr.mxu0 0.0
      %523 = vmatpush2.msra.mxu0 0.0
      %524 = vmatprep.mubr.f32.mxu0 0.0
      %525 = vmatmul.mubr.f32.gmra.mxu0 %v449
      %v526 = vpop.f32.mrf.mxu0
      %v527 = vadd.f32 %v430, %v526
      %v528 = vpop.f32.mrf.mxu0
      %v529 = vadd.f32 %v434, %v528
      %530 = vmatprep.mubr.f32.mxu0 0.0
      %531 = vmatmul.mubr.f32.gmra.mxu0 %v452
      %v532 = vpop.f32.mrf.mxu0
      %v533 = vadd.f32 %v430, %v532
      %v534 = vpop.f32.mrf.mxu0
      %v535 = vadd.f32 %v434, %v534
      %536 = vmatprep.mubr.f32.mxu0 0.0
      %537 = vmatmul.mubr.f32.gmra.mxu0 %v455
      %v538 = vpop.f32.mrf.mxu0
      %v539 = vadd.f32 %v430, %v538
      %v540 = vpop.f32.mrf.mxu0
      %v541 = vadd.f32 %v434, %v540
      %542 = vmatprep.mubr.f32.mxu0 0.0
      %543 = vmatmul.mubr.f32.gmra.mxu0 %v458
      %v544 = vpop.f32.mrf.mxu0
      %v545 = vadd.f32 %v430, %v544
      %v546 = vpop.f32.mrf.mxu0
      %v547 = vadd.f32 %v434, %v546
      %548 = vdwg.mxu0
      %549 = vmatprep.subr.mxu0 0.0
      %550 = vmatpush1.msra.mxu0 0.0
      %551 = vmatprep.subr.mxu0 0.0
      %552 = vmatpush1.msra.mxu0 0.0
      %553 = vmatprep.subr.mxu0 0.0
      %554 = vmatpush1.msra.mxu0 0.0
      %555 = vmatprep.subr.mxu0 0.0
      %556 = vmatpush1.msra.mxu0 0.0
      %557 = vmatprep.subr.mxu0 0.0
      %558 = vmatpush1.msra.mxu0 0.0
      %559 = vmatprep.subr.mxu0 0.0
      %560 = vmatpush1.msra.mxu0 0.0
      %561 = vmatprep.subr.mxu0 0.0
      %562 = vmatpush1.msra.mxu0 0.0
      %563 = vmatprep.subr.mxu0 0.0
      %564 = vmatpush1.msra.mxu0 0.0
      %565 = vmatprep.subr.mxu0 %v424
      %566 = vmatpush1.msra.mxu0 %v423
      %567 = vmatprep.subr.mxu0 %v420
      %568 = vmatpush1.msra.mxu0 %v419
      %569 = vmatprep.subr.mxu0 %v416
      %570 = vmatpush1.msra.mxu0 %v415
      %571 = vmatprep.subr.mxu0 %v412
      %572 = vmatpush1.msra.mxu0 %v411
      %573 = vmatprep.subr.mxu0 %v408
      %574 = vmatpush1.msra.mxu0 %v407
      %575 = vmatprep.subr.mxu0 %v404
      %576 = vmatpush1.msra.mxu0 %v403
      %577 = vmatprep.subr.mxu0 %v400
      %578 = vmatpush1.msra.mxu0 %v399
      %579 = vmatprep.subr.mxu0 %v396
      %580 = vmatpush1.msra.mxu0 %v395
      %581 = vmatprep.subr.mxu0 0.0
      %582 = vmatpush2.msra.mxu0 0.0
      %583 = vmatprep.subr.mxu0 0.0
      %584 = vmatpush2.msra.mxu0 0.0
      %585 = vmatprep.subr.mxu0 0.0
      %586 = vmatpush2.msra.mxu0 0.0
      %587 = vmatprep.subr.mxu0 0.0
      %588 = vmatpush2.msra.mxu0 0.0
      %589 = vmatprep.subr.mxu0 0.0
      %590 = vmatpush2.msra.mxu0 0.0
      %591 = vmatprep.subr.mxu0 0.0
      %592 = vmatpush2.msra.mxu0 0.0
      %593 = vmatprep.subr.mxu0 0.0
      %594 = vmatpush2.msra.mxu0 0.0
      %595 = vmatprep.subr.mxu0 0.0
      %596 = vmatpush2.msra.mxu0 0.0
      %597 = vmatprep.subr.mxu0 0.0
      %598 = vmatpush2.msra.mxu0 0.0
      %599 = vmatprep.subr.mxu0 0.0
      %600 = vmatpush2.msra.mxu0 0.0
      %601 = vmatprep.subr.mxu0 0.0
      %602 = vmatpush2.msra.mxu0 0.0
      %603 = vmatprep.subr.mxu0 0.0
      %604 = vmatpush2.msra.mxu0 0.0
      %605 = vmatprep.subr.mxu0 0.0
      %606 = vmatpush2.msra.mxu0 0.0
      %607 = vmatprep.subr.mxu0 0.0
      %608 = vmatpush2.msra.mxu0 0.0
      %609 = vmatprep.subr.mxu0 0.0
      %610 = vmatpush2.msra.mxu0 0.0
      %611 = vmatprep.subr.mxu0 0.0
      %612 = vmatpush2.msra.mxu0 0.0
      %613 = vmatprep.mubr.f32.mxu0 0.0
      %614 = vmatmul.mubr.f32.gmra.mxu0 %v449
      %v615 = vpop.f32.mrf.mxu0
      %v616 = vadd.f32 %v438, %v615
      %v617 = vpop.f32.mrf.mxu0
      %v618 = vadd.f32 %v442, %v617
      %619 = vmatprep.mubr.f32.mxu0 0.0
      %620 = vmatmul.mubr.f32.gmra.mxu0 %v452
      %v621 = vpop.f32.mrf.mxu0
      %v622 = vadd.f32 %v438, %v621
      %v623 = vpop.f32.mrf.mxu0
      %v624 = vadd.f32 %v442, %v623
      %625 = vmatprep.mubr.f32.mxu0 0.0
      %626 = vmatmul.mubr.f32.gmra.mxu0 %v455
      %v627 = vpop.f32.mrf.mxu0
      %v628 = vadd.f32 %v438, %v627
      %v629 = vpop.f32.mrf.mxu0
      %v630 = vadd.f32 %v442, %v629
      %631 = vmatprep.mubr.f32.mxu0 0.0
      %632 = vmatmul.mubr.f32.gmra.mxu0 %v458
      %v633 = vpop.f32.mrf.mxu0
      %v634 = vadd.f32 %v438, %v633
      %v635 = vpop.f32.mrf.mxu0
      %v636 = vadd.f32 %v442, %v635
      %637 = vdwg.mxu0
      %v638 = vmax.f32 %v527, 0.0
      %v639 = vmax.f32 %v529, 0.0
      %v640 = vmax.f32 %v616, 0.0
      %v641 = vmax.f32 %v618, 0.0
      %v642 = vmax.f32 %v533, 0.0
      %v643 = vmax.f32 %v535, 0.0
      %v644 = vmax.f32 %v622, 0.0
      %v645 = vmax.f32 %v624, 0.0
      %v646 = vmax.f32 %v539, 0.0
      %v647 = vmax.f32 %v541, 0.0
      %v648 = vmax.f32 %v628, 0.0
      %v649 = vmax.f32 %v630, 0.0
      %v650 = vmax.f32 %v545, 0.0
      %v651 = vmax.f32 %v547, 0.0
      %v652 = vmax.f32 %v634, 0.0
      %v653 = vmax.f32 %v636, 0.0
      %v654 = vld [vmem:[%s3] sm:$0xff]
      %v655 = vld [vmem:[%s3 + $0x8] sm:$0xff]
      %v656 = vld [vmem:[%s3 + $0x10] sm:$0xff]
      %v657 = vld [vmem:[%s3 + $0x18] sm:$0xff]
      %v658 = vld [vmem:[%s3 + $0x20] sm:$0xff]
      %v659 = vld [vmem:[%s3 + $0x28] sm:$0xff]
      %v660 = vld [vmem:[%s3 + $0x30] sm:$0xff]
      %v661 = vld [vmem:[%s3 + $0x38] sm:$0xff]
      %v662 = vld [vmem:[%s3 + $0x40] sm:$0xff]
      %v663 = vld [vmem:[%s3 + $0x48] sm:$0xff]
      %v664 = vld [vmem:[%s3 + $0x50] sm:$0xff]
      %v665 = vld [vmem:[%s3 + $0x58] sm:$0xff]
      %v666 = vld [vmem:[%s3 + $0x60] sm:$0xff]
      %v667 = vld [vmem:[%s3 + $0x68] sm:$0xff]
      %v668 = vld [vmem:[%s3 + $0x70] sm:$0xff]
      %v669 = vld [vmem:[%s3 + $0x78] sm:$0xff]
      %v670 = vld [vmem:[%s3 + $0x80] sm:$0xff]
      %v671 = vld [vmem:[%s3 + $0x88] sm:$0xff]
      %v672 = vld [vmem:[%s3 + $0x90] sm:$0xff]
      %v673 = vld [vmem:[%s3 + $0x98] sm:$0xff]
      %v674 = vld [vmem:[%s3 + $0xa0] sm:$0xff]
      %v675 = vld [vmem:[%s3 + $0xa8] sm:$0xff]
      %v676 = vld [vmem:[%s3 + $0xb0] sm:$0xff]
      %v677 = vld [vmem:[%s3 + $0xb8] sm:$0xff]
      %v678 = vld [vmem:[%s3 + $0xc0] sm:$0xff]
      %v679 = vld [vmem:[%s3 + $0xc8] sm:$0xff]
      %v680 = vld [vmem:[%s3 + $0xd0] sm:$0xff]
      %v681 = vld [vmem:[%s3 + $0xd8] sm:$0xff]
      %v682 = vld [vmem:[%s3 + $0xe0] sm:$0xff]
      %v683 = vld [vmem:[%s3 + $0xe8] sm:$0xff]
      %v684 = vld [vmem:[%s3 + $0xf0] sm:$0xff]
      %v685 = vld [vmem:[%s3 + $0xf8] sm:$0xff]
      %v686 = vld [vmem:[%s3 + $0x100] sm:$0xff]
      %v687 = vld [vmem:[%s3 + $0x108] sm:$0xff]
      %v688 = vld [vmem:[%s3 + $0x110] sm:$0xff]
      %v689 = vld [vmem:[%s3 + $0x118] sm:$0xff]
      %v690 = vld [vmem:[%s3 + $0x120] sm:$0xff]
      %v691 = vld [vmem:[%s3 + $0x128] sm:$0xff]
      %v692 = vld [vmem:[%s3 + $0x130] sm:$0xff]
      %v693 = vld [vmem:[%s3 + $0x138] sm:$0xff]
      %v694 = vld [vmem:[%s3 + $0x140] sm:$0xff]
      %v695 = vld [vmem:[%s3 + $0x148] sm:$0xff]
      %v696 = vld [vmem:[%s3 + $0x150] sm:$0xff]
      %v697 = vld [vmem:[%s3 + $0x158] sm:$0xff]
      %v698 = vld [vmem:[%s3 + $0x160] sm:$0xff]
      %v699 = vld [vmem:[%s3 + $0x168] sm:$0xff]
      %v700 = vld [vmem:[%s3 + $0x170] sm:$0xff]
      %v701 = vld [vmem:[%s3 + $0x178] sm:$0xff]
      %v702 = vld [vmem:[%s3 + $0x180] sm:$0xff]
      %v703 = vld [vmem:[%s3 + $0x188] sm:$0xff]
      %v704 = vld [vmem:[%s3 + $0x190] sm:$0xff]
      %v705 = vld [vmem:[%s3 + $0x198] sm:$0xff]
      %v706 = vld [vmem:[%s3 + $0x1a0] sm:$0xff]
      %v707 = vld [vmem:[%s3 + $0x1a8] sm:$0xff]
      %v708 = vld [vmem:[%s3 + $0x1b0] sm:$0xff]
      %v709 = vld [vmem:[%s3 + $0x1b8] sm:$0xff]
      %v710 = vld [vmem:[%s3 + $0x1c0] sm:$0xff]
      %v711 = vld [vmem:[%s3 + $0x1c8] sm:$0xff]
      %v712 = vld [vmem:[%s3 + $0x1d0] sm:$0xff]
      %v713 = vld [vmem:[%s3 + $0x1d8] sm:$0xff]
      %v714 = vld [vmem:[%s3 + $0x1e0] sm:$0xff]
      %v715 = vld [vmem:[%s3 + $0x1e8] sm:$0xff]
      %v716 = vld [vmem:[%s3 + $0x1f0] sm:$0xff]
      %v717 = vld [vmem:[%s3 + $0x1f8] sm:$0xff]
      %v718 = vld [vmem:[%s3 + $0x200] sm:$0xff]
      %v719 = vld [vmem:[%s3 + $0x208] sm:$0xff]
      %v720 = vld [vmem:[%s3 + $0x210] sm:$0xff]
      %v721 = vld [vmem:[%s3 + $0x218] sm:$0xff]
      %v722 = vld [vmem:[%s3 + $0x220] sm:$0xff]
      %v723 = vld [vmem:[%s3 + $0x228] sm:$0xff]
      %v724 = vld [vmem:[%s3 + $0x230] sm:$0xff]
      %v725 = vld [vmem:[%s3 + $0x238] sm:$0xff]
      %v726 = vld [vmem:[%s3 + $0x240] sm:$0xff]
      %v727 = vld [vmem:[%s3 + $0x248] sm:$0xff]
      %v728 = vld [vmem:[%s3 + $0x250] sm:$0xff]
      %v729 = vld [vmem:[%s3 + $0x258] sm:$0xff]
      %v730 = vld [vmem:[%s3 + $0x260] sm:$0xff]
      %v731 = vld [vmem:[%s3 + $0x268] sm:$0xff]
      %v732 = vld [vmem:[%s3 + $0x270] sm:$0xff]
      %v733 = vld [vmem:[%s3 + $0x278] sm:$0xff]
      %v734 = vld [vmem:[%s3 + $0x280] sm:$0xff]
      %v735 = vld [vmem:[%s3 + $0x288] sm:$0xff]
      %v736 = vld [vmem:[%s3 + $0x290] sm:$0xff]
      %v737 = vld [vmem:[%s3 + $0x298] sm:$0xff]
      %v738 = vld [vmem:[%s3 + $0x2a0] sm:$0xff]
      %v739 = vld [vmem:[%s3 + $0x2a8] sm:$0xff]
      %v740 = vld [vmem:[%s3 + $0x2b0] sm:$0xff]
      %v741 = vld [vmem:[%s3 + $0x2b8] sm:$0xff]
      %v742 = vld [vmem:[%s3 + $0x2c0] sm:$0xff]
      %v743 = vld [vmem:[%s3 + $0x2c8] sm:$0xff]
      %v744 = vld [vmem:[%s3 + $0x2d0] sm:$0xff]
      %v745 = vld [vmem:[%s3 + $0x2d8] sm:$0xff]
      %v746 = vld [vmem:[%s3 + $0x2e0] sm:$0xff]
      %v747 = vld [vmem:[%s3 + $0x2e8] sm:$0xff]
      %v748 = vld [vmem:[%s3 + $0x2f0] sm:$0xff]
      %v749 = vld [vmem:[%s3 + $0x2f8] sm:$0xff]
      %v750 = vld [vmem:[%s3 + $0x300] sm:$0xff]
      %v751 = vld [vmem:[%s3 + $0x308] sm:$0xff]
      %v752 = vld [vmem:[%s3 + $0x310] sm:$0xff]
      %v753 = vld [vmem:[%s3 + $0x318] sm:$0xff]
      %v754 = vld [vmem:[%s3 + $0x320] sm:$0xff]
      %v755 = vld [vmem:[%s3 + $0x328] sm:$0xff]
      %v756 = vld [vmem:[%s3 + $0x330] sm:$0xff]
      %v757 = vld [vmem:[%s3 + $0x338] sm:$0xff]
      %v758 = vld [vmem:[%s3 + $0x340] sm:$0xff]
      %v759 = vld [vmem:[%s3 + $0x348] sm:$0xff]
      %v760 = vld [vmem:[%s3 + $0x350] sm:$0xff]
      %v761 = vld [vmem:[%s3 + $0x358] sm:$0xff]
      %v762 = vld [vmem:[%s3 + $0x360] sm:$0xff]
      %v763 = vld [vmem:[%s3 + $0x368] sm:$0xff]
      %v764 = vld [vmem:[%s3 + $0x370] sm:$0xff]
      %v765 = vld [vmem:[%s3 + $0x378] sm:$0xff]
      %v766 = vld [vmem:[%s3 + $0x380] sm:$0xff]
      %v767 = vld [vmem:[%s3 + $0x388] sm:$0xff]
      %v768 = vld [vmem:[%s3 + $0x390] sm:$0xff]
      %v769 = vld [vmem:[%s3 + $0x398] sm:$0xff]
      %v770 = vld [vmem:[%s3 + $0x3a0] sm:$0xff]
      %v771 = vld [vmem:[%s3 + $0x3a8] sm:$0xff]
      %v772 = vld [vmem:[%s3 + $0x3b0] sm:$0xff]
      %v773 = vld [vmem:[%s3 + $0x3b8] sm:$0xff]
      %v774 = vld [vmem:[%s3 + $0x3c0] sm:$0xff]
      %v775 = vld [vmem:[%s3 + $0x3c8] sm:$0xff]
      %v776 = vld [vmem:[%s3 + $0x3d0] sm:$0xff]
      %v777 = vld [vmem:[%s3 + $0x3d8] sm:$0xff]
      %v778 = vld [vmem:[%s3 + $0x3e0] sm:$0xff]
      %v779 = vld [vmem:[%s3 + $0x3e8] sm:$0xff]
      %v780 = vld [vmem:[%s3 + $0x3f0] sm:$0xff]
      %v781 = vld [vmem:[%s3 + $0x3f8] sm:$0xff]
      %v782 = vld [vmem:[%s4] sm:$0x3]
      %v784 = vlaneseq
      %v785 = vshrl.u32 %v784, 7
      %v786 = vsub.s32 0, %v785
      %v787 = vrot.slane %v782, %v786
      %v788 = vlaneseq
      %v789 = vshrl.u32 %v788, 7
      %v790 = vsub.s32 1, %v789
      %v791 = vrot.slane %v782, %v790
      %794 = vmatprep.subr.mxu0 %v685
      %795 = vmatpush1.msra.mxu0 %v684
      %796 = vmatprep.subr.mxu0 %v683
      %797 = vmatpush1.msra.mxu0 %v682
      %798 = vmatprep.subr.mxu0 %v681
      %799 = vmatpush1.msra.mxu0 %v680
      %800 = vmatprep.subr.mxu0 %v679
      %801 = vmatpush1.msra.mxu0 %v678
      %802 = vmatprep.subr.mxu0 %v677
      %803 = vmatpush1.msra.mxu0 %v676
      %804 = vmatprep.subr.mxu0 %v675
      %805 = vmatpush1.msra.mxu0 %v674
      %806 = vmatprep.subr.mxu0 %v673
      %807 = vmatpush1.msra.mxu0 %v672
      %808 = vmatprep.subr.mxu0 %v671
      %809 = vmatpush1.msra.mxu0 %v670
      %810 = vmatprep.subr.mxu0 %v669
      %811 = vmatpush1.msra.mxu0 %v668
      %812 = vmatprep.subr.mxu0 %v667
      %813 = vmatpush1.msra.mxu0 %v666
      %814 = vmatprep.subr.mxu0 %v665
      %815 = vmatpush1.msra.mxu0 %v664
      %816 = vmatprep.subr.mxu0 %v663
      %817 = vmatpush1.msra.mxu0 %v662
      %818 = vmatprep.subr.mxu0 %v661
      %819 = vmatpush1.msra.mxu0 %v660
      %820 = vmatprep.subr.mxu0 %v659
      %821 = vmatpush1.msra.mxu0 %v658
      %822 = vmatprep.subr.mxu0 %v657
      %823 = vmatpush1.msra.mxu0 %v656
      %824 = vmatprep.subr.mxu0 %v655
      %825 = vmatpush1.msra.mxu0 %v654
      %826 = vmatprep.subr.mxu0 %v717
      %827 = vmatpush2.msra.mxu0 %v716
      %828 = vmatprep.subr.mxu0 %v715
      %829 = vmatpush2.msra.mxu0 %v714
      %830 = vmatprep.subr.mxu0 %v713
      %831 = vmatpush2.msra.mxu0 %v712
      %832 = vmatprep.subr.mxu0 %v711
      %833 = vmatpush2.msra.mxu0 %v710
      %834 = vmatprep.subr.mxu0 %v709
      %835 = vmatpush2.msra.mxu0 %v708
      %836 = vmatprep.subr.mxu0 %v707
      %837 = vmatpush2.msra.mxu0 %v706
      %838 = vmatprep.subr.mxu0 %v705
      %839 = vmatpush2.msra.mxu0 %v704
      %840 = vmatprep.subr.mxu0 %v703
      %841 = vmatpush2.msra.mxu0 %v702
      %842 = vmatprep.subr.mxu0 %v701
      %843 = vmatpush2.msra.mxu0 %v700
      %844 = vmatprep.subr.mxu0 %v699
      %845 = vmatpush2.msra.mxu0 %v698
      %846 = vmatprep.subr.mxu0 %v697
      %847 = vmatpush2.msra.mxu0 %v696
      %848 = vmatprep.subr.mxu0 %v695
      %849 = vmatpush2.msra.mxu0 %v694
      %850 = vmatprep.subr.mxu0 %v693
      %851 = vmatpush2.msra.mxu0 %v692
      %852 = vmatprep.subr.mxu0 %v691
      %853 = vmatpush2.msra.mxu0 %v690
      %854 = vmatprep.subr.mxu0 %v689
      %855 = vmatpush2.msra.mxu0 %v688
      %856 = vmatprep.subr.mxu0 %v687
      %857 = vmatpush2.msra.mxu0 %v686
      %858 = vmatprep.mubr.f32.mxu0 %v639
      %859 = vmatmul.mubr.f32.gmra.mxu0 %v638
      %v860 = vpop.f32.mrf.mxu0
      %v861 = vadd.f32 %v787, %v860
      %v862 = vpop.f32.mrf.mxu0
      %v863 = vadd.f32 %v791, %v862
      %864 = vmatprep.mubr.f32.mxu0 %v643
      %865 = vmatmul.mubr.f32.gmra.mxu0 %v642
      %v866 = vpop.f32.mrf.mxu0
      %v867 = vadd.f32 %v787, %v866
      %v868 = vpop.f32.mrf.mxu0
      %v869 = vadd.f32 %v791, %v868
      %870 = vmatprep.mubr.f32.mxu0 %v647
      %871 = vmatmul.mubr.f32.gmra.mxu0 %v646
      %v872 = vpop.f32.mrf.mxu0
      %v873 = vadd.f32 %v787, %v872
      %v874 = vpop.f32.mrf.mxu0
      %v875 = vadd.f32 %v791, %v874
      %876 = vmatprep.mubr.f32.mxu0 %v651
      %877 = vmatmul.mubr.f32.gmra.mxu0 %v650
      %v878 = vpop.f32.mrf.mxu0
      %v879 = vadd.f32 %v787, %v878
      %v880 = vpop.f32.mrf.mxu0
      %v881 = vadd.f32 %v791, %v880
      %882 = vdwg.mxu0
      %883 = vmatprep.subr.mxu0 %v749
      %884 = vmatpush1.msra.mxu0 %v748
      %885 = vmatprep.subr.mxu0 %v747
      %886 = vmatpush1.msra.mxu0 %v746
      %887 = vmatprep.subr.mxu0 %v745
      %888 = vmatpush1.msra.mxu0 %v744
      %889 = vmatprep.subr.mxu0 %v743
      %890 = vmatpush1.msra.mxu0 %v742
      %891 = vmatprep.subr.mxu0 %v741
      %892 = vmatpush1.msra.mxu0 %v740
      %893 = vmatprep.subr.mxu0 %v739
      %894 = vmatpush1.msra.mxu0 %v738
      %895 = vmatprep.subr.mxu0 %v737
      %896 = vmatpush1.msra.mxu0 %v736
      %897 = vmatprep.subr.mxu0 %v735
      %898 = vmatpush1.msra.mxu0 %v734
      %899 = vmatprep.subr.mxu0 %v733
      %900 = vmatpush1.msra.mxu0 %v732
      %901 = vmatprep.subr.mxu0 %v731
      %902 = vmatpush1.msra.mxu0 %v730
      %903 = vmatprep.subr.mxu0 %v729
      %904 = vmatpush1.msra.mxu0 %v728
      %905 = vmatprep.subr.mxu0 %v727
      %906 = vmatpush1.msra.mxu0 %v726
      %907 = vmatprep.subr.mxu0 %v725
      %908 = vmatpush1.msra.mxu0 %v724
      %909 = vmatprep.subr.mxu0 %v723
      %910 = vmatpush1.msra.mxu0 %v722
      %911 = vmatprep.subr.mxu0 %v721
      %912 = vmatpush1.msra.mxu0 %v720
      %913 = vmatprep.subr.mxu0 %v719
      %914 = vmatpush1.msra.mxu0 %v718
      %915 = vmatprep.subr.mxu0 %v781
      %916 = vmatpush2.msra.mxu0 %v780
      %917 = vmatprep.subr.mxu0 %v779
      %918 = vmatpush2.msra.mxu0 %v778
      %919 = vmatprep.subr.mxu0 %v777
      %920 = vmatpush2.msra.mxu0 %v776
      %921 = vmatprep.subr.mxu0 %v775
      %922 = vmatpush2.msra.mxu0 %v774
      %923 = vmatprep.subr.mxu0 %v773
      %924 = vmatpush2.msra.mxu0 %v772
      %925 = vmatprep.subr.mxu0 %v771
      %926 = vmatpush2.msra.mxu0 %v770
      %927 = vmatprep.subr.mxu0 %v769
      %928 = vmatpush2.msra.mxu0 %v768
      %929 = vmatprep.subr.mxu0 %v767
      %930 = vmatpush2.msra.mxu0 %v766
      %931 = vmatprep.subr.mxu0 %v765
      %932 = vmatpush2.msra.mxu0 %v764
      %933 = vmatprep.subr.mxu0 %v763
      %934 = vmatpush2.msra.mxu0 %v762
      %935 = vmatprep.subr.mxu0 %v761
      %936 = vmatpush2.msra.mxu0 %v760
      %937 = vmatprep.subr.mxu0 %v759
      %938 = vmatpush2.msra.mxu0 %v758
      %939 = vmatprep.subr.mxu0 %v757
      %940 = vmatpush2.msra.mxu0 %v756
      %941 = vmatprep.subr.mxu0 %v755
      %942 = vmatpush2.msra.mxu0 %v754
      %943 = vmatprep.subr.mxu0 %v753
      %944 = vmatpush2.msra.mxu0 %v752
      %945 = vmatprep.subr.mxu0 %v751
      %946 = vmatpush2.msra.mxu0 %v750
      %947 = vmatprep.mubr.f32.mxu0 %v641
      %948 = vmatmul.mubr.f32.gmra.mxu0 %v640
      %v949 = vpop.f32.mrf.mxu0
      %v950 = vadd.f32 %v861, %v949
      %v951 = vpop.f32.mrf.mxu0
      %v952 = vadd.f32 %v863, %v951
      %953 = vmatprep.mubr.f32.mxu0 %v645
      %954 = vmatmul.mubr.f32.gmra.mxu0 %v644
      %v955 = vpop.f32.mrf.mxu0
      %v956 = vadd.f32 %v867, %v955
      %v957 = vpop.f32.mrf.mxu0
      %v958 = vadd.f32 %v869, %v957
      %959 = vmatprep.mubr.f32.mxu0 %v649
      %960 = vmatmul.mubr.f32.gmra.mxu0 %v648
      %v961 = vpop.f32.mrf.mxu0
      %v962 = vadd.f32 %v873, %v961
      %v963 = vpop.f32.mrf.mxu0
      %v964 = vadd.f32 %v875, %v963
      %965 = vmatprep.mubr.f32.mxu0 %v653
      %966 = vmatmul.mubr.f32.gmra.mxu0 %v652
      %v967 = vpop.f32.mrf.mxu0
      %v968 = vadd.f32 %v879, %v967
      %v969 = vpop.f32.mrf.mxu0
      %v970 = vadd.f32 %v881, %v969
      %971 = vdwg.mxu0
      %v972 = vmax.f32 %v950, 0.0
      %v973 = vmax.f32 %v952, 0.0
      %v974 = vmax.f32 %v956, 0.0
      %v975 = vmax.f32 %v958, 0.0
      %v976 = vmax.f32 %v962, 0.0
      %v977 = vmax.f32 %v964, 0.0
      %v978 = vmax.f32 %v968, 0.0
      %v979 = vmax.f32 %v970, 0.0
      %v980 = vld [vmem:[%s5] sm:$0xff]
      %v981 = vld [vmem:[%s5 + $0x8] sm:$0xff]
      %v982 = vld [vmem:[%s5 + $0x10] sm:$0xff]
      %v983 = vld [vmem:[%s5 + $0x18] sm:$0xff]
      %v984 = vld [vmem:[%s5 + $0x20] sm:$0xff]
      %v985 = vld [vmem:[%s5 + $0x28] sm:$0xff]
      %v986 = vld [vmem:[%s5 + $0x30] sm:$0xff]
      %v987 = vld [vmem:[%s5 + $0x38] sm:$0xff]
      %v988 = vld [vmem:[%s5 + $0x40] sm:$0xff]
      %v989 = vld [vmem:[%s5 + $0x48] sm:$0xff]
      %v990 = vld [vmem:[%s5 + $0x50] sm:$0xff]
      %v991 = vld [vmem:[%s5 + $0x58] sm:$0xff]
      %v992 = vld [vmem:[%s5 + $0x60] sm:$0xff]
      %v993 = vld [vmem:[%s5 + $0x68] sm:$0xff]
      %v994 = vld [vmem:[%s5 + $0x70] sm:$0xff]
      %v995 = vld [vmem:[%s5 + $0x78] sm:$0xff]
      %v996 = vld [vmem:[%s5 + $0x80] sm:$0xff]
      %v997 = vld [vmem:[%s5 + $0x88] sm:$0xff]
      %v998 = vld [vmem:[%s5 + $0x90] sm:$0xff]
      %v999 = vld [vmem:[%s5 + $0x98] sm:$0xff]
      %v1000 = vld [vmem:[%s5 + $0xa0] sm:$0xff]
      %v1001 = vld [vmem:[%s5 + $0xa8] sm:$0xff]
      %v1002 = vld [vmem:[%s5 + $0xb0] sm:$0xff]
      %v1003 = vld [vmem:[%s5 + $0xb8] sm:$0xff]
      %v1004 = vld [vmem:[%s5 + $0xc0] sm:$0xff]
      %v1005 = vld [vmem:[%s5 + $0xc8] sm:$0xff]
      %v1006 = vld [vmem:[%s5 + $0xd0] sm:$0xff]
      %v1007 = vld [vmem:[%s5 + $0xd8] sm:$0xff]
      %v1008 = vld [vmem:[%s5 + $0xe0] sm:$0xff]
      %v1009 = vld [vmem:[%s5 + $0xe8] sm:$0xff]
      %v1010 = vld [vmem:[%s5 + $0xf0] sm:$0xff]
      %v1011 = vld [vmem:[%s5 + $0xf8] sm:$0xff]
      %v1012 = vld [vmem:[%s6] sm:$0x1]
      %v1014 = vlaneseq
      %v1015 = vshrl.u32 %v1014, 7
      %v1016 = vsub.s32 0, %v1015
      %v1017 = vrot.slane %v1012, %v1016
      %1019 = vmatprep.subr.mxu0 0.0
      %1020 = vmatpush1.msra.mxu0 %v995
      %1021 = vmatprep.subr.mxu0 0.0
      %1022 = vmatpush1.msra.mxu0 %v994
      %1023 = vmatprep.subr.mxu0 0.0
      %1024 = vmatpush1.msra.mxu0 %v993
      %1025 = vmatprep.subr.mxu0 0.0
      %1026 = vmatpush1.msra.mxu0 %v992
      %1027 = vmatprep.subr.mxu0 0.0
      %1028 = vmatpush1.msra.mxu0 %v991
      %1029 = vmatprep.subr.mxu0 0.0
      %1030 = vmatpush1.msra.mxu0 %v990
      %1031 = vmatprep.subr.mxu0 0.0
      %1032 = vmatpush1.msra.mxu0 %v989
      %1033 = vmatprep.subr.mxu0 0.0
      %1034 = vmatpush1.msra.mxu0 %v988
      %1035 = vmatprep.subr.mxu0 0.0
      %1036 = vmatpush1.msra.mxu0 %v987
      %1037 = vmatprep.subr.mxu0 0.0
      %1038 = vmatpush1.msra.mxu0 %v986
      %1039 = vmatprep.subr.mxu0 0.0
      %1040 = vmatpush1.msra.mxu0 %v985
      %1041 = vmatprep.subr.mxu0 0.0
      %1042 = vmatpush1.msra.mxu0 %v984
      %1043 = vmatprep.subr.mxu0 0.0
      %1044 = vmatpush1.msra.mxu0 %v983
      %1045 = vmatprep.subr.mxu0 0.0
      %1046 = vmatpush1.msra.mxu0 %v982
      %1047 = vmatprep.subr.mxu0 0.0
      %1048 = vmatpush1.msra.mxu0 %v981
      %1049 = vmatprep.subr.mxu0 0.0
      %1050 = vmatpush1.msra.mxu0 %v980
      %1051 = vmatprep.subr.mxu0 0.0
      %1052 = vmatpush2.msra.mxu0 %v1011
      %1053 = vmatprep.subr.mxu0 0.0
      %1054 = vmatpush2.msra.mxu0 %v1010
      %1055 = vmatprep.subr.mxu0 0.0
      %1056 = vmatpush2.msra.mxu0 %v1009
      %1057 = vmatprep.subr.mxu0 0.0
      %1058 = vmatpush2.msra.mxu0 %v1008
      %1059 = vmatprep.subr.mxu0 0.0
      %1060 = vmatpush2.msra.mxu0 %v1007
      %1061 = vmatprep.subr.mxu0 0.0
      %1062 = vmatpush2.msra.mxu0 %v1006
      %1063 = vmatprep.subr.mxu0 0.0
      %1064 = vmatpush2.msra.mxu0 %v1005
      %1065 = vmatprep.subr.mxu0 0.0
      %1066 = vmatpush2.msra.mxu0 %v1004
      %1067 = vmatprep.subr.mxu0 0.0
      %1068 = vmatpush2.msra.mxu0 %v1003
      %1069 = vmatprep.subr.mxu0 0.0
      %1070 = vmatpush2.msra.mxu0 %v1002
      %1071 = vmatprep.subr.mxu0 0.0
      %1072 = vmatpush2.msra.mxu0 %v1001
      %1073 = vmatprep.subr.mxu0 0.0
      %1074 = vmatpush2.msra.mxu0 %v1000
      %1075 = vmatprep.subr.mxu0 0.0
      %1076 = vmatpush2.msra.mxu0 %v999
      %1077 = vmatprep.subr.mxu0 0.0
      %1078 = vmatpush2.msra.mxu0 %v998
      %1079 = vmatprep.subr.mxu0 0.0
      %1080 = vmatpush2.msra.mxu0 %v997
      %1081 = vmatprep.subr.mxu0 0.0
      %1082 = vmatpush2.msra.mxu0 %v996
      %1083 = vmatprep.mubr.f32.mxu0 %v973
      %1084 = vmatmul.mubr.f32.gmra.mxu0 %v972
      %v1085 = vpop.f32.mrf.mxu0
      %v1086 = vadd.f32 %v1017, %v1085
      %v1087 = vpop.f32.mrf.mxu0
      %1088 = vmatprep.mubr.f32.mxu0 %v975
      %1089 = vmatmul.mubr.f32.gmra.mxu0 %v974
      %v1090 = vpop.f32.mrf.mxu0
      %v1091 = vadd.f32 %v1017, %v1090
      %v1092 = vpop.f32.mrf.mxu0
      %1093 = vmatprep.mubr.f32.mxu0 %v977
      %1094 = vmatmul.mubr.f32.gmra.mxu0 %v976
      %v1095 = vpop.f32.mrf.mxu0
      %v1096 = vadd.f32 %v1017, %v1095
      %v1097 = vpop.f32.mrf.mxu0
      %1098 = vmatprep.mubr.f32.mxu0 %v979
      %1099 = vmatmul.mubr.f32.gmra.mxu0 %v978
      %v1100 = vpop.f32.mrf.mxu0
      %v1101 = vadd.f32 %v1017, %v1100
      %v1102 = vpop.f32.mrf.mxu0
      %1103 = vdwg.mxu0
      %v1104 = vmax.f32 %v1086, 0.0
      %v1105 = vmax.f32 %v1091, 0.0
      %v1106 = vmax.f32 %v1096, 0.0
      %v1107 = vmax.f32 %v1101, 0.0
      %v1108 = vld [vmem:[%s7] sm:$0xff]
      %v1109 = vld [vmem:[%s7 + $0x8] sm:$0xff]
      %v1110 = vld [vmem:[%s7 + $0x10] sm:$0xff]
      %v1111 = vld [vmem:[%s7 + $0x18] sm:$0xff]
      %v1112 = vld [vmem:[%s7 + $0x20] sm:$0xff]
      %v1113 = vld [vmem:[%s7 + $0x28] sm:$0xff]
      %v1114 = vld [vmem:[%s7 + $0x30] sm:$0xff]
      %v1115 = vld [vmem:[%s7 + $0x38] sm:$0xff]
      %v1116 = vld [vmem:[%s7 + $0x40] sm:$0xff]
      %v1117 = vld [vmem:[%s7 + $0x48] sm:$0xff]
      %v1118 = vld [vmem:[%s7 + $0x50] sm:$0xff]
      %v1119 = vld [vmem:[%s7 + $0x58] sm:$0xff]
      %v1120 = vld [vmem:[%s7 + $0x60] sm:$0xff]
      %v1121 = vld [vmem:[%s7 + $0x68] sm:$0xff]
      %v1122 = vld [vmem:[%s7 + $0x70] sm:$0xff]
      %v1123 = vld [vmem:[%s7 + $0x78] sm:$0xff]
      %v1124 = vld [vmem:[%s8] sm:$0x1]
      %v1126 = vlaneseq
      %v1127 = vshrl.u32 %v1126, 7
      %v1128 = vsub.s32 0, %v1127
      %v1129 = vrot.slane %v1124, %v1128
      %1131 = vmatprep.subr.mxu0 0.0
      %1132 = vmatpush1.msra.mxu0 %v1123
      %1133 = vmatprep.subr.mxu0 0.0
      %1134 = vmatpush1.msra.mxu0 %v1122
      %1135 = vmatprep.subr.mxu0 0.0
      %1136 = vmatpush1.msra.mxu0 %v1121
      %1137 = vmatprep.subr.mxu0 0.0
      %1138 = vmatpush1.msra.mxu0 %v1120
      %1139 = vmatprep.subr.mxu0 0.0
      %1140 = vmatpush1.msra.mxu0 %v1119
      %1141 = vmatprep.subr.mxu0 0.0
      %1142 = vmatpush1.msra.mxu0 %v1118
      %1143 = vmatprep.subr.mxu0 0.0
      %1144 = vmatpush1.msra.mxu0 %v1117
      %1145 = vmatprep.subr.mxu0 0.0
      %1146 = vmatpush1.msra.mxu0 %v1116
      %1147 = vmatprep.subr.mxu0 0.0
      %1148 = vmatpush1.msra.mxu0 %v1115
      %1149 = vmatprep.subr.mxu0 0.0
      %1150 = vmatpush1.msra.mxu0 %v1114
      %1151 = vmatprep.subr.mxu0 0.0
      %1152 = vmatpush1.msra.mxu0 %v1113
      %1153 = vmatprep.subr.mxu0 0.0
      %1154 = vmatpush1.msra.mxu0 %v1112
      %1155 = vmatprep.subr.mxu0 0.0
      %1156 = vmatpush1.msra.mxu0 %v1111
      %1157 = vmatprep.subr.mxu0 0.0
      %1158 = vmatpush1.msra.mxu0 %v1110
      %1159 = vmatprep.subr.mxu0 0.0
      %1160 = vmatpush1.msra.mxu0 %v1109
      %1161 = vmatprep.subr.mxu0 0.0
      %1162 = vmatpush1.msra.mxu0 %v1108
      %1163 = vmatprep.subr.mxu0 0.0
      %1164 = vmatpush2.msra.mxu0 0.0
      %1165 = vmatprep.subr.mxu0 0.0
      %1166 = vmatpush2.msra.mxu0 0.0
      %1167 = vmatprep.subr.mxu0 0.0
      %1168 = vmatpush2.msra.mxu0 0.0
      %1169 = vmatprep.subr.mxu0 0.0
      %1170 = vmatpush2.msra.mxu0 0.0
      %1171 = vmatprep.subr.mxu0 0.0
      %1172 = vmatpush2.msra.mxu0 0.0
      %1173 = vmatprep.subr.mxu0 0.0
      %1174 = vmatpush2.msra.mxu0 0.0
      %1175 = vmatprep.subr.mxu0 0.0
      %1176 = vmatpush2.msra.mxu0 0.0
      %1177 = vmatprep.subr.mxu0 0.0
      %1178 = vmatpush2.msra.mxu0 0.0
      %1179 = vmatprep.subr.mxu0 0.0
      %1180 = vmatpush2.msra.mxu0 0.0
      %1181 = vmatprep.subr.mxu0 0.0
      %1182 = vmatpush2.msra.mxu0 0.0
      %1183 = vmatprep.subr.mxu0 0.0
      %1184 = vmatpush2.msra.mxu0 0.0
      %1185 = vmatprep.subr.mxu0 0.0
      %1186 = vmatpush2.msra.mxu0 0.0
      %1187 = vmatprep.subr.mxu0 0.0
      %1188 = vmatpush2.msra.mxu0 0.0
      %1189 = vmatprep.subr.mxu0 0.0
      %1190 = vmatpush2.msra.mxu0 0.0
      %1191 = vmatprep.subr.mxu0 0.0
      %1192 = vmatpush2.msra.mxu0 0.0
      %1193 = vmatprep.subr.mxu0 0.0
      %1194 = vmatpush2.msra.mxu0 0.0
      %1195 = vmatprep.mubr.f32.mxu0 0.0
      %1196 = vmatmul.mubr.f32.gmra.mxu0 %v1104
      %v1197 = vpop.f32.mrf.mxu0
      %v1198 = vadd.f32 %v1129, %v1197
      %v1199 = vpop.f32.mrf.mxu0
      %1200 = vmatprep.mubr.f32.mxu0 0.0
      %1201 = vmatmul.mubr.f32.gmra.mxu0 %v1105
      %v1202 = vpop.f32.mrf.mxu0
      %v1203 = vadd.f32 %v1129, %v1202
      %v1204 = vpop.f32.mrf.mxu0
      %1205 = vmatprep.mubr.f32.mxu0 0.0
      %1206 = vmatmul.mubr.f32.gmra.mxu0 %v1106
      %v1207 = vpop.f32.mrf.mxu0
      %v1208 = vadd.f32 %v1129, %v1207
      %v1209 = vpop.f32.mrf.mxu0
      %1210 = vmatprep.mubr.f32.mxu0 0.0
      %1211 = vmatmul.mubr.f32.gmra.mxu0 %v1107
      %v1212 = vpop.f32.mrf.mxu0
      %v1213 = vadd.f32 %v1129, %v1212
      %v1214 = vpop.f32.mrf.mxu0
      %1215 = vdwg.mxu0
      %v1216 = vtanh.pop %v1198
      %v1217 = vtanh.pop %v1203
      %v1218 = vtanh.pop %v1208
      %v1219 = vtanh.pop %v1213
      %vm1220 = vcmask 23552
      %1221 = vst.msk [vmem:[%s387] sm:$0xff] %vm1220, %v1216
      %1222 = vst.msk [vmem:[%s387 + $0x8] sm:$0xff] %vm1220, %v1217
      %1223 = vst.msk [vmem:[%s387 + $0x10] sm:$0xff] %vm1220, %v1218
      %1224 = vst.msk [vmem:[%s387 + $0x18] sm:$0xff] %vm1220, %v1219
      %s1225 = smul.u32 4, %s25
      %p1226 = scmp.lt.s32.totalorder %s24, 1
      %s1227 = scalar_select %p1226, %s24, 1
      %p1228 = scmp.lt.s32.totalorder %s1225, 3
      %s1229 = scalar_select %p1228, %s1225, 3
      %s1230 = smul.addr %s1227, 4
      %s1231 = sadd.s32 %s1229, %s1230
      %s1232 = smul.addr %s1231, 8
      %s1233 = scalar_lea.vmem %s9, %s1232
      // Predicated region
      $region57: #{msn_forward.7} parent=55 // pred_check
        %p1234 = pneg %p253
      $region58: #{msn_forward.7} parent=55 // pred_check_branch
        %1236 = sbr.rel (%p1234) target = $region60
      $region59: #{msn_forward.7} parent=55 // pred_region
        %s1237 = smul.u32 4, %s25
      $region60: #{msn_forward.7} parent=55 // pred_fallthru
        _
    $region56: #{msn_forward.7} parent=5 // pred_fallthru
      _
    %p1238 = scmp.le.s32.totalorder 2, %s15
    // Predicated region
    $region61: #{msn_forward.7} parent=5 // pred_check
      %p1239 = pneg %p1238
    $region62: #{msn_forward.7} parent=5 // pred_check_branch
      %1241 = sbr.rel (%p1239) target = $region64
    $region63: #{msn_forward.7} parent=5 // pred_region
      %s1242 = ssub.s32 %s15, 2
      // Predicated region
      $region65: #{msn_forward.7} parent=63 // pred_check
        %p1243 = pneg %p259
      $region66: #{msn_forward.7} parent=63 // pred_check_branch
        %1245 = sbr.rel (%p1243) target = $region68
      $region67: #{msn_forward.7} parent=63 // pred_region
        %s1246 = smul.u32 4, %s27
        %p1247 = scmp.lt.s32.totalorder %s26, 1
        %s1248 = scalar_select %p1247, %s26, 1
        %p1249 = scmp.lt.s32.totalorder %s1246, 3
        %s1250 = scalar_select %p1249, %s1246, 3
        %s1251 = smul.addr %s1248, 4
        %s1252 = sadd.s32 %s1250, %s1251
        %s1253 = smul.addr %s1252, 8
        %s1254 = scalar_lea.vmem %s9, %s1253
      $region68: #{msn_forward.7} parent=63 // pred_fallthru
        _
    $region64: #{msn_forward.7} parent=5 // pred_fallthru
      _
  $region6: #{msn_forward.7} parent=0 // loop_footer
    %s19 = sadd.s32 1, %s15
  $region7: #{msn_forward.7} parent=0 // loop_footer_branch
    %14 = sbr.rel target = $region3
  $region8: #{msn_forward.7} parent=0 // loop_exit
    _

</llo_original>
